<compile_context>
chip_gen: v7x
topology: tpu7x:2x2x1
jax: 0.10.0
libtpu: 0.0.40
codegen_flags: <defaults>
</compile_context>

<pallas_src>
import functools
import math

import jax
import jax.numpy as jnp
from jax.experimental import pallas as pl
from jax.experimental.pallas import tpu as pltpu


def user_encoder_kernel(x_ref, mask_ref, g_ref,
                        wq_ref, bq_ref, wk_ref, bk_ref, wv_ref, bv_ref,
                        wo_ref, bo_ref, wlin_ref, blin_ref, qvec_ref,
                        out_ref):
    # x_ref: (T, E) flattened tokens, T = L*N, token t = l*N + n
    # mask_ref: (T, T) additive bias, 0 where same n else -1e30 (block-diagonal attention)
    # g_ref:   (L, T) 0/1 group matrix, 1 where t // N == l (additive-attention pooling)
    # wq/wk/wv: (H, E, D)  bq/bk/bv: (H, 1, D)  wo: (H, D, E)  bo: (1, E)
    # wlin: (E, Q)  blin: (1, Q)  qvec: (1, Q)  out_ref: (L, E)
    x = x_ref[...].astype(jnp.float32)                       # (T, E)
    mask = mask_ref[...]                                     # (T, T)
    num_heads = wq_ref.shape[0]
    t, e = x.shape

    # ---- multi-head self-attention over the L axis, batched over N via the mask --------
    y = jnp.zeros((t, e), jnp.float32)
    for h in range(num_heads):                               # static unroll, leading-axis weight index
        q = jnp.dot(x, wq_ref[h], preferred_element_type=jnp.float32) + bq_ref[h]   # scale pre-folded
        k = jnp.dot(x, wk_ref[h], preferred_element_type=jnp.float32) + bk_ref[h]
        v = jnp.dot(x, wv_ref[h], preferred_element_type=jnp.float32) + bv_ref[h]

        s = jnp.einsum('td,sd->ts', q, k, preferred_element_type=jnp.float32) + mask  # (T, T)
        s = s - jnp.max(s, axis=-1, keepdims=True)
        p = jnp.exp(s)
        p = p * pl.reciprocal(jnp.sum(p, axis=-1, keepdims=True), approx=True)

        o = jnp.dot(p, v, preferred_element_type=jnp.float32)                          # (T, D)
        y = y + jnp.dot(o, wo_ref[h], preferred_element_type=jnp.float32)              # accumulate out-proj
    y = y + bo_ref[...]                                                                 # (T, E)

    # ---- AdditiveAttention: softmax over the N axis of each l, pooled over N -----------
    a = jnp.tanh(jnp.dot(y, wlin_ref[...], preferred_element_type=jnp.float32) + blin_ref[...])  # (T, Q)
    s_row = jnp.einsum('oq,tq->ot', qvec_ref[...], a, preferred_element_type=jnp.float32)        # (1, T)
    s_row = s_row - jnp.max(s_row, axis=-1, keepdims=True)   # global-max shift (softmax-invariant per group)
    e_row = jnp.exp(s_row)                                   # (1, T)
    gw = g_ref[...] * e_row                                  # (L, T) group-masked softmax numerators
    num = jnp.dot(gw, y, preferred_element_type=jnp.float32)                 # (L, E)
    den = jnp.sum(gw, axis=-1, keepdims=True)                                # (L, 1)
    out_ref[...] = (num * pl.reciprocal(den, approx=True)).astype(out_ref.dtype)


def init_torch_params(key, embed_dim, num_heads, query_dim):
    """Deterministic synthetic parameters in the original PyTorch shapes."""
    assert embed_dim % num_heads == 0
    ks = jax.random.split(key, 7)

    def u(k, shape, scale=0.1):
        return jax.random.uniform(k, shape, jnp.float32, -scale, scale)

    return dict(
        w_in=u(ks[0], (3 * embed_dim, embed_dim)),   # in_proj_weight (3E, E)
        b_in=u(ks[1], (3 * embed_dim,)),             # in_proj_bias   (3E,)
        w_out=u(ks[2], (embed_dim, embed_dim)),      # out_proj.weight (E, E)
        b_out=u(ks[3], (embed_dim,)),                # out_proj.bias   (E,)
        w_lin=u(ks[4], (query_dim, embed_dim)),      # additive linear.weight (Q, E)
        b_lin=u(ks[5], (query_dim,)),                # additive linear.bias   (Q,)
        q_vec=u(ks[6], (query_dim,)),                # additive query         (Q,)
    )


def pack_params(raw, num_heads):
    """PyTorch-shaped params -> per-head, pre-transposed, scale-folded kernel params."""
    E = raw['w_out'].shape[0]
    H = num_heads
    D = E // H
    scale = 1.0 / math.sqrt(D)
    w_in, b_in = raw['w_in'], raw['b_in']

    def heads_in(w, b, s):
        # w (E_out, E_in) -> (E_in, E_out) -> (E_in, H, D) -> (H, E_in, D); b (E_out,) -> (H, 1, D)
        wt = (w.T * s).reshape(E, H, D).transpose(1, 0, 2)
        bh = (b * s).reshape(H, 1, D)
        return wt, bh

    wq, bq = heads_in(w_in[:E], b_in[:E], scale)           # 1/sqrt(D) folded into q
    wk, bk = heads_in(w_in[E:2 * E], b_in[E:2 * E], 1.0)
    wv, bv = heads_in(w_in[2 * E:], b_in[2 * E:], 1.0)
    return dict(
        wq=wq, bq=bq, wk=wk, bk=bk, wv=wv, bv=bv,
        wo=raw['w_out'].T.reshape(H, D, E),                # per-head (D, E) out-proj blocks
        bo=raw['b_out'].reshape(1, E),
        wlin=raw['w_lin'].T,                               # (E, Q)
        blin=raw['b_lin'].reshape(1, -1),
        qvec=raw['q_vec'].reshape(1, -1),
    )


@functools.partial(jax.jit, static_argnames=("num_heads",))
def user_encoder(hist_news_vector, params, *, num_heads):
    """hist_news_vector: (L, N, E), exactly as given to the PyTorch module."""
    L, N, E = hist_news_vector.shape
    T = L * N
    D = E // num_heads
    Q = params['wlin'].shape[1]

    # Free, layout-preserving flatten (bitcast) instead of an HBM->HBM transpose.
    x_flat = hist_news_vector.reshape(T, E)

    # Block-diagonal attention mask (same n) and additive-attention group matrix (same l).
    # Constant-folded under jit.
    tok = jnp.arange(T, dtype=jnp.int32)
    mask_bias = jnp.where((tok[:, None] % N) == (tok[None, :] % N),
                          0.0, -1e30).astype(jnp.float32)                    # (T, T)
    G = ((tok[None, :] // N) ==
         jnp.arange(L, dtype=jnp.int32)[:, None]).astype(jnp.float32)        # (L, T)

    operands = (x_flat, mask_bias, G,
                params['wq'], params['bq'], params['wk'], params['bk'],
                params['wv'], params['bv'], params['wo'], params['bo'],
                params['wlin'], params['blin'], params['qvec'])

    flops = (num_heads * (6 * T * E * D + 4 * T * T * D + 2 * T * D * E)
             + 2 * T * E * Q + 2 * T * Q + 2 * L * T * E)
    transcendentals = num_heads * T * T + T * Q + T
    bytes_accessed = (sum(int(a.size) * a.dtype.itemsize for a in operands)
                      + L * E * hist_news_vector.dtype.itemsize)

    vmem = pl.BlockSpec(memory_space=pltpu.MemorySpace.VMEM)
    return pl.pallas_call(
        user_encoder_kernel,
        out_shape=jax.ShapeDtypeStruct((L, E), hist_news_vector.dtype),
        in_specs=[vmem] * len(operands),
        out_specs=vmem,
        cost_estimate=pl.CostEstimate(flops=flops,
                                      transcendentals=transcendentals,
                                      bytes_accessed=bytes_accessed),
    )(*operands)


def reference(x, raw, num_heads):
    """Plain-JAX transcription of the PyTorch forward (seq-major layout) for verification."""
    L, N, E = x.shape
    D = E // num_heads
    x = x.astype(jnp.float32)
    w_in, b_in = raw['w_in'], raw['b_in']
    q = jnp.einsum('lne,fe->lnf', x, w_in[:E]) + b_in[:E]
    k = jnp.einsum('lne,fe->lnf', x, w_in[E:2 * E]) + b_in[E:2 * E]
    v = jnp.einsum('lne,fe->lnf', x, w_in[2 * E:]) + b_in[2 * E:]

    def split(t):  # (L, N, E) -> (N, H, L, D), matching PyTorch head reshape
        return jnp.transpose(t.reshape(L, N, num_heads, D), (1, 2, 0, 3))

    qh, kh, vh = split(q), split(k), split(v)
    s = jnp.einsum('nhld,nhmd->nhlm', qh, kh) / math.sqrt(D)
    p = jax.nn.softmax(s, axis=-1)
    o = jnp.einsum('nhlm,nhmd->nhld', p, vh)
    o = jnp.transpose(o, (2, 0, 1, 3)).reshape(L, N, E)
    y = jnp.einsum('lne,fe->lnf', o, raw['w_out']) + raw['b_out']
    a = jnp.tanh(jnp.einsum('lne,qe->lnq', y, raw['w_lin']) + raw['b_lin'])
    sc = jnp.einsum('lnq,q->ln', a, raw['q_vec'])
    w = jax.nn.softmax(sc, axis=1)                            # F.softmax(..., dim=1)
    return jnp.einsum('ln,lne->le', w, y)


if __name__ == "__main__":
    # news_embed_dim=32, num_heads=4, query_dim=16; input (L=8, N=4, E=32)
    L, N, E, H, Q = 8, 4, 32, 4, 16
    key = jax.random.PRNGKey(0)
    kx, kp = jax.random.split(key)
    hist_news_vector = jax.random.normal(kx, (L, N, E), jnp.float32)
    raw = init_torch_params(kp, E, H, Q)
    params = pack_params(raw, H)

    out = user_encoder(hist_news_vector, params, num_heads=H)
    out = jax.block_until_ready(out)

    ref = reference(hist_news_vector, raw, H)
    assert out.shape == (L, E), out.shape
    # approx EUP reciprocals introduce ~1e-4-level relative error -> keep a small margin.
    err = float(jnp.max(jnp.abs(out - ref)))
    assert jnp.allclose(out, ref, atol=2e-3, rtol=2e-3), err
    print("KERNEL_OK")
</pallas_src>

<mosaic_0001>
module attributes {stable_mosaic.version = 11 : i64} {
  func.func @user_encoder_kernel(%arg0: memref<32x32xf32, #tpu.memory_space<vmem>>, %arg1: memref<32x32xf32, #tpu.memory_space<vmem>>, %arg2: memref<8x32xf32, #tpu.memory_space<vmem>>, %arg3: memref<4x32x8xf32, #tpu.memory_space<vmem>>, %arg4: memref<4x1x8xf32, #tpu.memory_space<vmem>>, %arg5: memref<4x32x8xf32, #tpu.memory_space<vmem>>, %arg6: memref<4x1x8xf32, #tpu.memory_space<vmem>>, %arg7: memref<4x32x8xf32, #tpu.memory_space<vmem>>, %arg8: memref<4x1x8xf32, #tpu.memory_space<vmem>>, %arg9: memref<4x8x32xf32, #tpu.memory_space<vmem>>, %arg10: memref<1x32xf32, #tpu.memory_space<vmem>>, %arg11: memref<32x16xf32, #tpu.memory_space<vmem>>, %arg12: memref<1x16xf32, #tpu.memory_space<vmem>>, %arg13: memref<1x16xf32, #tpu.memory_space<vmem>>, %arg14: memref<8x32xf32, #tpu.memory_space<vmem>>) attributes {dimension_semantics = [], scalar_prefetch = 0 : i64, scratch_operands = 0 : i64, tpu.core_type = #tpu.core_type<tc>} {
    %c0 = arith.constant 0 : index
    %c0_0 = arith.constant 0 : index
    %0 = vector.load %arg0[%c0, %c0_0] : memref<32x32xf32, #tpu.memory_space<vmem>>, vector<32x32xf32>
    %c0_1 = arith.constant 0 : index
    %c0_2 = arith.constant 0 : index
    %1 = vector.load %arg1[%c0_1, %c0_2] : memref<32x32xf32, #tpu.memory_space<vmem>>, vector<32x32xf32>
    %cst = arith.constant 0.000000e+00 : f32
    %2 = vector.broadcast %cst : f32 to vector<32x32xf32>
    %c0_3 = arith.constant 0 : index
    %c0_4 = arith.constant 0 : index
    %c0_5 = arith.constant 0 : index
    %3 = vector.load %arg3[%c0_3, %c0_4, %c0_5] : memref<4x32x8xf32, #tpu.memory_space<vmem>>, vector<1x32x8xf32>
    %4 = vector.shape_cast %3 : vector<1x32x8xf32> to vector<32x8xf32>
    %cst_6 = arith.constant dense<0.000000e+00> : vector<32x8xf32>
    %5 = tpu.matmul %0, %4, %cst_6 {dimension_numbers = #tpu.dot_dimension_numbers<[1], [0], [0], [1], [0, 0, 1, 1], [], []>} : vector<32x32xf32>, vector<32x8xf32>, vector<32x8xf32> -> vector<32x8xf32>
    %c0_7 = arith.constant 0 : index
    %c0_8 = arith.constant 0 : index
    %c0_9 = arith.constant 0 : index
    %6 = vector.load %arg4[%c0_7, %c0_8, %c0_9] : memref<4x1x8xf32, #tpu.memory_space<vmem>>, vector<1x1x8xf32>
    %7 = vector.shape_cast %6 : vector<1x1x8xf32> to vector<1x8xf32>
    %8 = vector.broadcast %7 : vector<1x8xf32> to vector<32x8xf32>
    %9 = arith.addf %5, %8 : vector<32x8xf32>
    %c0_10 = arith.constant 0 : index
    %c0_11 = arith.constant 0 : index
    %c0_12 = arith.constant 0 : index
    %10 = vector.load %arg5[%c0_10, %c0_11, %c0_12] : memref<4x32x8xf32, #tpu.memory_space<vmem>>, vector<1x32x8xf32>
    %11 = vector.shape_cast %10 : vector<1x32x8xf32> to vector<32x8xf32>
    %cst_13 = arith.constant dense<0.000000e+00> : vector<32x8xf32>
    %12 = tpu.matmul %0, %11, %cst_13 {dimension_numbers = #tpu.dot_dimension_numbers<[1], [0], [0], [1], [0, 0, 1, 1], [], []>} : vector<32x32xf32>, vector<32x8xf32>, vector<32x8xf32> -> vector<32x8xf32>
    %c0_14 = arith.constant 0 : index
    %c0_15 = arith.constant 0 : index
    %c0_16 = arith.constant 0 : index
    %13 = vector.load %arg6[%c0_14, %c0_15, %c0_16] : memref<4x1x8xf32, #tpu.memory_space<vmem>>, vector<1x1x8xf32>
    %14 = vector.shape_cast %13 : vector<1x1x8xf32> to vector<1x8xf32>
    %15 = vector.broadcast %14 : vector<1x8xf32> to vector<32x8xf32>
    %16 = arith.addf %12, %15 : vector<32x8xf32>
    %c0_17 = arith.constant 0 : index
    %c0_18 = arith.constant 0 : index
    %c0_19 = arith.constant 0 : index
    %17 = vector.load %arg7[%c0_17, %c0_18, %c0_19] : memref<4x32x8xf32, #tpu.memory_space<vmem>>, vector<1x32x8xf32>
    %18 = vector.shape_cast %17 : vector<1x32x8xf32> to vector<32x8xf32>
    %cst_20 = arith.constant dense<0.000000e+00> : vector<32x8xf32>
    %19 = tpu.matmul %0, %18, %cst_20 {dimension_numbers = #tpu.dot_dimension_numbers<[1], [0], [0], [1], [0, 0, 1, 1], [], []>} : vector<32x32xf32>, vector<32x8xf32>, vector<32x8xf32> -> vector<32x8xf32>
    %c0_21 = arith.constant 0 : index
    %c0_22 = arith.constant 0 : index
    %c0_23 = arith.constant 0 : index
    %20 = vector.load %arg8[%c0_21, %c0_22, %c0_23] : memref<4x1x8xf32, #tpu.memory_space<vmem>>, vector<1x1x8xf32>
    %21 = vector.shape_cast %20 : vector<1x1x8xf32> to vector<1x8xf32>
    %22 = vector.broadcast %21 : vector<1x8xf32> to vector<32x8xf32>
    %23 = arith.addf %19, %22 : vector<32x8xf32>
    "tpu.trace_start"() <{level = 10 : i32, message = "td,sd->ts"}> : () -> ()
    %cst_24 = arith.constant dense<0.000000e+00> : vector<32x32xf32>
    %24 = tpu.matmul %9, %16, %cst_24 {dimension_numbers = #tpu.dot_dimension_numbers<[1], [1], [0], [0], [0, 0, 1, 0], [], []>} : vector<32x8xf32>, vector<32x8xf32>, vector<32x32xf32> -> vector<32x32xf32>
    "tpu.trace_stop"() : () -> ()
    %25 = arith.addf %24, %1 : vector<32x32xf32>
    %cst_25 = arith.constant dense<0xFF800000> : vector<32xf32>
    %26 = vector.multi_reduction <maximumf>, %25, %cst_25 [1] : vector<32x32xf32> to vector<32xf32>
    %27 = vector.shape_cast %26 : vector<32xf32> to vector<32x1xf32>
    %28 = vector.broadcast %27 : vector<32x1xf32> to vector<32x32xf32>
    %29 = arith.subf %25, %28 : vector<32x32xf32>
    %30 = math.exp %29 : vector<32x32xf32>
    %cst_26 = arith.constant dense<0.000000e+00> : vector<32xf32>
    %31 = vector.multi_reduction <add>, %30, %cst_26 [1] : vector<32x32xf32> to vector<32xf32>
    %32 = vector.shape_cast %31 : vector<32xf32> to vector<32x1xf32>
    %33 = tpu.reciprocal %32 {approx = true} : vector<32x1xf32> -> vector<32x1xf32>
    %34 = vector.broadcast %33 : vector<32x1xf32> to vector<32x32xf32>
    %35 = arith.mulf %30, %34 : vector<32x32xf32>
    %cst_27 = arith.constant dense<0.000000e+00> : vector<32x8xf32>
    %36 = tpu.matmul %35, %23, %cst_27 {dimension_numbers = #tpu.dot_dimension_numbers<[1], [0], [0], [1], [0, 0, 1, 1], [], []>} : vector<32x32xf32>, vector<32x8xf32>, vector<32x8xf32> -> vector<32x8xf32>
    %c0_28 = arith.constant 0 : index
    %c0_29 = arith.constant 0 : index
    %c0_30 = arith.constant 0 : index
    %37 = vector.load %arg9[%c0_28, %c0_29, %c0_30] : memref<4x8x32xf32, #tpu.memory_space<vmem>>, vector<1x8x32xf32>
    %38 = vector.shape_cast %37 : vector<1x8x32xf32> to vector<8x32xf32>
    %cst_31 = arith.constant dense<0.000000e+00> : vector<32x32xf32>
    %39 = tpu.matmul %36, %38, %cst_31 {dimension_numbers = #tpu.dot_dimension_numbers<[1], [0], [0], [1], [0, 0, 1, 1], [], []>} : vector<32x8xf32>, vector<8x32xf32>, vector<32x32xf32> -> vector<32x32xf32>
    %40 = arith.addf %2, %39 : vector<32x32xf32>
    %c1 = arith.constant 1 : index
    %c0_32 = arith.constant 0 : index
    %c0_33 = arith.constant 0 : index
    %41 = vector.load %arg3[%c1, %c0_32, %c0_33] : memref<4x32x8xf32, #tpu.memory_space<vmem>>, vector<1x32x8xf32>
    %42 = vector.shape_cast %41 : vector<1x32x8xf32> to vector<32x8xf32>
    %cst_34 = arith.constant dense<0.000000e+00> : vector<32x8xf32>
    %43 = tpu.matmul %0, %42, %cst_34 {dimension_numbers = #tpu.dot_dimension_numbers<[1], [0], [0], [1], [0, 0, 1, 1], [], []>} : vector<32x32xf32>, vector<32x8xf32>, vector<32x8xf32> -> vector<32x8xf32>
    %c1_35 = arith.constant 1 : index
    %c0_36 = arith.constant 0 : index
    %c0_37 = arith.constant 0 : index
    %44 = vector.load %arg4[%c1_35, %c0_36, %c0_37] : memref<4x1x8xf32, #tpu.memory_space<vmem>>, vector<1x1x8xf32>
    %45 = vector.shape_cast %44 : vector<1x1x8xf32> to vector<1x8xf32>
    %46 = vector.broadcast %45 : vector<1x8xf32> to vector<32x8xf32>
    %47 = arith.addf %43, %46 : vector<32x8xf32>
    %c1_38 = arith.constant 1 : index
    %c0_39 = arith.constant 0 : index
    %c0_40 = arith.constant 0 : index
    %48 = vector.load %arg5[%c1_38, %c0_39, %c0_40] : memref<4x32x8xf32, #tpu.memory_space<vmem>>, vector<1x32x8xf32>
    %49 = vector.shape_cast %48 : vector<1x32x8xf32> to vector<32x8xf32>
    %cst_41 = arith.constant dense<0.000000e+00> : vector<32x8xf32>
    %50 = tpu.matmul %0, %49, %cst_41 {dimension_numbers = #tpu.dot_dimension_numbers<[1], [0], [0], [1], [0, 0, 1, 1], [], []>} : vector<32x32xf32>, vector<32x8xf32>, vector<32x8xf32> -> vector<32x8xf32>
    %c1_42 = arith.constant 1 : index
    %c0_43 = arith.constant 0 : index
    %c0_44 = arith.constant 0 : index
    %51 = vector.load %arg6[%c1_42, %c0_43, %c0_44] : memref<4x1x8xf32, #tpu.memory_space<vmem>>, vector<1x1x8xf32>
    %52 = vector.shape_cast %51 : vector<1x1x8xf32> to vector<1x8xf32>
    %53 = vector.broadcast %52 : vector<1x8xf32> to vector<32x8xf32>
    %54 = arith.addf %50, %53 : vector<32x8xf32>
    %c1_45 = arith.constant 1 : index
    %c0_46 = arith.constant 0 : index
    %c0_47 = arith.constant 0 : index
    %55 = vector.load %arg7[%c1_45, %c0_46, %c0_47] : memref<4x32x8xf32, #tpu.memory_space<vmem>>, vector<1x32x8xf32>
    %56 = vector.shape_cast %55 : vector<1x32x8xf32> to vector<32x8xf32>
    %cst_48 = arith.constant dense<0.000000e+00> : vector<32x8xf32>
    %57 = tpu.matmul %0, %56, %cst_48 {dimension_numbers = #tpu.dot_dimension_numbers<[1], [0], [0], [1], [0, 0, 1, 1], [], []>} : vector<32x32xf32>, vector<32x8xf32>, vector<32x8xf32> -> vector<32x8xf32>
    %c1_49 = arith.constant 1 : index
    %c0_50 = arith.constant 0 : index
    %c0_51 = arith.constant 0 : index
    %58 = vector.load %arg8[%c1_49, %c0_50, %c0_51] : memref<4x1x8xf32, #tpu.memory_space<vmem>>, vector<1x1x8xf32>
    %59 = vector.shape_cast %58 : vector<1x1x8xf32> to vector<1x8xf32>
    %60 = vector.broadcast %59 : vector<1x8xf32> to vector<32x8xf32>
    %61 = arith.addf %57, %60 : vector<32x8xf32>
    "tpu.trace_start"() <{level = 10 : i32, message = "td,sd->ts"}> : () -> ()
    %cst_52 = arith.constant dense<0.000000e+00> : vector<32x32xf32>
    %62 = tpu.matmul %47, %54, %cst_52 {dimension_numbers = #tpu.dot_dimension_numbers<[1], [1], [0], [0], [0, 0, 1, 0], [], []>} : vector<32x8xf32>, vector<32x8xf32>, vector<32x32xf32> -> vector<32x32xf32>
    "tpu.trace_stop"() : () -> ()
    %63 = arith.addf %62, %1 : vector<32x32xf32>
    %cst_53 = arith.constant dense<0xFF800000> : vector<32xf32>
    %64 = vector.multi_reduction <maximumf>, %63, %cst_53 [1] : vector<32x32xf32> to vector<32xf32>
    %65 = vector.shape_cast %64 : vector<32xf32> to vector<32x1xf32>
    %66 = vector.broadcast %65 : vector<32x1xf32> to vector<32x32xf32>
    %67 = arith.subf %63, %66 : vector<32x32xf32>
    %68 = math.exp %67 : vector<32x32xf32>
    %cst_54 = arith.constant dense<0.000000e+00> : vector<32xf32>
    %69 = vector.multi_reduction <add>, %68, %cst_54 [1] : vector<32x32xf32> to vector<32xf32>
    %70 = vector.shape_cast %69 : vector<32xf32> to vector<32x1xf32>
    %71 = tpu.reciprocal %70 {approx = true} : vector<32x1xf32> -> vector<32x1xf32>
    %72 = vector.broadcast %71 : vector<32x1xf32> to vector<32x32xf32>
    %73 = arith.mulf %68, %72 : vector<32x32xf32>
    %cst_55 = arith.constant dense<0.000000e+00> : vector<32x8xf32>
    %74 = tpu.matmul %73, %61, %cst_55 {dimension_numbers = #tpu.dot_dimension_numbers<[1], [0], [0], [1], [0, 0, 1, 1], [], []>} : vector<32x32xf32>, vector<32x8xf32>, vector<32x8xf32> -> vector<32x8xf32>
    %c1_56 = arith.constant 1 : index
    %c0_57 = arith.constant 0 : index
    %c0_58 = arith.constant 0 : index
    %75 = vector.load %arg9[%c1_56, %c0_57, %c0_58] : memref<4x8x32xf32, #tpu.memory_space<vmem>>, vector<1x8x32xf32>
    %76 = vector.shape_cast %75 : vector<1x8x32xf32> to vector<8x32xf32>
    %cst_59 = arith.constant dense<0.000000e+00> : vector<32x32xf32>
    %77 = tpu.matmul %74, %76, %cst_59 {dimension_numbers = #tpu.dot_dimension_numbers<[1], [0], [0], [1], [0, 0, 1, 1], [], []>} : vector<32x8xf32>, vector<8x32xf32>, vector<32x32xf32> -> vector<32x32xf32>
    %78 = arith.addf %40, %77 : vector<32x32xf32>
    %c2 = arith.constant 2 : index
    %c0_60 = arith.constant 0 : index
    %c0_61 = arith.constant 0 : index
    %79 = vector.load %arg3[%c2, %c0_60, %c0_61] : memref<4x32x8xf32, #tpu.memory_space<vmem>>, vector<1x32x8xf32>
    %80 = vector.shape_cast %79 : vector<1x32x8xf32> to vector<32x8xf32>
    %cst_62 = arith.constant dense<0.000000e+00> : vector<32x8xf32>
    %81 = tpu.matmul %0, %80, %cst_62 {dimension_numbers = #tpu.dot_dimension_numbers<[1], [0], [0], [1], [0, 0, 1, 1], [], []>} : vector<32x32xf32>, vector<32x8xf32>, vector<32x8xf32> -> vector<32x8xf32>
    %c2_63 = arith.constant 2 : index
    %c0_64 = arith.constant 0 : index
    %c0_65 = arith.constant 0 : index
    %82 = vector.load %arg4[%c2_63, %c0_64, %c0_65] : memref<4x1x8xf32, #tpu.memory_space<vmem>>, vector<1x1x8xf32>
    %83 = vector.shape_cast %82 : vector<1x1x8xf32> to vector<1x8xf32>
    %84 = vector.broadcast %83 : vector<1x8xf32> to vector<32x8xf32>
    %85 = arith.addf %81, %84 : vector<32x8xf32>
    %c2_66 = arith.constant 2 : index
    %c0_67 = arith.constant 0 : index
    %c0_68 = arith.constant 0 : index
    %86 = vector.load %arg5[%c2_66, %c0_67, %c0_68] : memref<4x32x8xf32, #tpu.memory_space<vmem>>, vector<1x32x8xf32>
    %87 = vector.shape_cast %86 : vector<1x32x8xf32> to vector<32x8xf32>
    %cst_69 = arith.constant dense<0.000000e+00> : vector<32x8xf32>
    %88 = tpu.matmul %0, %87, %cst_69 {dimension_numbers = #tpu.dot_dimension_numbers<[1], [0], [0], [1], [0, 0, 1, 1], [], []>} : vector<32x32xf32>, vector<32x8xf32>, vector<32x8xf32> -> vector<32x8xf32>
    %c2_70 = arith.constant 2 : index
    %c0_71 = arith.constant 0 : index
    %c0_72 = arith.constant 0 : index
    %89 = vector.load %arg6[%c2_70, %c0_71, %c0_72] : memref<4x1x8xf32, #tpu.memory_space<vmem>>, vector<1x1x8xf32>
    %90 = vector.shape_cast %89 : vector<1x1x8xf32> to vector<1x8xf32>
    %91 = vector.broadcast %90 : vector<1x8xf32> to vector<32x8xf32>
    %92 = arith.addf %88, %91 : vector<32x8xf32>
    %c2_73 = arith.constant 2 : index
    %c0_74 = arith.constant 0 : index
    %c0_75 = arith.constant 0 : index
    %93 = vector.load %arg7[%c2_73, %c0_74, %c0_75] : memref<4x32x8xf32, #tpu.memory_space<vmem>>, vector<1x32x8xf32>
    %94 = vector.shape_cast %93 : vector<1x32x8xf32> to vector<32x8xf32>
    %cst_76 = arith.constant dense<0.000000e+00> : vector<32x8xf32>
    %95 = tpu.matmul %0, %94, %cst_76 {dimension_numbers = #tpu.dot_dimension_numbers<[1], [0], [0], [1], [0, 0, 1, 1], [], []>} : vector<32x32xf32>, vector<32x8xf32>, vector<32x8xf32> -> vector<32x8xf32>
    %c2_77 = arith.constant 2 : index
    %c0_78 = arith.constant 0 : index
    %c0_79 = arith.constant 0 : index
    %96 = vector.load %arg8[%c2_77, %c0_78, %c0_79] : memref<4x1x8xf32, #tpu.memory_space<vmem>>, vector<1x1x8xf32>
    %97 = vector.shape_cast %96 : vector<1x1x8xf32> to vector<1x8xf32>
    %98 = vector.broadcast %97 : vector<1x8xf32> to vector<32x8xf32>
    %99 = arith.addf %95, %98 : vector<32x8xf32>
    "tpu.trace_start"() <{level = 10 : i32, message = "td,sd->ts"}> : () -> ()
    %cst_80 = arith.constant dense<0.000000e+00> : vector<32x32xf32>
    %100 = tpu.matmul %85, %92, %cst_80 {dimension_numbers = #tpu.dot_dimension_numbers<[1], [1], [0], [0], [0, 0, 1, 0], [], []>} : vector<32x8xf32>, vector<32x8xf32>, vector<32x32xf32> -> vector<32x32xf32>
    "tpu.trace_stop"() : () -> ()
    %101 = arith.addf %100, %1 : vector<32x32xf32>
    %cst_81 = arith.constant dense<0xFF800000> : vector<32xf32>
    %102 = vector.multi_reduction <maximumf>, %101, %cst_81 [1] : vector<32x32xf32> to vector<32xf32>
    %103 = vector.shape_cast %102 : vector<32xf32> to vector<32x1xf32>
    %104 = vector.broadcast %103 : vector<32x1xf32> to vector<32x32xf32>
    %105 = arith.subf %101, %104 : vector<32x32xf32>
    %106 = math.exp %105 : vector<32x32xf32>
    %cst_82 = arith.constant dense<0.000000e+00> : vector<32xf32>
    %107 = vector.multi_reduction <add>, %106, %cst_82 [1] : vector<32x32xf32> to vector<32xf32>
    %108 = vector.shape_cast %107 : vector<32xf32> to vector<32x1xf32>
    %109 = tpu.reciprocal %108 {approx = true} : vector<32x1xf32> -> vector<32x1xf32>
    %110 = vector.broadcast %109 : vector<32x1xf32> to vector<32x32xf32>
    %111 = arith.mulf %106, %110 : vector<32x32xf32>
    %cst_83 = arith.constant dense<0.000000e+00> : vector<32x8xf32>
    %112 = tpu.matmul %111, %99, %cst_83 {dimension_numbers = #tpu.dot_dimension_numbers<[1], [0], [0], [1], [0, 0, 1, 1], [], []>} : vector<32x32xf32>, vector<32x8xf32>, vector<32x8xf32> -> vector<32x8xf32>
    %c2_84 = arith.constant 2 : index
    %c0_85 = arith.constant 0 : index
    %c0_86 = arith.constant 0 : index
    %113 = vector.load %arg9[%c2_84, %c0_85, %c0_86] : memref<4x8x32xf32, #tpu.memory_space<vmem>>, vector<1x8x32xf32>
    %114 = vector.shape_cast %113 : vector<1x8x32xf32> to vector<8x32xf32>
    %cst_87 = arith.constant dense<0.000000e+00> : vector<32x32xf32>
    %115 = tpu.matmul %112, %114, %cst_87 {dimension_numbers = #tpu.dot_dimension_numbers<[1], [0], [0], [1], [0, 0, 1, 1], [], []>} : vector<32x8xf32>, vector<8x32xf32>, vector<32x32xf32> -> vector<32x32xf32>
    %116 = arith.addf %78, %115 : vector<32x32xf32>
    %c3 = arith.constant 3 : index
    %c0_88 = arith.constant 0 : index
    %c0_89 = arith.constant 0 : index
    %117 = vector.load %arg3[%c3, %c0_88, %c0_89] : memref<4x32x8xf32, #tpu.memory_space<vmem>>, vector<1x32x8xf32>
    %118 = vector.shape_cast %117 : vector<1x32x8xf32> to vector<32x8xf32>
    %cst_90 = arith.constant dense<0.000000e+00> : vector<32x8xf32>
    %119 = tpu.matmul %0, %118, %cst_90 {dimension_numbers = #tpu.dot_dimension_numbers<[1], [0], [0], [1], [0, 0, 1, 1], [], []>} : vector<32x32xf32>, vector<32x8xf32>, vector<32x8xf32> -> vector<32x8xf32>
    %c3_91 = arith.constant 3 : index
    %c0_92 = arith.constant 0 : index
    %c0_93 = arith.constant 0 : index
    %120 = vector.load %arg4[%c3_91, %c0_92, %c0_93] : memref<4x1x8xf32, #tpu.memory_space<vmem>>, vector<1x1x8xf32>
    %121 = vector.shape_cast %120 : vector<1x1x8xf32> to vector<1x8xf32>
    %122 = vector.broadcast %121 : vector<1x8xf32> to vector<32x8xf32>
    %123 = arith.addf %119, %122 : vector<32x8xf32>
    %c3_94 = arith.constant 3 : index
    %c0_95 = arith.constant 0 : index
    %c0_96 = arith.constant 0 : index
    %124 = vector.load %arg5[%c3_94, %c0_95, %c0_96] : memref<4x32x8xf32, #tpu.memory_space<vmem>>, vector<1x32x8xf32>
    %125 = vector.shape_cast %124 : vector<1x32x8xf32> to vector<32x8xf32>
    %cst_97 = arith.constant dense<0.000000e+00> : vector<32x8xf32>
    %126 = tpu.matmul %0, %125, %cst_97 {dimension_numbers = #tpu.dot_dimension_numbers<[1], [0], [0], [1], [0, 0, 1, 1], [], []>} : vector<32x32xf32>, vector<32x8xf32>, vector<32x8xf32> -> vector<32x8xf32>
    %c3_98 = arith.constant 3 : index
    %c0_99 = arith.constant 0 : index
    %c0_100 = arith.constant 0 : index
    %127 = vector.load %arg6[%c3_98, %c0_99, %c0_100] : memref<4x1x8xf32, #tpu.memory_space<vmem>>, vector<1x1x8xf32>
    %128 = vector.shape_cast %127 : vector<1x1x8xf32> to vector<1x8xf32>
    %129 = vector.broadcast %128 : vector<1x8xf32> to vector<32x8xf32>
    %130 = arith.addf %126, %129 : vector<32x8xf32>
    %c3_101 = arith.constant 3 : index
    %c0_102 = arith.constant 0 : index
    %c0_103 = arith.constant 0 : index
    %131 = vector.load %arg7[%c3_101, %c0_102, %c0_103] : memref<4x32x8xf32, #tpu.memory_space<vmem>>, vector<1x32x8xf32>
    %132 = vector.shape_cast %131 : vector<1x32x8xf32> to vector<32x8xf32>
    %cst_104 = arith.constant dense<0.000000e+00> : vector<32x8xf32>
    %133 = tpu.matmul %0, %132, %cst_104 {dimension_numbers = #tpu.dot_dimension_numbers<[1], [0], [0], [1], [0, 0, 1, 1], [], []>} : vector<32x32xf32>, vector<32x8xf32>, vector<32x8xf32> -> vector<32x8xf32>
    %c3_105 = arith.constant 3 : index
    %c0_106 = arith.constant 0 : index
    %c0_107 = arith.constant 0 : index
    %134 = vector.load %arg8[%c3_105, %c0_106, %c0_107] : memref<4x1x8xf32, #tpu.memory_space<vmem>>, vector<1x1x8xf32>
    %135 = vector.shape_cast %134 : vector<1x1x8xf32> to vector<1x8xf32>
    %136 = vector.broadcast %135 : vector<1x8xf32> to vector<32x8xf32>
    %137 = arith.addf %133, %136 : vector<32x8xf32>
    "tpu.trace_start"() <{level = 10 : i32, message = "td,sd->ts"}> : () -> ()
    %cst_108 = arith.constant dense<0.000000e+00> : vector<32x32xf32>
    %138 = tpu.matmul %123, %130, %cst_108 {dimension_numbers = #tpu.dot_dimension_numbers<[1], [1], [0], [0], [0, 0, 1, 0], [], []>} : vector<32x8xf32>, vector<32x8xf32>, vector<32x32xf32> -> vector<32x32xf32>
    "tpu.trace_stop"() : () -> ()
    %139 = arith.addf %138, %1 : vector<32x32xf32>
    %cst_109 = arith.constant dense<0xFF800000> : vector<32xf32>
    %140 = vector.multi_reduction <maximumf>, %139, %cst_109 [1] : vector<32x32xf32> to vector<32xf32>
    %141 = vector.shape_cast %140 : vector<32xf32> to vector<32x1xf32>
    %142 = vector.broadcast %141 : vector<32x1xf32> to vector<32x32xf32>
    %143 = arith.subf %139, %142 : vector<32x32xf32>
    %144 = math.exp %143 : vector<32x32xf32>
    %cst_110 = arith.constant dense<0.000000e+00> : vector<32xf32>
    %145 = vector.multi_reduction <add>, %144, %cst_110 [1] : vector<32x32xf32> to vector<32xf32>
    %146 = vector.shape_cast %145 : vector<32xf32> to vector<32x1xf32>
    %147 = tpu.reciprocal %146 {approx = true} : vector<32x1xf32> -> vector<32x1xf32>
    %148 = vector.broadcast %147 : vector<32x1xf32> to vector<32x32xf32>
    %149 = arith.mulf %144, %148 : vector<32x32xf32>
    %cst_111 = arith.constant dense<0.000000e+00> : vector<32x8xf32>
    %150 = tpu.matmul %149, %137, %cst_111 {dimension_numbers = #tpu.dot_dimension_numbers<[1], [0], [0], [1], [0, 0, 1, 1], [], []>} : vector<32x32xf32>, vector<32x8xf32>, vector<32x8xf32> -> vector<32x8xf32>
    %c3_112 = arith.constant 3 : index
    %c0_113 = arith.constant 0 : index
    %c0_114 = arith.constant 0 : index
    %151 = vector.load %arg9[%c3_112, %c0_113, %c0_114] : memref<4x8x32xf32, #tpu.memory_space<vmem>>, vector<1x8x32xf32>
    %152 = vector.shape_cast %151 : vector<1x8x32xf32> to vector<8x32xf32>
    %cst_115 = arith.constant dense<0.000000e+00> : vector<32x32xf32>
    %153 = tpu.matmul %150, %152, %cst_115 {dimension_numbers = #tpu.dot_dimension_numbers<[1], [0], [0], [1], [0, 0, 1, 1], [], []>} : vector<32x8xf32>, vector<8x32xf32>, vector<32x32xf32> -> vector<32x32xf32>
    %154 = arith.addf %116, %153 : vector<32x32xf32>
    %c0_116 = arith.constant 0 : index
    %c0_117 = arith.constant 0 : index
    %155 = vector.load %arg10[%c0_116, %c0_117] : memref<1x32xf32, #tpu.memory_space<vmem>>, vector<1x32xf32>
    %156 = vector.broadcast %155 : vector<1x32xf32> to vector<32x32xf32>
    %157 = arith.addf %154, %156 : vector<32x32xf32>
    %c0_118 = arith.constant 0 : index
    %c0_119 = arith.constant 0 : index
    %158 = vector.load %arg11[%c0_118, %c0_119] : memref<32x16xf32, #tpu.memory_space<vmem>>, vector<32x16xf32>
    %cst_120 = arith.constant dense<0.000000e+00> : vector<32x16xf32>
    %159 = tpu.matmul %157, %158, %cst_120 {dimension_numbers = #tpu.dot_dimension_numbers<[1], [0], [0], [1], [0, 0, 1, 1], [], []>} : vector<32x32xf32>, vector<32x16xf32>, vector<32x16xf32> -> vector<32x16xf32>
    %c0_121 = arith.constant 0 : index
    %c0_122 = arith.constant 0 : index
    %160 = vector.load %arg12[%c0_121, %c0_122] : memref<1x16xf32, #tpu.memory_space<vmem>>, vector<1x16xf32>
    %161 = vector.broadcast %160 : vector<1x16xf32> to vector<32x16xf32>
    %162 = arith.addf %159, %161 : vector<32x16xf32>
    %163 = math.tanh %162 : vector<32x16xf32>
    %c0_123 = arith.constant 0 : index
    %c0_124 = arith.constant 0 : index
    %164 = vector.load %arg13[%c0_123, %c0_124] : memref<1x16xf32, #tpu.memory_space<vmem>>, vector<1x16xf32>
    "tpu.trace_start"() <{level = 10 : i32, message = "oq,tq->ot"}> : () -> ()
    %cst_125 = arith.constant dense<0.000000e+00> : vector<1x32xf32>
    %165 = tpu.matmul %164, %163, %cst_125 {dimension_numbers = #tpu.dot_dimension_numbers<[1], [1], [0], [0], [0, 0, 1, 0], [], []>} : vector<1x16xf32>, vector<32x16xf32>, vector<1x32xf32> -> vector<1x32xf32>
    "tpu.trace_stop"() : () -> ()
    %cst_126 = arith.constant dense<0xFF800000> : vector<1xf32>
    %166 = vector.multi_reduction <maximumf>, %165, %cst_126 [1] : vector<1x32xf32> to vector<1xf32>
    %167 = vector.shape_cast %166 : vector<1xf32> to vector<1x1xf32>
    %168 = vector.broadcast %167 : vector<1x1xf32> to vector<1x32xf32>
    %169 = arith.subf %165, %168 : vector<1x32xf32>
    %170 = math.exp %169 : vector<1x32xf32>
    %c0_127 = arith.constant 0 : index
    %c0_128 = arith.constant 0 : index
    %171 = vector.load %arg2[%c0_127, %c0_128] : memref<8x32xf32, #tpu.memory_space<vmem>>, vector<8x32xf32>
    %172 = vector.broadcast %170 : vector<1x32xf32> to vector<8x32xf32>
    %173 = arith.mulf %171, %172 : vector<8x32xf32>
    %cst_129 = arith.constant dense<0.000000e+00> : vector<8x32xf32>
    %174 = tpu.matmul %173, %157, %cst_129 {dimension_numbers = #tpu.dot_dimension_numbers<[1], [0], [0], [1], [0, 0, 1, 1], [], []>} : vector<8x32xf32>, vector<32x32xf32>, vector<8x32xf32> -> vector<8x32xf32>
    %cst_130 = arith.constant dense<0.000000e+00> : vector<8xf32>
    %175 = vector.multi_reduction <add>, %173, %cst_130 [1] : vector<8x32xf32> to vector<8xf32>
    %176 = vector.shape_cast %175 : vector<8xf32> to vector<8x1xf32>
    %177 = tpu.reciprocal %176 {approx = true} : vector<8x1xf32> -> vector<8x1xf32>
    %178 = vector.broadcast %177 : vector<8x1xf32> to vector<8x32xf32>
    %179 = arith.mulf %174, %178 : vector<8x32xf32>
    %c0_131 = arith.constant 0 : index
    %c0_132 = arith.constant 0 : index
    %180 = vector.load %arg14[%c0_131, %c0_132] : memref<8x32xf32, #tpu.memory_space<vmem>>, vector<8x32xf32>
    tpu.vector_store %arg14[%c0_131, %c0_132], %179 {strides = array<i32>} : memref<8x32xf32, #tpu.memory_space<vmem>>, vector<8x32xf32>,
    return
  }
}

</mosaic_0001>

<llo_original>
// kernel: user_encoder.1
$region0: #{user_encoder.1}
  #allocation0 [shape = 'u32[]', space=smem, size = 0x4, offset = 0x4, fixed_abs, tag = 'smem constant byte address 0x4 - core index']
  #allocation1 [shape = 'u32[144,128]{1,0:T(1,128)}', space=vmem, size = 0x12000, scoped, tag = 'internal scratch']
  %s0 = inlined_call_operand.vmem [shape: f32[32,32], index: 0, kind: input, shape index: {}]
  %s1 = inlined_call_operand.vmem [shape: f32[32,32], index: 1, kind: input, shape index: {}]
  %s2 = inlined_call_operand.vmem [shape: f32[8,32], index: 2, kind: input, shape index: {}]
  %s3 = inlined_call_operand.vmem [shape: f32[4,32,8], index: 3, kind: input, shape index: {}]
  %s4 = inlined_call_operand.vmem [shape: f32[4,1,8], index: 4, kind: input, shape index: {}]
  %s5 = inlined_call_operand.vmem [shape: f32[4,32,8], index: 5, kind: input, shape index: {}]
  %s6 = inlined_call_operand.vmem [shape: f32[4,1,8], index: 6, kind: input, shape index: {}]
  %s7 = inlined_call_operand.vmem [shape: f32[4,32,8], index: 7, kind: input, shape index: {}]
  %s8 = inlined_call_operand.vmem [shape: f32[4,1,8], index: 8, kind: input, shape index: {}]
  %s9 = inlined_call_operand.vmem [shape: f32[4,8,32], index: 9, kind: input, shape index: {}]
  %s10 = inlined_call_operand.vmem [shape: f32[1,32], index: 10, kind: input, shape index: {}]
  %s11 = inlined_call_operand.vmem [shape: f32[32,16], index: 11, kind: input, shape index: {}]
  %s12 = inlined_call_operand.vmem [shape: f32[1,16], index: 12, kind: input, shape index: {}]
  %s13 = inlined_call_operand.vmem [shape: f32[1,16], index: 13, kind: input, shape index: {}]
  %s14 = inlined_call_operand.hbm [shape: f32[8,32], index: 14, kind: output, shape index: {}]
  %s15 = sld [smem:[#allocation0]]
  $region66: #{user_encoder.1} parent=0
    _
  %s17 = ssub.s32 1, %s15
  %s18 = scalar_select 0, %s17, %s15
  $region1: #{user_encoder.1} parent=0
    #allocation2 [shape = 'u8[4096]{0}', space=vmem, size = 0x1000, scoped, tag = 'output window, operand 0, single buffered']
    #allocation3 [shape = 's32[1]{0}', space=sflag, size = 0x4, scoped, tag = 'scoped memory for user_encoder.1']
    %19 = vsyncpa [#allocation3], 0
    // Predicated region
    $region2: #{user_encoder.1} parent=1 // pred_check
      _
    $region3: #{user_encoder.1} parent=1 // pred_check_branch
      %21 = sbr.rel (0) target = $region5
    $region4: #{user_encoder.1} parent=1 // pred_region
      _
    $region5: #{user_encoder.1} parent=1 // pred_fallthru
      _
    // Predicated region
    $region6: #{user_encoder.1} parent=1 // pred_check
      _
    $region7: #{user_encoder.1} parent=1 // pred_check_branch
      %23 = sbr.rel (0) target = $region9
    $region8: #{user_encoder.1} parent=1 // pred_region
      _
    $region9: #{user_encoder.1} parent=1 // pred_fallthru
      _
    // Predicated region
    $region10: #{user_encoder.1} parent=1 // pred_check
      _
    $region11: #{user_encoder.1} parent=1 // pred_check_branch
      %25 = sbr.rel (0) target = $region13
    $region12: #{user_encoder.1} parent=1 // pred_region
      _
    $region13: #{user_encoder.1} parent=1 // pred_fallthru
      _
    // Predicated region
    $region14: #{user_encoder.1} parent=1 // pred_check
      _
    $region15: #{user_encoder.1} parent=1 // pred_check_branch
      %27 = sbr.rel (0) target = $region17
    $region16: #{user_encoder.1} parent=1 // pred_region
      _
    $region17: #{user_encoder.1} parent=1 // pred_fallthru
      _
    // Predicated region
    $region18: #{user_encoder.1} parent=1 // pred_check
      _
    $region19: #{user_encoder.1} parent=1 // pred_check_branch
      %29 = sbr.rel (0) target = $region21
    $region20: #{user_encoder.1} parent=1 // pred_region
      _
    $region21: #{user_encoder.1} parent=1 // pred_fallthru
      _
    // Predicated region
    $region22: #{user_encoder.1} parent=1 // pred_check
      _
    $region23: #{user_encoder.1} parent=1 // pred_check_branch
      %31 = sbr.rel (0) target = $region25
    $region24: #{user_encoder.1} parent=1 // pred_region
      _
    $region25: #{user_encoder.1} parent=1 // pred_fallthru
      _
    // Predicated region
    $region26: #{user_encoder.1} parent=1 // pred_check
      _
    $region27: #{user_encoder.1} parent=1 // pred_check_branch
      %33 = sbr.rel (0) target = $region29
    $region28: #{user_encoder.1} parent=1 // pred_region
      _
    $region29: #{user_encoder.1} parent=1 // pred_fallthru
      _
    // Predicated region
    $region30: #{user_encoder.1} parent=1 // pred_check
      _
    $region31: #{user_encoder.1} parent=1 // pred_check_branch
      %35 = sbr.rel (0) target = $region33
    $region32: #{user_encoder.1} parent=1 // pred_region
      _
    $region33: #{user_encoder.1} parent=1 // pred_fallthru
      _
    // Predicated region
    $region34: #{user_encoder.1} parent=1 // pred_check
      _
    $region35: #{user_encoder.1} parent=1 // pred_check_branch
      %37 = sbr.rel (0) target = $region37
    $region36: #{user_encoder.1} parent=1 // pred_region
      _
    $region37: #{user_encoder.1} parent=1 // pred_fallthru
      _
    // Predicated region
    $region38: #{user_encoder.1} parent=1 // pred_check
      _
    $region39: #{user_encoder.1} parent=1 // pred_check_branch
      %39 = sbr.rel (0) target = $region41
    $region40: #{user_encoder.1} parent=1 // pred_region
      _
    $region41: #{user_encoder.1} parent=1 // pred_fallthru
      _
    // Predicated region
    $region42: #{user_encoder.1} parent=1 // pred_check
      _
    $region43: #{user_encoder.1} parent=1 // pred_check_branch
      %41 = sbr.rel (0) target = $region45
    $region44: #{user_encoder.1} parent=1 // pred_region
      _
    $region45: #{user_encoder.1} parent=1 // pred_fallthru
      _
    // Predicated region
    $region46: #{user_encoder.1} parent=1 // pred_check
      _
    $region47: #{user_encoder.1} parent=1 // pred_check_branch
      %43 = sbr.rel (0) target = $region49
    $region48: #{user_encoder.1} parent=1 // pred_region
      _
    $region49: #{user_encoder.1} parent=1 // pred_fallthru
      _
    // Predicated region
    $region50: #{user_encoder.1} parent=1 // pred_check
      _
    $region51: #{user_encoder.1} parent=1 // pred_check_branch
      %45 = sbr.rel (0) target = $region53
    $region52: #{user_encoder.1} parent=1 // pred_region
      _
    $region53: #{user_encoder.1} parent=1 // pred_fallthru
      _
    // Predicated region
    $region54: #{user_encoder.1} parent=1 // pred_check
      _
    $region55: #{user_encoder.1} parent=1 // pred_check_branch
      %47 = sbr.rel (0) target = $region57
    $region56: #{user_encoder.1} parent=1 // pred_region
      _
    $region57: #{user_encoder.1} parent=1 // pred_fallthru
      _
    %v48 = vld [vmem:[%s0] sm:$0xff]
    %v49 = vld [vmem:[%s0 + $0x8] sm:$0xff]
    %v50 = vld [vmem:[%s0 + $0x10] sm:$0xff]
    %v51 = vld [vmem:[%s0 + $0x18] sm:$0xff]
    %v52 = vld [vmem:[%s1] sm:$0xff]
    %v53 = vld [vmem:[%s1 + $0x8] sm:$0xff]
    %v54 = vld [vmem:[%s1 + $0x10] sm:$0xff]
    %v55 = vld [vmem:[%s1 + $0x18] sm:$0xff]
    %v56 = vld [vmem:[%s3] sm:$0xff]
    %v57 = vld [vmem:[%s3 + $0x8] sm:$0xff]
    %v58 = vld [vmem:[%s3 + $0x10] sm:$0xff]
    %v59 = vld [vmem:[%s3 + $0x18] sm:$0xff]
    %v60 = vld [vmem:[%s4] sm:$0x1]
    %v62 = vlaneseq
    %v63 = vshrl.u32 %v62, 7
    %v64 = vsub.s32 0, %v63
    %v65 = vrot.slane %v60, %v64
    %vm67 = vcmask 261120
    %v69 = vsel %vm67, %v48, 0
    %v72 = vsel %vm67, %v49, 0
    %v75 = vsel %vm67, %v50, 0
    %v78 = vsel %vm67, %v51, 0
    %80 = vmatprep.subr.mxu0 0.0
    %81 = vmatpush1.msra.mxu0 %v56
    %82 = vmatprep.subr.mxu0 0.0
    %83 = vmatpush1.msra.mxu0 %v57
    %84 = vmatprep.subr.mxu0 0.0
    %85 = vmatpush1.msra.mxu0 %v58
    %86 = vmatprep.subr.mxu0 0.0
    %87 = vmatpush1.msra.mxu0 %v59
    %88 = vmatprep.subr.mxu0 0.0
    %89 = vmatpush1.msra.mxu0 0.0
    %90 = vmatprep.subr.mxu0 0.0
    %91 = vmatpush1.msra.mxu0 0.0
    %92 = vmatprep.subr.mxu0 0.0
    %93 = vmatpush1.msra.mxu0 0.0
    %94 = vmatprep.subr.mxu0 0.0
    %95 = vmatpush1.msra.mxu0 0.0
    %96 = vmatprep.subr.mxu0 0.0
    %97 = vmatpush1.msra.mxu0 0.0
    %98 = vmatprep.subr.mxu0 0.0
    %99 = vmatpush1.msra.mxu0 0.0
    %100 = vmatprep.subr.mxu0 0.0
    %101 = vmatpush1.msra.mxu0 0.0
    %102 = vmatprep.subr.mxu0 0.0
    %103 = vmatpush1.msra.mxu0 0.0
    %104 = vmatprep.subr.mxu0 0.0
    %105 = vmatpush1.msra.mxu0 0.0
    %106 = vmatprep.subr.mxu0 0.0
    %107 = vmatpush1.msra.mxu0 0.0
    %108 = vmatprep.subr.mxu0 0.0
    %109 = vmatpush1.msra.mxu0 0.0
    %110 = vmatprep.subr.mxu0 0.0
    %111 = vmatpush1.msra.mxu0 0.0
    %112 = vmatprep.subr.mxu0 0.0
    %113 = vmatpush1.msra.mxu0 0.0
    %114 = vmatprep.subr.mxu0 0.0
    %115 = vmatpush1.msra.mxu0 0.0
    %116 = vmatprep.subr.mxu0 0.0
    %117 = vmatpush1.msra.mxu0 0.0
    %118 = vmatprep.subr.mxu0 0.0
    %119 = vmatpush1.msra.mxu0 0.0
    %120 = vmatprep.subr.mxu0 0.0
    %121 = vmatpush1.msra.mxu0 0.0
    %122 = vmatprep.subr.mxu0 0.0
    %123 = vmatpush1.msra.mxu0 0.0
    %124 = vmatprep.subr.mxu0 0.0
    %125 = vmatpush1.msra.mxu0 0.0
    %126 = vmatprep.subr.mxu0 0.0
    %127 = vmatpush1.msra.mxu0 0.0
    %128 = vmatprep.subr.mxu0 0.0
    %129 = vmatpush1.msra.mxu0 0.0
    %130 = vmatprep.subr.mxu0 0.0
    %131 = vmatpush1.msra.mxu0 0.0
    %132 = vmatprep.subr.mxu0 0.0
    %133 = vmatpush1.msra.mxu0 0.0
    %134 = vmatprep.subr.mxu0 0.0
    %135 = vmatpush1.msra.mxu0 0.0
    %136 = vmatprep.subr.mxu0 0.0
    %137 = vmatpush1.msra.mxu0 0.0
    %138 = vmatprep.subr.mxu0 0.0
    %139 = vmatpush1.msra.mxu0 0.0
    %140 = vmatprep.subr.mxu0 0.0
    %141 = vmatpush1.msra.mxu0 0.0
    %142 = vmatprep.subr.mxu0 0.0
    %143 = vmatpush1.msra.mxu0 0.0
    %144 = vmatprep.mubr.f32.mxu0 0.0
    %145 = vmatmul.mubr.f32.gmra.mrb[0].mxu0 %v69
    %v146 = vpop.f32.mrb[0].mxu0
    %v147 = vadd.f32 %v65, %v146
    %v148 = vpop.f32.mrb[0].mxu0
    %149 = vmatprep.mubr.f32.mxu0 0.0
    %150 = vmatmul.mubr.f32.gmra.mrb[0].mxu0 %v72
    %v151 = vpop.f32.mrb[0].mxu0
    %v152 = vadd.f32 %v65, %v151
    %v153 = vpop.f32.mrb[0].mxu0
    %154 = vmatprep.mubr.f32.mxu0 0.0
    %155 = vmatmul.mubr.f32.gmra.mrb[0].mxu0 %v75
    %v156 = vpop.f32.mrb[0].mxu0
    %v157 = vadd.f32 %v65, %v156
    %v158 = vpop.f32.mrb[0].mxu0
    %159 = vmatprep.mubr.f32.mxu0 0.0
    %160 = vmatmul.mubr.f32.gmra.mrb[0].mxu0 %v78
    %v161 = vpop.f32.mrb[0].mxu0
    %v162 = vadd.f32 %v65, %v161
    %v163 = vpop.f32.mrb[0].mxu0
    %164 = vdwg.mxu0
    %v165 = vld [vmem:[%s5] sm:$0xff]
    %v166 = vld [vmem:[%s5 + $0x8] sm:$0xff]
    %v167 = vld [vmem:[%s5 + $0x10] sm:$0xff]
    %v168 = vld [vmem:[%s5 + $0x18] sm:$0xff]
    %v169 = vld [vmem:[%s6] sm:$0x1]
    %v171 = vlaneseq
    %v172 = vshrl.u32 %v171, 7
    %v173 = vsub.s32 0, %v172
    %v174 = vrot.slane %v169, %v173
    %176 = vmatprep.subr.mxu0 0.0
    %177 = vmatpush1.msra.mxu0 %v165
    %178 = vmatprep.subr.mxu0 0.0
    %179 = vmatpush1.msra.mxu0 %v166
    %180 = vmatprep.subr.mxu0 0.0
    %181 = vmatpush1.msra.mxu0 %v167
    %182 = vmatprep.subr.mxu0 0.0
    %183 = vmatpush1.msra.mxu0 %v168
    %184 = vmatprep.subr.mxu0 0.0
    %185 = vmatpush1.msra.mxu0 0.0
    %186 = vmatprep.subr.mxu0 0.0
    %187 = vmatpush1.msra.mxu0 0.0
    %188 = vmatprep.subr.mxu0 0.0
    %189 = vmatpush1.msra.mxu0 0.0
    %190 = vmatprep.subr.mxu0 0.0
    %191 = vmatpush1.msra.mxu0 0.0
    %192 = vmatprep.subr.mxu0 0.0
    %193 = vmatpush1.msra.mxu0 0.0
    %194 = vmatprep.subr.mxu0 0.0
    %195 = vmatpush1.msra.mxu0 0.0
    %196 = vmatprep.subr.mxu0 0.0
    %197 = vmatpush1.msra.mxu0 0.0
    %198 = vmatprep.subr.mxu0 0.0
    %199 = vmatpush1.msra.mxu0 0.0
    %200 = vmatprep.subr.mxu0 0.0
    %201 = vmatpush1.msra.mxu0 0.0
    %202 = vmatprep.subr.mxu0 0.0
    %203 = vmatpush1.msra.mxu0 0.0
    %204 = vmatprep.subr.mxu0 0.0
    %205 = vmatpush1.msra.mxu0 0.0
    %206 = vmatprep.subr.mxu0 0.0
    %207 = vmatpush1.msra.mxu0 0.0
    %208 = vmatprep.subr.mxu0 0.0
    %209 = vmatpush1.msra.mxu0 0.0
    %210 = vmatprep.subr.mxu0 0.0
    %211 = vmatpush1.msra.mxu0 0.0
    %212 = vmatprep.subr.mxu0 0.0
    %213 = vmatpush1.msra.mxu0 0.0
    %214 = vmatprep.subr.mxu0 0.0
    %215 = vmatpush1.msra.mxu0 0.0
    %216 = vmatprep.subr.mxu0 0.0
    %217 = vmatpush1.msra.mxu0 0.0
    %218 = vmatprep.subr.mxu0 0.0
    %219 = vmatpush1.msra.mxu0 0.0
    %220 = vmatprep.subr.mxu0 0.0
    %221 = vmatpush1.msra.mxu0 0.0
    %222 = vmatprep.subr.mxu0 0.0
    %223 = vmatpush1.msra.mxu0 0.0
    %224 = vmatprep.subr.mxu0 0.0
    %225 = vmatpush1.msra.mxu0 0.0
    %226 = vmatprep.subr.mxu0 0.0
    %227 = vmatpush1.msra.mxu0 0.0
    %228 = vmatprep.subr.mxu0 0.0
    %229 = vmatpush1.msra.mxu0 0.0
    %230 = vmatprep.subr.mxu0 0.0
    %231 = vmatpush1.msra.mxu0 0.0
    %232 = vmatprep.subr.mxu0 0.0
    %233 = vmatpush1.msra.mxu0 0.0
    %234 = vmatprep.subr.mxu0 0.0
    %235 = vmatpush1.msra.mxu0 0.0
    %236 = vmatprep.subr.mxu0 0.0
    %237 = vmatpush1.msra.mxu0 0.0
    %238 = vmatprep.subr.mxu0 0.0
    %239 = vmatpush1.msra.mxu0 0.0
    %240 = vmatprep.mubr.f32.mxu0 0.0
    %241 = vmatmul.mubr.f32.gmra.mrb[0].mxu0 %v69
    %v242 = vpop.f32.mrb[0].mxu0
    %v243 = vadd.f32 %v174, %v242
    %v244 = vpop.f32.mrb[0].mxu0
    %245 = vmatprep.mubr.f32.mxu0 0.0
    %246 = vmatmul.mubr.f32.gmra.mrb[0].mxu0 %v72
    %v247 = vpop.f32.mrb[0].mxu0
    %v248 = vadd.f32 %v174, %v247
    %v249 = vpop.f32.mrb[0].mxu0
    %250 = vmatprep.mubr.f32.mxu0 0.0
    %251 = vmatmul.mubr.f32.gmra.mrb[0].mxu0 %v75
    %v252 = vpop.f32.mrb[0].mxu0
    %v253 = vadd.f32 %v174, %v252
    %v254 = vpop.f32.mrb[0].mxu0
    %255 = vmatprep.mubr.f32.mxu0 0.0
    %256 = vmatmul.mubr.f32.gmra.mrb[0].mxu0 %v78
    %v257 = vpop.f32.mrb[0].mxu0
    %v258 = vadd.f32 %v174, %v257
    %v259 = vpop.f32.mrb[0].mxu0
    %260 = vdwg.mxu0
    %v261 = vld [vmem:[%s7] sm:$0xff]
    %v262 = vld [vmem:[%s7 + $0x8] sm:$0xff]
    %v263 = vld [vmem:[%s7 + $0x10] sm:$0xff]
    %v264 = vld [vmem:[%s7 + $0x18] sm:$0xff]
    %v265 = vld [vmem:[%s8] sm:$0x1]
    %v267 = vlaneseq
    %v268 = vshrl.u32 %v267, 7
    %v269 = vsub.s32 0, %v268
    %v270 = vrot.slane %v265, %v269
    %272 = vmatprep.subr.mxu0 0.0
    %273 = vmatpush1.msra.mxu0 %v261
    %274 = vmatprep.subr.mxu0 0.0
    %275 = vmatpush1.msra.mxu0 %v262
    %276 = vmatprep.subr.mxu0 0.0
    %277 = vmatpush1.msra.mxu0 %v263
    %278 = vmatprep.subr.mxu0 0.0
    %279 = vmatpush1.msra.mxu0 %v264
    %280 = vmatprep.subr.mxu0 0.0
    %281 = vmatpush1.msra.mxu0 0.0
    %282 = vmatprep.subr.mxu0 0.0
    %283 = vmatpush1.msra.mxu0 0.0
    %284 = vmatprep.subr.mxu0 0.0
    %285 = vmatpush1.msra.mxu0 0.0
    %286 = vmatprep.subr.mxu0 0.0
    %287 = vmatpush1.msra.mxu0 0.0
    %288 = vmatprep.subr.mxu0 0.0
    %289 = vmatpush1.msra.mxu0 0.0
    %290 = vmatprep.subr.mxu0 0.0
    %291 = vmatpush1.msra.mxu0 0.0
    %292 = vmatprep.subr.mxu0 0.0
    %293 = vmatpush1.msra.mxu0 0.0
    %294 = vmatprep.subr.mxu0 0.0
    %295 = vmatpush1.msra.mxu0 0.0
    %296 = vmatprep.subr.mxu0 0.0
    %297 = vmatpush1.msra.mxu0 0.0
    %298 = vmatprep.subr.mxu0 0.0
    %299 = vmatpush1.msra.mxu0 0.0
    %300 = vmatprep.subr.mxu0 0.0
    %301 = vmatpush1.msra.mxu0 0.0
    %302 = vmatprep.subr.mxu0 0.0
    %303 = vmatpush1.msra.mxu0 0.0
    %304 = vmatprep.subr.mxu0 0.0
    %305 = vmatpush1.msra.mxu0 0.0
    %306 = vmatprep.subr.mxu0 0.0
    %307 = vmatpush1.msra.mxu0 0.0
    %308 = vmatprep.subr.mxu0 0.0
    %309 = vmatpush1.msra.mxu0 0.0
    %310 = vmatprep.subr.mxu0 0.0
    %311 = vmatpush1.msra.mxu0 0.0
    %312 = vmatprep.subr.mxu0 0.0
    %313 = vmatpush1.msra.mxu0 0.0
    %314 = vmatprep.subr.mxu0 0.0
    %315 = vmatpush1.msra.mxu0 0.0
    %316 = vmatprep.subr.mxu0 0.0
    %317 = vmatpush1.msra.mxu0 0.0
    %318 = vmatprep.subr.mxu0 0.0
    %319 = vmatpush1.msra.mxu0 0.0
    %320 = vmatprep.subr.mxu0 0.0
    %321 = vmatpush1.msra.mxu0 0.0
    %322 = vmatprep.subr.mxu0 0.0
    %323 = vmatpush1.msra.mxu0 0.0
    %324 = vmatprep.subr.mxu0 0.0
    %325 = vmatpush1.msra.mxu0 0.0
    %326 = vmatprep.subr.mxu0 0.0
    %327 = vmatpush1.msra.mxu0 0.0
    %328 = vmatprep.subr.mxu0 0.0
    %329 = vmatpush1.msra.mxu0 0.0
    %330 = vmatprep.subr.mxu0 0.0
    %331 = vmatpush1.msra.mxu0 0.0
    %332 = vmatprep.subr.mxu0 0.0
    %333 = vmatpush1.msra.mxu0 0.0
    %334 = vmatprep.subr.mxu0 0.0
    %335 = vmatpush1.msra.mxu0 0.0
    %336 = vmatprep.mubr.f32.mxu0 0.0
    %337 = vmatmul.mubr.f32.gmra.mrb[0].mxu0 %v69
    %v338 = vpop.f32.mrb[0].mxu0
    %v339 = vadd.f32 %v270, %v338
    %v340 = vpop.f32.mrb[0].mxu0
    %341 = vmatprep.mubr.f32.mxu0 0.0
    %342 = vmatmul.mubr.f32.gmra.mrb[0].mxu0 %v72
    %v343 = vpop.f32.mrb[0].mxu0
    %v344 = vadd.f32 %v270, %v343
    %v345 = vpop.f32.mrb[0].mxu0
    %346 = vmatprep.mubr.f32.mxu0 0.0
    %347 = vmatmul.mubr.f32.gmra.mrb[0].mxu0 %v75
    %v348 = vpop.f32.mrb[0].mxu0
    %v349 = vadd.f32 %v270, %v348
    %v350 = vpop.f32.mrb[0].mxu0
    %351 = vmatprep.mubr.f32.mxu0 0.0
    %352 = vmatmul.mubr.f32.gmra.mrb[0].mxu0 %v78
    %v353 = vpop.f32.mrb[0].mxu0
    %v354 = vadd.f32 %v270, %v353
    %v355 = vpop.f32.mrb[0].mxu0
    %356 = vdwg.mxu0
    %vm357 = vcmask 64512
    %v359 = vsel %vm357, %v147, 0
    %v362 = vsel %vm357, %v152, 0
    %v365 = vsel %vm357, %v157, 0
    %v368 = vsel %vm357, %v162, 0
    %v371 = vsel %vm357, %v243, 0
    %v374 = vsel %vm357, %v248, 0
    %v377 = vsel %vm357, %v253, 0
    %v380 = vsel %vm357, %v258, 0
    %382 = vmatprep.subr.mxu0 0.0
    %383 = vmatpush1.xpose.msra.mxu0 %v371
    %384 = vmatprep.subr.mxu0 0.0
    %385 = vmatpush1.xpose.msra.mxu0 %v374
    %386 = vmatprep.subr.mxu0 0.0
    %387 = vmatpush1.xpose.msra.mxu0 %v377
    %388 = vmatprep.subr.mxu0 0.0
    %389 = vmatpush1.xpose.msra.mxu0 %v380
    %390 = vmatprep.subr.mxu0 0.0
    %391 = vmatpush1.xpose.msra.mxu0 0.0
    %392 = vmatprep.subr.mxu0 0.0
    %393 = vmatpush1.xpose.msra.mxu0 0.0
    %394 = vmatprep.subr.mxu0 0.0
    %395 = vmatpush1.xpose.msra.mxu0 0.0
    %396 = vmatprep.subr.mxu0 0.0
    %397 = vmatpush1.xpose.msra.mxu0 0.0
    %398 = vmatprep.subr.mxu0 0.0
    %399 = vmatpush1.xpose.msra.mxu0 0.0
    %400 = vmatprep.subr.mxu0 0.0
    %401 = vmatpush1.xpose.msra.mxu0 0.0
    %402 = vmatprep.subr.mxu0 0.0
    %403 = vmatpush1.xpose.msra.mxu0 0.0
    %404 = vmatprep.subr.mxu0 0.0
    %405 = vmatpush1.xpose.msra.mxu0 0.0
    %406 = vmatprep.subr.mxu0 0.0
    %407 = vmatpush1.xpose.msra.mxu0 0.0
    %408 = vmatprep.subr.mxu0 0.0
    %409 = vmatpush1.xpose.msra.mxu0 0.0
    %410 = vmatprep.subr.mxu0 0.0
    %411 = vmatpush1.xpose.msra.mxu0 0.0
    %412 = vmatprep.subr.mxu0 0.0
    %413 = vmatpush1.xpose.msra.mxu0 0.0
    %414 = vmatprep.subr.mxu0 0.0
    %415 = vmatpush1.xpose.msra.mxu0 0.0
    %416 = vmatprep.subr.mxu0 0.0
    %417 = vmatpush1.xpose.msra.mxu0 0.0
    %418 = vmatprep.subr.mxu0 0.0
    %419 = vmatpush1.xpose.msra.mxu0 0.0
    %420 = vmatprep.subr.mxu0 0.0
    %421 = vmatpush1.xpose.msra.mxu0 0.0
    %422 = vmatprep.subr.mxu0 0.0
    %423 = vmatpush1.xpose.msra.mxu0 0.0
    %424 = vmatprep.subr.mxu0 0.0
    %425 = vmatpush1.xpose.msra.mxu0 0.0
    %426 = vmatprep.subr.mxu0 0.0
    %427 = vmatpush1.xpose.msra.mxu0 0.0
    %428 = vmatprep.subr.mxu0 0.0
    %429 = vmatpush1.xpose.msra.mxu0 0.0
    %430 = vmatprep.subr.mxu0 0.0
    %431 = vmatpush1.xpose.msra.mxu0 0.0
    %432 = vmatprep.subr.mxu0 0.0
    %433 = vmatpush1.xpose.msra.mxu0 0.0
    %434 = vmatprep.subr.mxu0 0.0
    %435 = vmatpush1.xpose.msra.mxu0 0.0
    %436 = vmatprep.subr.mxu0 0.0
    %437 = vmatpush1.xpose.msra.mxu0 0.0
    %438 = vmatprep.subr.mxu0 0.0
    %439 = vmatpush1.xpose.msra.mxu0 0.0
    %440 = vmatprep.subr.mxu0 0.0
    %441 = vmatpush1.xpose.msra.mxu0 0.0
    %442 = vmatprep.subr.mxu0 0.0
    %443 = vmatpush1.xpose.msra.mxu0 0.0
    %444 = vmatprep.subr.mxu0 0.0
    %445 = vmatpush1.xpose.msra.mxu0 0.0
    %446 = vmatprep.mubr.f32.mxu0 0.0
    %447 = vmatmul.mubr.f32.gmra.mrb[0].mxu0 %v359
    %v448 = vpop.f32.mrb[0].mxu0
    %v449 = vadd.f32 %v52, %v448
    %v450 = vpop.f32.mrb[0].mxu0
    %451 = vmatprep.mubr.f32.mxu0 0.0
    %452 = vmatmul.mubr.f32.gmra.mrb[0].mxu0 %v362
    %v453 = vpop.f32.mrb[0].mxu0
    %v454 = vadd.f32 %v53, %v453
    %v455 = vpop.f32.mrb[0].mxu0
    %456 = vmatprep.mubr.f32.mxu0 0.0
    %457 = vmatmul.mubr.f32.gmra.mrb[0].mxu0 %v365
    %v458 = vpop.f32.mrb[0].mxu0
    %v459 = vadd.f32 %v54, %v458
    %v460 = vpop.f32.mrb[0].mxu0
    %461 = vmatprep.mubr.f32.mxu0 0.0
    %462 = vmatmul.mubr.f32.gmra.mrb[0].mxu0 %v368
    %v463 = vpop.f32.mrb[0].mxu0
    %v464 = vadd.f32 %v55, %v463
    %v465 = vpop.f32.mrb[0].mxu0
    %466 = vdwg.mxu0
    %v467 = vsel %vm67, %v449, -inf
    %468 = vmax.xlane.f32.xlu0 %v467
    %v469 = vpop.xlane.xlu0 %468
    %v470 = vsel %vm67, %v454, -inf
    %471 = vmax.xlane.f32.xlu0 %v470
    %v472 = vpop.xlane.xlu0 %471
    %v473 = vsel %vm67, %v459, -inf
    %474 = vmax.xlane.f32.xlu0 %v473
    %v475 = vpop.xlane.xlu0 %474
    %v476 = vsel %vm67, %v464, -inf
    %477 = vmax.xlane.f32.xlu0 %v476
    %v478 = vpop.xlane.xlu0 %477
    %v479 = vsub.f32 %v449, %v469
    %v480 = vsub.f32 %v454, %v472
    %v481 = vsub.f32 %v459, %v475
    %v482 = vsub.f32 %v464, %v478
    %v483 = vmul.f32 %v479, 1.442695
    %v484 = vpow.pop %v483
    %v485 = vmul.f32 %v480, 1.442695
    %v486 = vpow.pop %v485
    %v487 = vmul.f32 %v481, 1.442695
    %v488 = vpow.pop %v487
    %v489 = vmul.f32 %v482, 1.442695
    %v490 = vpow.pop %v489
    %v491 = vsel %vm67, %v484, 0.0
    %492 = vadd.xlane.f32.xlu0 %v491
    %v493 = vpop.xlane.xlu0 %492
    %v494 = vsel %vm67, %v486, 0.0
    %495 = vadd.xlane.f32.xlu0 %v494
    %v496 = vpop.xlane.xlu0 %495
    %v497 = vsel %vm67, %v488, 0.0
    %498 = vadd.xlane.f32.xlu0 %v497
    %v499 = vpop.xlane.xlu0 %498
    %v500 = vsel %vm67, %v490, 0.0
    %501 = vadd.xlane.f32.xlu0 %v500
    %v502 = vpop.xlane.xlu0 %501
    %v503 = vrcp.pop %v493
    %v504 = vrcp.pop %v496
    %v505 = vrcp.pop %v499
    %v506 = vrcp.pop %v502
    %v507 = vmul.f32 %v484, %v503
    %v508 = vmul.f32 %v486, %v504
    %v509 = vmul.f32 %v488, %v505
    %v510 = vmul.f32 %v490, %v506
    %v512 = vsel %vm67, %v507, 0
    %v515 = vsel %vm67, %v508, 0
    %v518 = vsel %vm67, %v509, 0
    %v521 = vsel %vm67, %v510, 0
    %523 = vmatprep.subr.mxu0 0.0
    %524 = vmatpush1.msra.mxu0 %v339
    %525 = vmatprep.subr.mxu0 0.0
    %526 = vmatpush1.msra.mxu0 %v344
    %527 = vmatprep.subr.mxu0 0.0
    %528 = vmatpush1.msra.mxu0 %v349
    %529 = vmatprep.subr.mxu0 0.0
    %530 = vmatpush1.msra.mxu0 %v354
    %531 = vmatprep.subr.mxu0 0.0
    %532 = vmatpush1.msra.mxu0 0.0
    %533 = vmatprep.subr.mxu0 0.0
    %534 = vmatpush1.msra.mxu0 0.0
    %535 = vmatprep.subr.mxu0 0.0
    %536 = vmatpush1.msra.mxu0 0.0
    %537 = vmatprep.subr.mxu0 0.0
    %538 = vmatpush1.msra.mxu0 0.0
    %539 = vmatprep.subr.mxu0 0.0
    %540 = vmatpush1.msra.mxu0 0.0
    %541 = vmatprep.subr.mxu0 0.0
    %542 = vmatpush1.msra.mxu0 0.0
    %543 = vmatprep.subr.mxu0 0.0
    %544 = vmatpush1.msra.mxu0 0.0
    %545 = vmatprep.subr.mxu0 0.0
    %546 = vmatpush1.msra.mxu0 0.0
    %547 = vmatprep.subr.mxu0 0.0
    %548 = vmatpush1.msra.mxu0 0.0
    %549 = vmatprep.subr.mxu0 0.0
    %550 = vmatpush1.msra.mxu0 0.0
    %551 = vmatprep.subr.mxu0 0.0
    %552 = vmatpush1.msra.mxu0 0.0
    %553 = vmatprep.subr.mxu0 0.0
    %554 = vmatpush1.msra.mxu0 0.0
    %555 = vmatprep.subr.mxu0 0.0
    %556 = vmatpush1.msra.mxu0 0.0
    %557 = vmatprep.subr.mxu0 0.0
    %558 = vmatpush1.msra.mxu0 0.0
    %559 = vmatprep.subr.mxu0 0.0
    %560 = vmatpush1.msra.mxu0 0.0
    %561 = vmatprep.subr.mxu0 0.0
    %562 = vmatpush1.msra.mxu0 0.0
    %563 = vmatprep.subr.mxu0 0.0
    %564 = vmatpush1.msra.mxu0 0.0
    %565 = vmatprep.subr.mxu0 0.0
    %566 = vmatpush1.msra.mxu0 0.0
    %567 = vmatprep.subr.mxu0 0.0
    %568 = vmatpush1.msra.mxu0 0.0
    %569 = vmatprep.subr.mxu0 0.0
    %570 = vmatpush1.msra.mxu0 0.0
    %571 = vmatprep.subr.mxu0 0.0
    %572 = vmatpush1.msra.mxu0 0.0
    %573 = vmatprep.subr.mxu0 0.0
    %574 = vmatpush1.msra.mxu0 0.0
    %575 = vmatprep.subr.mxu0 0.0
    %576 = vmatpush1.msra.mxu0 0.0
    %577 = vmatprep.subr.mxu0 0.0
    %578 = vmatpush1.msra.mxu0 0.0
    %579 = vmatprep.subr.mxu0 0.0
    %580 = vmatpush1.msra.mxu0 0.0
    %581 = vmatprep.subr.mxu0 0.0
    %582 = vmatpush1.msra.mxu0 0.0
    %583 = vmatprep.subr.mxu0 0.0
    %584 = vmatpush1.msra.mxu0 0.0
    %585 = vmatprep.subr.mxu0 0.0
    %586 = vmatpush1.msra.mxu0 0.0
    %587 = vmatprep.mubr.f32.mxu0 0.0
    %588 = vmatmul.mubr.f32.gmra.mrb[0].mxu0 %v512
    %v589 = vpop.f32.mrb[0].mxu0
    %v590 = vadd.f32 0.0, %v589
    %v591 = vpop.f32.mrb[0].mxu0
    %592 = vmatprep.mubr.f32.mxu0 0.0
    %593 = vmatmul.mubr.f32.gmra.mrb[0].mxu0 %v515
    %v594 = vpop.f32.mrb[0].mxu0
    %v595 = vadd.f32 0.0, %v594
    %v596 = vpop.f32.mrb[0].mxu0
    %597 = vmatprep.mubr.f32.mxu0 0.0
    %598 = vmatmul.mubr.f32.gmra.mrb[0].mxu0 %v518
    %v599 = vpop.f32.mrb[0].mxu0
    %v600 = vadd.f32 0.0, %v599
    %v601 = vpop.f32.mrb[0].mxu0
    %602 = vmatprep.mubr.f32.mxu0 0.0
    %603 = vmatmul.mubr.f32.gmra.mrb[0].mxu0 %v521
    %v604 = vpop.f32.mrb[0].mxu0
    %v605 = vadd.f32 0.0, %v604
    %v606 = vpop.f32.mrb[0].mxu0
    %607 = vdwg.mxu0
    %v608 = vld [vmem:[%s9] sm:$0xff]
    %s609 = scalar_lea.vmem %s3, 32
    %v610 = vld [vmem:[%s609] sm:$0xff]
    %v611 = vld [vmem:[%s609 + $0x8] sm:$0xff]
    %v612 = vld [vmem:[%s609 + $0x10] sm:$0xff]
    %v613 = vld [vmem:[%s609 + $0x18] sm:$0xff]
    %s614 = scalar_lea.vmem %s4, 1
    %v615 = vld [vmem:[%s614] sm:$0x1]
    %v617 = vlaneseq
    %v618 = vshrl.u32 %v617, 7
    %v619 = vsub.s32 0, %v618
    %v620 = vrot.slane %v615, %v619
    %622 = vmatprep.subr.mxu0 0.0
    %623 = vmatpush1.msra.mxu0 %v610
    %624 = vmatprep.subr.mxu0 0.0
    %625 = vmatpush1.msra.mxu0 %v611
    %626 = vmatprep.subr.mxu0 0.0
    %627 = vmatpush1.msra.mxu0 %v612
    %628 = vmatprep.subr.mxu0 0.0
    %629 = vmatpush1.msra.mxu0 %v613
    %630 = vmatprep.subr.mxu0 0.0
    %631 = vmatpush1.msra.mxu0 0.0
    %632 = vmatprep.subr.mxu0 0.0
    %633 = vmatpush1.msra.mxu0 0.0
    %634 = vmatprep.subr.mxu0 0.0
    %635 = vmatpush1.msra.mxu0 0.0
    %636 = vmatprep.subr.mxu0 0.0
    %637 = vmatpush1.msra.mxu0 0.0
    %638 = vmatprep.subr.mxu0 0.0
    %639 = vmatpush1.msra.mxu0 0.0
    %640 = vmatprep.subr.mxu0 0.0
    %641 = vmatpush1.msra.mxu0 0.0
    %642 = vmatprep.subr.mxu0 0.0
    %643 = vmatpush1.msra.mxu0 0.0
    %644 = vmatprep.subr.mxu0 0.0
    %645 = vmatpush1.msra.mxu0 0.0
    %646 = vmatprep.subr.mxu0 0.0
    %647 = vmatpush1.msra.mxu0 0.0
    %648 = vmatprep.subr.mxu0 0.0
    %649 = vmatpush1.msra.mxu0 0.0
    %650 = vmatprep.subr.mxu0 0.0
    %651 = vmatpush1.msra.mxu0 0.0
    %652 = vmatprep.subr.mxu0 0.0
    %653 = vmatpush1.msra.mxu0 0.0
    %654 = vmatprep.subr.mxu0 0.0
    %655 = vmatpush1.msra.mxu0 0.0
    %656 = vmatprep.subr.mxu0 0.0
    %657 = vmatpush1.msra.mxu0 0.0
    %658 = vmatprep.subr.mxu0 0.0
    %659 = vmatpush1.msra.mxu0 0.0
    %660 = vmatprep.subr.mxu0 0.0
    %661 = vmatpush1.msra.mxu0 0.0
    %662 = vmatprep.subr.mxu0 0.0
    %663 = vmatpush1.msra.mxu0 0.0
    %664 = vmatprep.subr.mxu0 0.0
    %665 = vmatpush1.msra.mxu0 0.0
    %666 = vmatprep.subr.mxu0 0.0
    %667 = vmatpush1.msra.mxu0 0.0
    %668 = vmatprep.subr.mxu0 0.0
    %669 = vmatpush1.msra.mxu0 0.0
    %670 = vmatprep.subr.mxu0 0.0
    %671 = vmatpush1.msra.mxu0 0.0
    %672 = vmatprep.subr.mxu0 0.0
    %673 = vmatpush1.msra.mxu0 0.0
    %674 = vmatprep.subr.mxu0 0.0
    %675 = vmatpush1.msra.mxu0 0.0
    %676 = vmatprep.subr.mxu0 0.0
    %677 = vmatpush1.msra.mxu0 0.0
    %678 = vmatprep.subr.mxu0 0.0
    %679 = vmatpush1.msra.mxu0 0.0
    %680 = vmatprep.subr.mxu0 0.0
    %681 = vmatpush1.msra.mxu0 0.0
    %682 = vmatprep.subr.mxu0 0.0
    %683 = vmatpush1.msra.mxu0 0.0
    %684 = vmatprep.subr.mxu0 0.0
    %685 = vmatpush1.msra.mxu0 0.0
    %686 = vmatprep.mubr.f32.mxu0 0.0
    %687 = vmatmul.mubr.f32.gmra.mrb[0].mxu0 %v69
    %v688 = vpop.f32.mrb[0].mxu0
    %v689 = vadd.f32 %v620, %v688
    %v690 = vpop.f32.mrb[0].mxu0
    %691 = vmatprep.mubr.f32.mxu0 0.0
    %692 = vmatmul.mubr.f32.gmra.mrb[0].mxu0 %v72
    %v693 = vpop.f32.mrb[0].mxu0
    %v694 = vadd.f32 %v620, %v693
    %v695 = vpop.f32.mrb[0].mxu0
    %696 = vmatprep.mubr.f32.mxu0 0.0
    %697 = vmatmul.mubr.f32.gmra.mrb[0].mxu0 %v75
    %v698 = vpop.f32.mrb[0].mxu0
    %v699 = vadd.f32 %v620, %v698
    %v700 = vpop.f32.mrb[0].mxu0
    %701 = vmatprep.mubr.f32.mxu0 0.0
    %702 = vmatmul.mubr.f32.gmra.mrb[0].mxu0 %v78
    %v703 = vpop.f32.mrb[0].mxu0
    %v704 = vadd.f32 %v620, %v703
    %v705 = vpop.f32.mrb[0].mxu0
    %706 = vdwg.mxu0
    %s707 = scalar_lea.vmem %s5, 32
    %v708 = vld [vmem:[%s707] sm:$0xff]
    %v709 = vld [vmem:[%s707 + $0x8] sm:$0xff]
    %v710 = vld [vmem:[%s707 + $0x10] sm:$0xff]
    %v711 = vld [vmem:[%s707 + $0x18] sm:$0xff]
    %s712 = scalar_lea.vmem %s6, 1
    %v713 = vld [vmem:[%s712] sm:$0x1]
    %v715 = vlaneseq
    %v716 = vshrl.u32 %v715, 7
    %v717 = vsub.s32 0, %v716
    %v718 = vrot.slane %v713, %v717
    %720 = vmatprep.subr.mxu0 0.0
    %721 = vmatpush1.msra.mxu0 %v708
    %722 = vmatprep.subr.mxu0 0.0
    %723 = vmatpush1.msra.mxu0 %v709
    %724 = vmatprep.subr.mxu0 0.0
    %725 = vmatpush1.msra.mxu0 %v710
    %726 = vmatprep.subr.mxu0 0.0
    %727 = vmatpush1.msra.mxu0 %v711
    %728 = vmatprep.subr.mxu0 0.0
    %729 = vmatpush1.msra.mxu0 0.0
    %730 = vmatprep.subr.mxu0 0.0
    %731 = vmatpush1.msra.mxu0 0.0
    %732 = vmatprep.subr.mxu0 0.0
    %733 = vmatpush1.msra.mxu0 0.0
    %734 = vmatprep.subr.mxu0 0.0
    %735 = vmatpush1.msra.mxu0 0.0
    %736 = vmatprep.subr.mxu0 0.0
    %737 = vmatpush1.msra.mxu0 0.0
    %738 = vmatprep.subr.mxu0 0.0
    %739 = vmatpush1.msra.mxu0 0.0
    %740 = vmatprep.subr.mxu0 0.0
    %741 = vmatpush1.msra.mxu0 0.0
    %742 = vmatprep.subr.mxu0 0.0
    %743 = vmatpush1.msra.mxu0 0.0
    %744 = vmatprep.subr.mxu0 0.0
    %745 = vmatpush1.msra.mxu0 0.0
    %746 = vmatprep.subr.mxu0 0.0
    %747 = vmatpush1.msra.mxu0 0.0
    %748 = vmatprep.subr.mxu0 0.0
    %749 = vmatpush1.msra.mxu0 0.0
    %750 = vmatprep.subr.mxu0 0.0
    %751 = vmatpush1.msra.mxu0 0.0
    %752 = vmatprep.subr.mxu0 0.0
    %753 = vmatpush1.msra.mxu0 0.0
    %754 = vmatprep.subr.mxu0 0.0
    %755 = vmatpush1.msra.mxu0 0.0
    %756 = vmatprep.subr.mxu0 0.0
    %757 = vmatpush1.msra.mxu0 0.0
    %758 = vmatprep.subr.mxu0 0.0
    %759 = vmatpush1.msra.mxu0 0.0
    %760 = vmatprep.subr.mxu0 0.0
    %761 = vmatpush1.msra.mxu0 0.0
    %762 = vmatprep.subr.mxu0 0.0
    %763 = vmatpush1.msra.mxu0 0.0
    %764 = vmatprep.subr.mxu0 0.0
    %765 = vmatpush1.msra.mxu0 0.0
    %766 = vmatprep.subr.mxu0 0.0
    %767 = vmatpush1.msra.mxu0 0.0
    %768 = vmatprep.subr.mxu0 0.0
    %769 = vmatpush1.msra.mxu0 0.0
    %770 = vmatprep.subr.mxu0 0.0
    %771 = vmatpush1.msra.mxu0 0.0
    %772 = vmatprep.subr.mxu0 0.0
    %773 = vmatpush1.msra.mxu0 0.0
    %774 = vmatprep.subr.mxu0 0.0
    %775 = vmatpush1.msra.mxu0 0.0
    %776 = vmatprep.subr.mxu0 0.0
    %777 = vmatpush1.msra.mxu0 0.0
    %778 = vmatprep.subr.mxu0 0.0
    %779 = vmatpush1.msra.mxu0 0.0
    %780 = vmatprep.subr.mxu0 0.0
    %781 = vmatpush1.msra.mxu0 0.0
    %782 = vmatprep.subr.mxu0 0.0
    %783 = vmatpush1.msra.mxu0 0.0
    %784 = vmatprep.mubr.f32.mxu0 0.0
    %785 = vmatmul.mubr.f32.gmra.mrb[0].mxu0 %v69
    %v786 = vpop.f32.mrb[0].mxu0
    %v787 = vadd.f32 %v718, %v786
    %v788 = vpop.f32.mrb[0].mxu0
    %789 = vmatprep.mubr.f32.mxu0 0.0
    %790 = vmatmul.mubr.f32.gmra.mrb[0].mxu0 %v72
    %v791 = vpop.f32.mrb[0].mxu0
    %v792 = vadd.f32 %v718, %v791
    %v793 = vpop.f32.mrb[0].mxu0
    %794 = vmatprep.mubr.f32.mxu0 0.0
    %795 = vmatmul.mubr.f32.gmra.mrb[0].mxu0 %v75
    %v796 = vpop.f32.mrb[0].mxu0
    %v797 = vadd.f32 %v718, %v796
    %v798 = vpop.f32.mrb[0].mxu0
    %799 = vmatprep.mubr.f32.mxu0 0.0
    %800 = vmatmul.mubr.f32.gmra.mrb[0].mxu0 %v78
    %v801 = vpop.f32.mrb[0].mxu0
    %v802 = vadd.f32 %v718, %v801
    %v803 = vpop.f32.mrb[0].mxu0
    %804 = vdwg.mxu0
    %s805 = scalar_lea.vmem %s7, 32
    %v806 = vld [vmem:[%s805] sm:$0xff]
    %v807 = vld [vmem:[%s805 + $0x8] sm:$0xff]
    %v808 = vld [vmem:[%s805 + $0x10] sm:$0xff]
    %v809 = vld [vmem:[%s805 + $0x18] sm:$0xff]
    %s810 = scalar_lea.vmem %s8, 1
    %v811 = vld [vmem:[%s810] sm:$0x1]
    %v813 = vlaneseq
    %v814 = vshrl.u32 %v813, 7
    %v815 = vsub.s32 0, %v814
    %v816 = vrot.slane %v811, %v815
    %818 = vmatprep.subr.mxu0 0.0
    %819 = vmatpush1.msra.mxu0 %v806
    %820 = vmatprep.subr.mxu0 0.0
    %821 = vmatpush1.msra.mxu0 %v807
    %822 = vmatprep.subr.mxu0 0.0
    %823 = vmatpush1.msra.mxu0 %v808
    %824 = vmatprep.subr.mxu0 0.0
    %825 = vmatpush1.msra.mxu0 %v809
    %826 = vmatprep.subr.mxu0 0.0
    %827 = vmatpush1.msra.mxu0 0.0
    %828 = vmatprep.subr.mxu0 0.0
    %829 = vmatpush1.msra.mxu0 0.0
    %830 = vmatprep.subr.mxu0 0.0
    %831 = vmatpush1.msra.mxu0 0.0
    %832 = vmatprep.subr.mxu0 0.0
    %833 = vmatpush1.msra.mxu0 0.0
    %834 = vmatprep.subr.mxu0 0.0
    %835 = vmatpush1.msra.mxu0 0.0
    %836 = vmatprep.subr.mxu0 0.0
    %837 = vmatpush1.msra.mxu0 0.0
    %838 = vmatprep.subr.mxu0 0.0
    %839 = vmatpush1.msra.mxu0 0.0
    %840 = vmatprep.subr.mxu0 0.0
    %841 = vmatpush1.msra.mxu0 0.0
    %842 = vmatprep.subr.mxu0 0.0
    %843 = vmatpush1.msra.mxu0 0.0
    %844 = vmatprep.subr.mxu0 0.0
    %845 = vmatpush1.msra.mxu0 0.0
    %846 = vmatprep.subr.mxu0 0.0
    %847 = vmatpush1.msra.mxu0 0.0
    %848 = vmatprep.subr.mxu0 0.0
    %849 = vmatpush1.msra.mxu0 0.0
    %850 = vmatprep.subr.mxu0 0.0
    %851 = vmatpush1.msra.mxu0 0.0
    %852 = vmatprep.subr.mxu0 0.0
    %853 = vmatpush1.msra.mxu0 0.0
    %854 = vmatprep.subr.mxu0 0.0
    %855 = vmatpush1.msra.mxu0 0.0
    %856 = vmatprep.subr.mxu0 0.0
    %857 = vmatpush1.msra.mxu0 0.0
    %858 = vmatprep.subr.mxu0 0.0
    %859 = vmatpush1.msra.mxu0 0.0
    %860 = vmatprep.subr.mxu0 0.0
    %861 = vmatpush1.msra.mxu0 0.0
    %862 = vmatprep.subr.mxu0 0.0
    %863 = vmatpush1.msra.mxu0 0.0
    %864 = vmatprep.subr.mxu0 0.0
    %865 = vmatpush1.msra.mxu0 0.0
    %866 = vmatprep.subr.mxu0 0.0
    %867 = vmatpush1.msra.mxu0 0.0
    %868 = vmatprep.subr.mxu0 0.0
    %869 = vmatpush1.msra.mxu0 0.0
    %870 = vmatprep.subr.mxu0 0.0
    %871 = vmatpush1.msra.mxu0 0.0
    %872 = vmatprep.subr.mxu0 0.0
    %873 = vmatpush1.msra.mxu0 0.0
    %874 = vmatprep.subr.mxu0 0.0
    %875 = vmatpush1.msra.mxu0 0.0
    %876 = vmatprep.subr.mxu0 0.0
    %877 = vmatpush1.msra.mxu0 0.0
    %878 = vmatprep.subr.mxu0 0.0
    %879 = vmatpush1.msra.mxu0 0.0
    %880 = vmatprep.subr.mxu0 0.0
    %881 = vmatpush1.msra.mxu0 0.0
    %882 = vmatprep.mubr.f32.mxu0 0.0
    %883 = vmatmul.mubr.f32.gmra.mrb[0].mxu0 %v69
    %v884 = vpop.f32.mrb[0].mxu0
    %v885 = vadd.f32 %v816, %v884
    %v886 = vpop.f32.mrb[0].mxu0
    %887 = vmatprep.mubr.f32.mxu0 0.0
    %888 = vmatmul.mubr.f32.gmra.mrb[0].mxu0 %v72
    %v889 = vpop.f32.mrb[0].mxu0
    %v890 = vadd.f32 %v816, %v889
    %v891 = vpop.f32.mrb[0].mxu0
    %892 = vmatprep.mubr.f32.mxu0 0.0
    %893 = vmatmul.mubr.f32.gmra.mrb[0].mxu0 %v75
    %v894 = vpop.f32.mrb[0].mxu0
    %v895 = vadd.f32 %v816, %v894
    %v896 = vpop.f32.mrb[0].mxu0
    %897 = vmatprep.mubr.f32.mxu0 0.0
    %898 = vmatmul.mubr.f32.gmra.mrb[0].mxu0 %v78
    %v899 = vpop.f32.mrb[0].mxu0
    %v900 = vadd.f32 %v816, %v899
    %v901 = vpop.f32.mrb[0].mxu0
    %902 = vdwg.mxu0
    %v904 = vsel %vm357, %v689, 0
    %v907 = vsel %vm357, %v694, 0
    %v910 = vsel %vm357, %v699, 0
    %v913 = vsel %vm357, %v704, 0
    %v916 = vsel %vm357, %v787, 0
    %v919 = vsel %vm357, %v792, 0
    %v922 = vsel %vm357, %v797, 0
    %v925 = vsel %vm357, %v802, 0
    %927 = vmatprep.subr.mxu0 0.0
    %928 = vmatpush1.xpose.msra.mxu0 %v916
    %929 = vmatprep.subr.mxu0 0.0
    %930 = vmatpush1.xpose.msra.mxu0 %v919
    %931 = vmatprep.subr.mxu0 0.0
    %932 = vmatpush1.xpose.msra.mxu0 %v922
    %933 = vmatprep.subr.mxu0 0.0
    %934 = vmatpush1.xpose.msra.mxu0 %v925
    %935 = vmatprep.subr.mxu0 0.0
    %936 = vmatpush1.xpose.msra.mxu0 0.0
    %937 = vmatprep.subr.mxu0 0.0
    %938 = vmatpush1.xpose.msra.mxu0 0.0
    %939 = vmatprep.subr.mxu0 0.0
    %940 = vmatpush1.xpose.msra.mxu0 0.0
    %941 = vmatprep.subr.mxu0 0.0
    %942 = vmatpush1.xpose.msra.mxu0 0.0
    %943 = vmatprep.subr.mxu0 0.0
    %944 = vmatpush1.xpose.msra.mxu0 0.0
    %945 = vmatprep.subr.mxu0 0.0
    %946 = vmatpush1.xpose.msra.mxu0 0.0
    %947 = vmatprep.subr.mxu0 0.0
    %948 = vmatpush1.xpose.msra.mxu0 0.0
    %949 = vmatprep.subr.mxu0 0.0
    %950 = vmatpush1.xpose.msra.mxu0 0.0
    %951 = vmatprep.subr.mxu0 0.0
    %952 = vmatpush1.xpose.msra.mxu0 0.0
    %953 = vmatprep.subr.mxu0 0.0
    %954 = vmatpush1.xpose.msra.mxu0 0.0
    %955 = vmatprep.subr.mxu0 0.0
    %956 = vmatpush1.xpose.msra.mxu0 0.0
    %957 = vmatprep.subr.mxu0 0.0
    %958 = vmatpush1.xpose.msra.mxu0 0.0
    %959 = vmatprep.subr.mxu0 0.0
    %960 = vmatpush1.xpose.msra.mxu0 0.0
    %961 = vmatprep.subr.mxu0 0.0
    %962 = vmatpush1.xpose.msra.mxu0 0.0
    %963 = vmatprep.subr.mxu0 0.0
    %964 = vmatpush1.xpose.msra.mxu0 0.0
    %965 = vmatprep.subr.mxu0 0.0
    %966 = vmatpush1.xpose.msra.mxu0 0.0
    %967 = vmatprep.subr.mxu0 0.0
    %968 = vmatpush1.xpose.msra.mxu0 0.0
    %969 = vmatprep.subr.mxu0 0.0
    %970 = vmatpush1.xpose.msra.mxu0 0.0
    %971 = vmatprep.subr.mxu0 0.0
    %972 = vmatpush1.xpose.msra.mxu0 0.0
    %973 = vmatprep.subr.mxu0 0.0
    %974 = vmatpush1.xpose.msra.mxu0 0.0
    %975 = vmatprep.subr.mxu0 0.0
    %976 = vmatpush1.xpose.msra.mxu0 0.0
    %977 = vmatprep.subr.mxu0 0.0
    %978 = vmatpush1.xpose.msra.mxu0 0.0
    %979 = vmatprep.subr.mxu0 0.0
    %980 = vmatpush1.xpose.msra.mxu0 0.0
    %981 = vmatprep.subr.mxu0 0.0
    %982 = vmatpush1.xpose.msra.mxu0 0.0
    %983 = vmatprep.subr.mxu0 0.0
    %984 = vmatpush1.xpose.msra.mxu0 0.0
    %985 = vmatprep.subr.mxu0 0.0
    %986 = vmatpush1.xpose.msra.mxu0 0.0
    %987 = vmatprep.subr.mxu0 0.0
    %988 = vmatpush1.xpose.msra.mxu0 0.0
    %989 = vmatprep.subr.mxu0 0.0
    %990 = vmatpush1.xpose.msra.mxu0 0.0
    %991 = vmatprep.mubr.f32.mxu0 0.0
    %992 = vmatmul.mubr.f32.gmra.mrb[0].mxu0 %v904
    %v993 = vpop.f32.mrb[0].mxu0
    %v994 = vadd.f32 %v52, %v993
    %v995 = vpop.f32.mrb[0].mxu0
    %996 = vmatprep.mubr.f32.mxu0 0.0
    %997 = vmatmul.mubr.f32.gmra.mrb[0].mxu0 %v907
    %v998 = vpop.f32.mrb[0].mxu0
    %v999 = vadd.f32 %v53, %v998
    %v1000 = vpop.f32.mrb[0].mxu0
    %1001 = vmatprep.mubr.f32.mxu0 0.0
    %1002 = vmatmul.mubr.f32.gmra.mrb[0].mxu0 %v910
    %v1003 = vpop.f32.mrb[0].mxu0
    %v1004 = vadd.f32 %v54, %v1003
    %v1005 = vpop.f32.mrb[0].mxu0
    %1006 = vmatprep.mubr.f32.mxu0 0.0
    %1007 = vmatmul.mubr.f32.gmra.mrb[0].mxu0 %v913
    %v1008 = vpop.f32.mrb[0].mxu0
    %v1009 = vadd.f32 %v55, %v1008
    %v1010 = vpop.f32.mrb[0].mxu0
    %1011 = vdwg.mxu0
    %v1012 = vsel %vm67, %v994, -inf
    %1013 = vmax.xlane.f32.xlu0 %v1012
    %v1014 = vpop.xlane.xlu0 %1013
    %v1015 = vsel %vm67, %v999, -inf
    %1016 = vmax.xlane.f32.xlu0 %v1015
    %v1017 = vpop.xlane.xlu0 %1016
    %v1018 = vsel %vm67, %v1004, -inf
    %1019 = vmax.xlane.f32.xlu0 %v1018
    %v1020 = vpop.xlane.xlu0 %1019
    %v1021 = vsel %vm67, %v1009, -inf
    %1022 = vmax.xlane.f32.xlu0 %v1021
    %v1023 = vpop.xlane.xlu0 %1022
    %v1024 = vsub.f32 %v994, %v1014
    %v1025 = vsub.f32 %v999, %v1017
    %v1026 = vsub.f32 %v1004, %v1020
    %v1027 = vsub.f32 %v1009, %v1023
    %v1028 = vmul.f32 %v1024, 1.442695
    %v1029 = vpow.pop %v1028
    %v1030 = vmul.f32 %v1025, 1.442695
    %v1031 = vpow.pop %v1030
    %v1032 = vmul.f32 %v1026, 1.442695
    %v1033 = vpow.pop %v1032
    %v1034 = vmul.f32 %v1027, 1.442695
    %v1035 = vpow.pop %v1034
    %v1036 = vsel %vm67, %v1029, 0.0
    %1037 = vadd.xlane.f32.xlu0 %v1036
    %v1038 = vpop.xlane.xlu0 %1037
    %v1039 = vsel %vm67, %v1031, 0.0
    %1040 = vadd.xlane.f32.xlu0 %v1039
    %v1041 = vpop.xlane.xlu0 %1040
    %v1042 = vsel %vm67, %v1033, 0.0
    %1043 = vadd.xlane.f32.xlu0 %v1042
    %v1044 = vpop.xlane.xlu0 %1043
    %v1045 = vsel %vm67, %v1035, 0.0
    %1046 = vadd.xlane.f32.xlu0 %v1045
    %v1047 = vpop.xlane.xlu0 %1046
    %v1048 = vrcp.pop %v1038
    %v1049 = vrcp.pop %v1041
    %v1050 = vrcp.pop %v1044
    %v1051 = vrcp.pop %v1047
    %v1052 = vmul.f32 %v1029, %v1048
    %v1053 = vmul.f32 %v1031, %v1049
    %v1054 = vmul.f32 %v1033, %v1050
    %v1055 = vmul.f32 %v1035, %v1051
    %v1057 = vsel %vm67, %v1052, 0
    %v1060 = vsel %vm67, %v1053, 0
    %v1063 = vsel %vm67, %v1054, 0
    %v1066 = vsel %vm67, %v1055, 0
    %1068 = vmatprep.subr.mxu0 0.0
    %1069 = vmatpush1.msra.mxu0 %v885
    %1070 = vmatprep.subr.mxu0 0.0
    %1071 = vmatpush1.msra.mxu0 %v890
    %1072 = vmatprep.subr.mxu0 0.0
    %1073 = vmatpush1.msra.mxu0 %v895
    %1074 = vmatprep.subr.mxu0 0.0
    %1075 = vmatpush1.msra.mxu0 %v900
    %1076 = vmatprep.subr.mxu0 0.0
    %1077 = vmatpush1.msra.mxu0 0.0
    %1078 = vmatprep.subr.mxu0 0.0
    %1079 = vmatpush1.msra.mxu0 0.0
    %1080 = vmatprep.subr.mxu0 0.0
    %1081 = vmatpush1.msra.mxu0 0.0
    %1082 = vmatprep.subr.mxu0 0.0
    %1083 = vmatpush1.msra.mxu0 0.0
    %1084 = vmatprep.subr.mxu0 0.0
    %1085 = vmatpush1.msra.mxu0 0.0
    %1086 = vmatprep.subr.mxu0 0.0
    %1087 = vmatpush1.msra.mxu0 0.0
    %1088 = vmatprep.subr.mxu0 0.0
    %1089 = vmatpush1.msra.mxu0 0.0
    %1090 = vmatprep.subr.mxu0 0.0
    %1091 = vmatpush1.msra.mxu0 0.0
    %1092 = vmatprep.subr.mxu0 0.0
    %1093 = vmatpush1.msra.mxu0 0.0
    %1094 = vmatprep.subr.mxu0 0.0
    %1095 = vmatpush1.msra.mxu0 0.0
    %1096 = vmatprep.subr.mxu0 0.0
    %1097 = vmatpush1.msra.mxu0 0.0
    %1098 = vmatprep.subr.mxu0 0.0
    %1099 = vmatpush1.msra.mxu0 0.0
    %1100 = vmatprep.subr.mxu0 0.0
    %1101 = vmatpush1.msra.mxu0 0.0
    %1102 = vmatprep.subr.mxu0 0.0
    %1103 = vmatpush1.msra.mxu0 0.0
    %1104 = vmatprep.subr.mxu0 0.0
    %1105 = vmatpush1.msra.mxu0 0.0
    %1106 = vmatprep.subr.mxu0 0.0
    %1107 = vmatpush1.msra.mxu0 0.0
    %1108 = vmatprep.subr.mxu0 0.0
    %1109 = vmatpush1.msra.mxu0 0.0
    %1110 = vmatprep.subr.mxu0 0.0
    %1111 = vmatpush1.msra.mxu0 0.0
    %1112 = vmatprep.subr.mxu0 0.0
    %1113 = vmatpush1.msra.mxu0 0.0
    %1114 = vmatprep.subr.mxu0 0.0
    %1115 = vmatpush1.msra.mxu0 0.0
    %1116 = vmatprep.subr.mxu0 0.0
    %1117 = vmatpush1.msra.mxu0 0.0
    %1118 = vmatprep.subr.mxu0 0.0
    %1119 = vmatpush1.msra.mxu0 0.0
    %1120 = vmatprep.subr.mxu0 0.0
    %1121 = vmatpush1.msra.mxu0 0.0
    %1122 = vmatprep.subr.mxu0 0.0
    %1123 = vmatpush1.msra.mxu0 0.0
    %1124 = vmatprep.subr.mxu0 0.0
    %1125 = vmatpush1.msra.mxu0 0.0
    %1126 = vmatprep.subr.mxu0 0.0
    %1127 = vmatpush1.msra.mxu0 0.0
    %1128 = vmatprep.subr.mxu0 0.0
    %1129 = vmatpush1.msra.mxu0 0.0
    %1130 = vmatprep.subr.mxu0 0.0
    %1131 = vmatpush1.msra.mxu0 0.0
    %1132 = vmatprep.mubr.f32.mxu0 0.0
    %1133 = vmatmul.mubr.f32.gmra.mrb[0].mxu0 %v1057
    %v1134 = vpop.f32.mrb[0].mxu0
    %v1135 = vadd.f32 0.0, %v1134
    %v1136 = vpop.f32.mrb[0].mxu0
    %1137 = vmatprep.mubr.f32.mxu0 0.0
    %1138 = vmatmul.mubr.f32.gmra.mrb[0].mxu0 %v1060
    %v1139 = vpop.f32.mrb[0].mxu0
    %v1140 = vadd.f32 0.0, %v1139
    %v1141 = vpop.f32.mrb[0].mxu0
    %1142 = vmatprep.mubr.f32.mxu0 0.0
    %1143 = vmatmul.mubr.f32.gmra.mrb[0].mxu0 %v1063
    %v1144 = vpop.f32.mrb[0].mxu0
    %v1145 = vadd.f32 0.0, %v1144
    %v1146 = vpop.f32.mrb[0].mxu0
    %1147 = vmatprep.mubr.f32.mxu0 0.0
    %1148 = vmatmul.mubr.f32.gmra.mrb[0].mxu0 %v1066
    %v1149 = vpop.f32.mrb[0].mxu0
    %v1150 = vadd.f32 0.0, %v1149
    %v1151 = vpop.f32.mrb[0].mxu0
    %1152 = vdwg.mxu0
    %s1153 = scalar_lea.vmem %s9, 8
    %v1154 = vld [vmem:[%s1153] sm:$0xff]
    %v1156 = vsel %vm357, %v1135, 0
    %v1159 = vsel %vm357, %v1140, 0
    %v1162 = vsel %vm357, %v1145, 0
    %v1165 = vsel %vm357, %v1150, 0
    %1167 = vmatprep.subr.mxu0 0.0
    %1168 = vmatpush1.msra.mxu0 %v1154
    %1169 = vmatprep.subr.mxu0 0.0
    %1170 = vmatpush1.msra.mxu0 0.0
    %1171 = vmatprep.subr.mxu0 0.0
    %1172 = vmatpush1.msra.mxu0 0.0
    %1173 = vmatprep.subr.mxu0 0.0
    %1174 = vmatpush1.msra.mxu0 0.0
    %1175 = vmatprep.subr.mxu0 0.0
    %1176 = vmatpush1.msra.mxu0 0.0
    %1177 = vmatprep.subr.mxu0 0.0
    %1178 = vmatpush1.msra.mxu0 0.0
    %1179 = vmatprep.subr.mxu0 0.0
    %1180 = vmatpush1.msra.mxu0 0.0
    %1181 = vmatprep.subr.mxu0 0.0
    %1182 = vmatpush1.msra.mxu0 0.0
    %1183 = vmatprep.subr.mxu0 0.0
    %1184 = vmatpush1.msra.mxu0 0.0
    %1185 = vmatprep.subr.mxu0 0.0
    %1186 = vmatpush1.msra.mxu0 0.0
    %1187 = vmatprep.subr.mxu0 0.0
    %1188 = vmatpush1.msra.mxu0 0.0
    %1189 = vmatprep.subr.mxu0 0.0
    %1190 = vmatpush1.msra.mxu0 0.0
    %1191 = vmatprep.subr.mxu0 0.0
    %1192 = vmatpush1.msra.mxu0 0.0
    %1193 = vmatprep.subr.mxu0 0.0
    %1194 = vmatpush1.msra.mxu0 0.0
    %1195 = vmatprep.subr.mxu0 0.0
    %1196 = vmatpush1.msra.mxu0 0.0
    %1197 = vmatprep.subr.mxu0 0.0
    %1198 = vmatpush1.msra.mxu0 0.0
    %1199 = vmatprep.subr.mxu0 0.0
    %1200 = vmatpush1.msra.mxu0 0.0
    %1201 = vmatprep.subr.mxu0 0.0
    %1202 = vmatpush1.msra.mxu0 0.0
    %1203 = vmatprep.subr.mxu0 0.0
    %1204 = vmatpush1.msra.mxu0 0.0
    %1205 = vmatprep.subr.mxu0 0.0
    %1206 = vmatpush1.msra.mxu0 0.0
    %1207 = vmatprep.subr.mxu0 0.0
    %1208 = vmatpush1.msra.mxu0 0.0
    %1209 = vmatprep.subr.mxu0 0.0
    %1210 = vmatpush1.msra.mxu0 0.0
    %1211 = vmatprep.subr.mxu0 0.0
    %1212 = vmatpush1.msra.mxu0 0.0
    %1213 = vmatprep.subr.mxu0 0.0
    %1214 = vmatpush1.msra.mxu0 0.0
    %1215 = vmatprep.subr.mxu0 0.0
    %1216 = vmatpush1.msra.mxu0 0.0
    %1217 = vmatprep.subr.mxu0 0.0
    %1218 = vmatpush1.msra.mxu0 0.0
    %1219 = vmatprep.subr.mxu0 0.0
    %1220 = vmatpush1.msra.mxu0 0.0
    %1221 = vmatprep.subr.mxu0 0.0
    %1222 = vmatpush1.msra.mxu0 0.0
    %1223 = vmatprep.subr.mxu0 0.0
    %1224 = vmatpush1.msra.mxu0 0.0
    %1225 = vmatprep.subr.mxu0 0.0
    %1226 = vmatpush1.msra.mxu0 0.0
    %1227 = vmatprep.subr.mxu0 0.0
    %1228 = vmatpush1.msra.mxu0 0.0
    %1229 = vmatprep.subr.mxu0 0.0
    %1230 = vmatpush1.msra.mxu0 0.0
    %1231 = vmatprep.mubr.f32.mxu0 0.0
    %1232 = vmatmul.mubr.f32.gmra.mrb[0].mxu0 %v1156
    %v1233 = vpop.f32.mrb[0].mxu0
    %v1234 = vadd.f32 0.0, %v1233
    %v1235 = vpop.f32.mrb[0].mxu0
    %1236 = vmatprep.mubr.f32.mxu0 0.0
    %1237 = vmatmul.mubr.f32.gmra.mrb[0].mxu0 %v1159
    %v1238 = vpop.f32.mrb[0].mxu0
    %v1239 = vadd.f32 0.0, %v1238
    %v1240 = vpop.f32.mrb[0].mxu0
    %1241 = vmatprep.mubr.f32.mxu0 0.0
    %1242 = vmatmul.mubr.f32.gmra.mrb[0].mxu0 %v1162
    %v1243 = vpop.f32.mrb[0].mxu0
    %v1244 = vadd.f32 0.0, %v1243
    %v1245 = vpop.f32.mrb[0].mxu0
    %1246 = vmatprep.mubr.f32.mxu0 0.0
    %1247 = vmatmul.mubr.f32.gmra.mrb[0].mxu0 %v1165
    %v1248 = vpop.f32.mrb[0].mxu0
    %v1249 = vadd.f32 0.0, %v1248
    %v1250 = vpop.f32.mrb[0].mxu0
    %1251 = vdwg.mxu0
    %v1253 = vsel %vm357, %v590, 0
    %v1256 = vsel %vm357, %v595, 0
    %v1259 = vsel %vm357, %v600, 0
    %v1262 = vsel %vm357, %v605, 0
    %1264 = vmatprep.subr.mxu0 0.0
    %1265 = vmatpush1.msra.mxu0 %v608
    %1266 = vmatprep.subr.mxu0 0.0
    %1267 = vmatpush1.msra.mxu0 0.0
    %1268 = vmatprep.subr.mxu0 0.0
    %1269 = vmatpush1.msra.mxu0 0.0
    %1270 = vmatprep.subr.mxu0 0.0
    %1271 = vmatpush1.msra.mxu0 0.0
    %1272 = vmatprep.subr.mxu0 0.0
    %1273 = vmatpush1.msra.mxu0 0.0
    %1274 = vmatprep.subr.mxu0 0.0
    %1275 = vmatpush1.msra.mxu0 0.0
    %1276 = vmatprep.subr.mxu0 0.0
    %1277 = vmatpush1.msra.mxu0 0.0
    %1278 = vmatprep.subr.mxu0 0.0
    %1279 = vmatpush1.msra.mxu0 0.0
    %1280 = vmatprep.subr.mxu0 0.0
    %1281 = vmatpush1.msra.mxu0 0.0
    %1282 = vmatprep.subr.mxu0 0.0
    %1283 = vmatpush1.msra.mxu0 0.0
    %1284 = vmatprep.subr.mxu0 0.0
    %1285 = vmatpush1.msra.mxu0 0.0
    %1286 = vmatprep.subr.mxu0 0.0
    %1287 = vmatpush1.msra.mxu0 0.0
    %1288 = vmatprep.subr.mxu0 0.0
    %1289 = vmatpush1.msra.mxu0 0.0
    %1290 = vmatprep.subr.mxu0 0.0
    %1291 = vmatpush1.msra.mxu0 0.0
    %1292 = vmatprep.subr.mxu0 0.0
    %1293 = vmatpush1.msra.mxu0 0.0
    %1294 = vmatprep.subr.mxu0 0.0
    %1295 = vmatpush1.msra.mxu0 0.0
    %1296 = vmatprep.subr.mxu0 0.0
    %1297 = vmatpush1.msra.mxu0 0.0
    %1298 = vmatprep.subr.mxu0 0.0
    %1299 = vmatpush1.msra.mxu0 0.0
    %1300 = vmatprep.subr.mxu0 0.0
    %1301 = vmatpush1.msra.mxu0 0.0
    %1302 = vmatprep.subr.mxu0 0.0
    %1303 = vmatpush1.msra.mxu0 0.0
    %1304 = vmatprep.subr.mxu0 0.0
    %1305 = vmatpush1.msra.mxu0 0.0
    %1306 = vmatprep.subr.mxu0 0.0
    %1307 = vmatpush1.msra.mxu0 0.0
    %1308 = vmatprep.subr.mxu0 0.0
    %1309 = vmatpush1.msra.mxu0 0.0
    %1310 = vmatprep.subr.mxu0 0.0
    %1311 = vmatpush1.msra.mxu0 0.0
    %1312 = vmatprep.subr.mxu0 0.0
    %1313 = vmatpush1.msra.mxu0 0.0
    %1314 = vmatprep.subr.mxu0 0.0
    %1315 = vmatpush1.msra.mxu0 0.0
    %1316 = vmatprep.subr.mxu0 0.0
    %1317 = vmatpush1.msra.mxu0 0.0
    %1318 = vmatprep.subr.mxu0 0.0
    %1319 = vmatpush1.msra.mxu0 0.0
    %1320 = vmatprep.subr.mxu0 0.0
    %1321 = vmatpush1.msra.mxu0 0.0
    %1322 = vmatprep.subr.mxu0 0.0
    %1323 = vmatpush1.msra.mxu0 0.0
    %1324 = vmatprep.subr.mxu0 0.0
    %1325 = vmatpush1.msra.mxu0 0.0
    %1326 = vmatprep.subr.mxu0 0.0
    %1327 = vmatpush1.msra.mxu0 0.0
    %1328 = vmatprep.mubr.f32.mxu0 0.0
    %1329 = vmatmul.mubr.f32.gmra.mrb[0].mxu0 %v1253
    %v1330 = vpop.f32.mrb[0].mxu0
    %v1331 = vadd.f32 %v1234, %v1330
    %v1332 = vpop.f32.mrb[0].mxu0
    %1333 = vmatprep.mubr.f32.mxu0 0.0
    %1334 = vmatmul.mubr.f32.gmra.mrb[0].mxu0 %v1256
    %v1335 = vpop.f32.mrb[0].mxu0
    %v1336 = vadd.f32 %v1239, %v1335
    %v1337 = vpop.f32.mrb[0].mxu0
    %1338 = vmatprep.mubr.f32.mxu0 0.0
    %1339 = vmatmul.mubr.f32.gmra.mrb[0].mxu0 %v1259
    %v1340 = vpop.f32.mrb[0].mxu0
    %v1341 = vadd.f32 %v1244, %v1340
    %v1342 = vpop.f32.mrb[0].mxu0
    %1343 = vmatprep.mubr.f32.mxu0 0.0
    %1344 = vmatmul.mubr.f32.gmra.mrb[0].mxu0 %v1262
    %v1345 = vpop.f32.mrb[0].mxu0
    %v1346 = vadd.f32 %v1249, %v1345
    %v1347 = vpop.f32.mrb[0].mxu0
    %1348 = vdwg.mxu0
    %s1349 = scalar_lea.vmem %s3, 64
    %v1350 = vld [vmem:[%s1349] sm:$0xff]
    %v1351 = vld [vmem:[%s1349 + $0x8] sm:$0xff]
    %v1352 = vld [vmem:[%s1349 + $0x10] sm:$0xff]
    %v1353 = vld [vmem:[%s1349 + $0x18] sm:$0xff]
    %s1354 = scalar_lea.vmem %s4, 2
    %v1355 = vld [vmem:[%s1354] sm:$0x1]
    %v1357 = vlaneseq
    %v1358 = vshrl.u32 %v1357, 7
    %v1359 = vsub.s32 0, %v1358
    %v1360 = vrot.slane %v1355, %v1359
    %1362 = vmatprep.subr.mxu0 0.0
    %1363 = vmatpush1.msra.mxu0 %v1350
    %1364 = vmatprep.subr.mxu0 0.0
    %1365 = vmatpush1.msra.mxu0 %v1351
    %1366 = vmatprep.subr.mxu0 0.0
    %1367 = vmatpush1.msra.mxu0 %v1352
    %1368 = vmatprep.subr.mxu0 0.0
    %1369 = vmatpush1.msra.mxu0 %v1353
    %1370 = vmatprep.subr.mxu0 0.0
    %1371 = vmatpush1.msra.mxu0 0.0
    %1372 = vmatprep.subr.mxu0 0.0
    %1373 = vmatpush1.msra.mxu0 0.0
    %1374 = vmatprep.subr.mxu0 0.0
    %1375 = vmatpush1.msra.mxu0 0.0
    %1376 = vmatprep.subr.mxu0 0.0
    %1377 = vmatpush1.msra.mxu0 0.0
    %1378 = vmatprep.subr.mxu0 0.0
    %1379 = vmatpush1.msra.mxu0 0.0
    %1380 = vmatprep.subr.mxu0 0.0
    %1381 = vmatpush1.msra.mxu0 0.0
    %1382 = vmatprep.subr.mxu0 0.0
    %1383 = vmatpush1.msra.mxu0 0.0
    %1384 = vmatprep.subr.mxu0 0.0
    %1385 = vmatpush1.msra.mxu0 0.0
    %1386 = vmatprep.subr.mxu0 0.0
    %1387 = vmatpush1.msra.mxu0 0.0
    %1388 = vmatprep.subr.mxu0 0.0
    %1389 = vmatpush1.msra.mxu0 0.0
    %1390 = vmatprep.subr.mxu0 0.0
    %1391 = vmatpush1.msra.mxu0 0.0
    %1392 = vmatprep.subr.mxu0 0.0
    %1393 = vmatpush1.msra.mxu0 0.0
    %1394 = vmatprep.subr.mxu0 0.0
    %1395 = vmatpush1.msra.mxu0 0.0
    %1396 = vmatprep.subr.mxu0 0.0
    %1397 = vmatpush1.msra.mxu0 0.0
    %1398 = vmatprep.subr.mxu0 0.0
    %1399 = vmatpush1.msra.mxu0 0.0
    %1400 = vmatprep.subr.mxu0 0.0
    %1401 = vmatpush1.msra.mxu0 0.0
    %1402 = vmatprep.subr.mxu0 0.0
    %1403 = vmatpush1.msra.mxu0 0.0
    %1404 = vmatprep.subr.mxu0 0.0
    %1405 = vmatpush1.msra.mxu0 0.0
    %1406 = vmatprep.subr.mxu0 0.0
    %1407 = vmatpush1.msra.mxu0 0.0
    %1408 = vmatprep.subr.mxu0 0.0
    %1409 = vmatpush1.msra.mxu0 0.0
    %1410 = vmatprep.subr.mxu0 0.0
    %1411 = vmatpush1.msra.mxu0 0.0
    %1412 = vmatprep.subr.mxu0 0.0
    %1413 = vmatpush1.msra.mxu0 0.0
    %1414 = vmatprep.subr.mxu0 0.0
    %1415 = vmatpush1.msra.mxu0 0.0
    %1416 = vmatprep.subr.mxu0 0.0
    %1417 = vmatpush1.msra.mxu0 0.0
    %1418 = vmatprep.subr.mxu0 0.0
    %1419 = vmatpush1.msra.mxu0 0.0
    %1420 = vmatprep.subr.mxu0 0.0
    %1421 = vmatpush1.msra.mxu0 0.0
    %1422 = vmatprep.subr.mxu0 0.0
    %1423 = vmatpush1.msra.mxu0 0.0
    %1424 = vmatprep.subr.mxu0 0.0
    %1425 = vmatpush1.msra.mxu0 0.0
    %1426 = vmatprep.mubr.f32.mxu0 0.0
    %1427 = vmatmul.mubr.f32.gmra.mrb[0].mxu0 %v69
    %v1428 = vpop.f32.mrb[0].mxu0
    %v1429 = vadd.f32 %v1360, %v1428
    %v1430 = vpop.f32.mrb[0].mxu0
    %1431 = vmatprep.mubr.f32.mxu0 0.0
    %1432 = vmatmul.mubr.f32.gmra.mrb[0].mxu0 %v72
    %v1433 = vpop.f32.mrb[0].mxu0
    %v1434 = vadd.f32 %v1360, %v1433
    %v1435 = vpop.f32.mrb[0].mxu0
    %1436 = vmatprep.mubr.f32.mxu0 0.0
    %1437 = vmatmul.mubr.f32.gmra.mrb[0].mxu0 %v75
    %v1438 = vpop.f32.mrb[0].mxu0
    %v1439 = vadd.f32 %v1360, %v1438
    %v1440 = vpop.f32.mrb[0].mxu0
    %1441 = vmatprep.mubr.f32.mxu0 0.0
    %1442 = vmatmul.mubr.f32.gmra.mrb[0].mxu0 %v78
    %v1443 = vpop.f32.mrb[0].mxu0
    %v1444 = vadd.f32 %v1360, %v1443
    %v1445 = vpop.f32.mrb[0].mxu0
    %1446 = vdwg.mxu0
    %s1447 = scalar_lea.vmem %s5, 64
    %v1448 = vld [vmem:[%s1447] sm:$0xff]
    %v1449 = vld [vmem:[%s1447 + $0x8] sm:$0xff]
    %v1450 = vld [vmem:[%s1447 + $0x10] sm:$0xff]
    %v1451 = vld [vmem:[%s1447 + $0x18] sm:$0xff]
    %s1452 = scalar_lea.vmem %s6, 2
    %v1453 = vld [vmem:[%s1452] sm:$0x1]
    %v1455 = vlaneseq
    %v1456 = vshrl.u32 %v1455, 7
    %v1457 = vsub.s32 0, %v1456
    %v1458 = vrot.slane %v1453, %v1457
    %1460 = vmatprep.subr.mxu0 0.0
    %1461 = vmatpush1.msra.mxu0 %v1448
    %1462 = vmatprep.subr.mxu0 0.0
    %1463 = vmatpush1.msra.mxu0 %v1449
    %1464 = vmatprep.subr.mxu0 0.0
    %1465 = vmatpush1.msra.mxu0 %v1450
    %1466 = vmatprep.subr.mxu0 0.0
    %1467 = vmatpush1.msra.mxu0 %v1451
    %1468 = vmatprep.subr.mxu0 0.0
    %1469 = vmatpush1.msra.mxu0 0.0
    %1470 = vmatprep.subr.mxu0 0.0
    %1471 = vmatpush1.msra.mxu0 0.0
    %1472 = vmatprep.subr.mxu0 0.0
    %1473 = vmatpush1.msra.mxu0 0.0
    %1474 = vmatprep.subr.mxu0 0.0
    %1475 = vmatpush1.msra.mxu0 0.0
    %1476 = vmatprep.subr.mxu0 0.0
    %1477 = vmatpush1.msra.mxu0 0.0
    %1478 = vmatprep.subr.mxu0 0.0
    %1479 = vmatpush1.msra.mxu0 0.0
    %1480 = vmatprep.subr.mxu0 0.0
    %1481 = vmatpush1.msra.mxu0 0.0
    %1482 = vmatprep.subr.mxu0 0.0
    %1483 = vmatpush1.msra.mxu0 0.0
    %1484 = vmatprep.subr.mxu0 0.0
    %1485 = vmatpush1.msra.mxu0 0.0
    %1486 = vmatprep.subr.mxu0 0.0
    %1487 = vmatpush1.msra.mxu0 0.0
    %1488 = vmatprep.subr.mxu0 0.0
    %1489 = vmatpush1.msra.mxu0 0.0
    %1490 = vmatprep.subr.mxu0 0.0
    %1491 = vmatpush1.msra.mxu0 0.0
    %1492 = vmatprep.subr.mxu0 0.0
    %1493 = vmatpush1.msra.mxu0 0.0
    %1494 = vmatprep.subr.mxu0 0.0
    %1495 = vmatpush1.msra.mxu0 0.0
    %1496 = vmatprep.subr.mxu0 0.0
    %1497 = vmatpush1.msra.mxu0 0.0
    %1498 = vmatprep.subr.mxu0 0.0
    %1499 = vmatpush1.msra.mxu0 0.0
    %1500 = vmatprep.subr.mxu0 0.0
    %1501 = vmatpush1.msra.mxu0 0.0
    %1502 = vmatprep.subr.mxu0 0.0
    %1503 = vmatpush1.msra.mxu0 0.0
    %1504 = vmatprep.subr.mxu0 0.0
    %1505 = vmatpush1.msra.mxu0 0.0
    %1506 = vmatprep.subr.mxu0 0.0
    %1507 = vmatpush1.msra.mxu0 0.0
    %1508 = vmatprep.subr.mxu0 0.0
    %1509 = vmatpush1.msra.mxu0 0.0
    %1510 = vmatprep.subr.mxu0 0.0
    %1511 = vmatpush1.msra.mxu0 0.0
    %1512 = vmatprep.subr.mxu0 0.0
    %1513 = vmatpush1.msra.mxu0 0.0
    %1514 = vmatprep.subr.mxu0 0.0
    %1515 = vmatpush1.msra.mxu0 0.0
    %1516 = vmatprep.subr.mxu0 0.0
    %1517 = vmatpush1.msra.mxu0 0.0
    %1518 = vmatprep.subr.mxu0 0.0
    %1519 = vmatpush1.msra.mxu0 0.0
    %1520 = vmatprep.subr.mxu0 0.0
    %1521 = vmatpush1.msra.mxu0 0.0
    %1522 = vmatprep.subr.mxu0 0.0
    %1523 = vmatpush1.msra.mxu0 0.0
    %1524 = vmatprep.mubr.f32.mxu0 0.0
    %1525 = vmatmul.mubr.f32.gmra.mrb[0].mxu0 %v69
    %v1526 = vpop.f32.mrb[0].mxu0
    %v1527 = vadd.f32 %v1458, %v1526
    %v1528 = vpop.f32.mrb[0].mxu0
    %1529 = vmatprep.mubr.f32.mxu0 0.0
    %1530 = vmatmul.mubr.f32.gmra.mrb[0].mxu0 %v72
    %v1531 = vpop.f32.mrb[0].mxu0
    %v1532 = vadd.f32 %v1458, %v1531
    %v1533 = vpop.f32.mrb[0].mxu0
    %1534 = vmatprep.mubr.f32.mxu0 0.0
    %1535 = vmatmul.mubr.f32.gmra.mrb[0].mxu0 %v75
    %v1536 = vpop.f32.mrb[0].mxu0
    %v1537 = vadd.f32 %v1458, %v1536
    %v1538 = vpop.f32.mrb[0].mxu0
    %1539 = vmatprep.mubr.f32.mxu0 0.0
    %1540 = vmatmul.mubr.f32.gmra.mrb[0].mxu0 %v78
    %v1541 = vpop.f32.mrb[0].mxu0
    %v1542 = vadd.f32 %v1458, %v1541
    %v1543 = vpop.f32.mrb[0].mxu0
    %1544 = vdwg.mxu0
    %s1545 = scalar_lea.vmem %s7, 64
    %v1546 = vld [vmem:[%s1545] sm:$0xff]
    %v1547 = vld [vmem:[%s1545 + $0x8] sm:$0xff]
    %v1548 = vld [vmem:[%s1545 + $0x10] sm:$0xff]
    %v1549 = vld [vmem:[%s1545 + $0x18] sm:$0xff]
    %s1550 = scalar_lea.vmem %s8, 2
    %v1551 = vld [vmem:[%s1550] sm:$0x1]
    %v1553 = vlaneseq
    %v1554 = vshrl.u32 %v1553, 7
    %v1555 = vsub.s32 0, %v1554
    %v1556 = vrot.slane %v1551, %v1555
    %1558 = vmatprep.subr.mxu0 0.0
    %1559 = vmatpush1.msra.mxu0 %v1546
    %1560 = vmatprep.subr.mxu0 0.0
    %1561 = vmatpush1.msra.mxu0 %v1547
    %1562 = vmatprep.subr.mxu0 0.0
    %1563 = vmatpush1.msra.mxu0 %v1548
    %1564 = vmatprep.subr.mxu0 0.0
    %1565 = vmatpush1.msra.mxu0 %v1549
    %1566 = vmatprep.subr.mxu0 0.0
    %1567 = vmatpush1.msra.mxu0 0.0
    %1568 = vmatprep.subr.mxu0 0.0
    %1569 = vmatpush1.msra.mxu0 0.0
    %1570 = vmatprep.subr.mxu0 0.0
    %1571 = vmatpush1.msra.mxu0 0.0
    %1572 = vmatprep.subr.mxu0 0.0
    %1573 = vmatpush1.msra.mxu0 0.0
    %1574 = vmatprep.subr.mxu0 0.0
    %1575 = vmatpush1.msra.mxu0 0.0
    %1576 = vmatprep.subr.mxu0 0.0
    %1577 = vmatpush1.msra.mxu0 0.0
    %1578 = vmatprep.subr.mxu0 0.0
    %1579 = vmatpush1.msra.mxu0 0.0
    %1580 = vmatprep.subr.mxu0 0.0
    %1581 = vmatpush1.msra.mxu0 0.0
    %1582 = vmatprep.subr.mxu0 0.0
    %1583 = vmatpush1.msra.mxu0 0.0
    %1584 = vmatprep.subr.mxu0 0.0
    %1585 = vmatpush1.msra.mxu0 0.0
    %1586 = vmatprep.subr.mxu0 0.0
    %1587 = vmatpush1.msra.mxu0 0.0
    %1588 = vmatprep.subr.mxu0 0.0
    %1589 = vmatpush1.msra.mxu0 0.0
    %1590 = vmatprep.subr.mxu0 0.0
    %1591 = vmatpush1.msra.mxu0 0.0
    %1592 = vmatprep.subr.mxu0 0.0
    %1593 = vmatpush1.msra.mxu0 0.0
    %1594 = vmatprep.subr.mxu0 0.0
    %1595 = vmatpush1.msra.mxu0 0.0
    %1596 = vmatprep.subr.mxu0 0.0
    %1597 = vmatpush1.msra.mxu0 0.0
    %1598 = vmatprep.subr.mxu0 0.0
    %1599 = vmatpush1.msra.mxu0 0.0
    %1600 = vmatprep.subr.mxu0 0.0
    %1601 = vmatpush1.msra.mxu0 0.0
    %1602 = vmatprep.subr.mxu0 0.0
    %1603 = vmatpush1.msra.mxu0 0.0
    %1604 = vmatprep.subr.mxu0 0.0
    %1605 = vmatpush1.msra.mxu0 0.0
    %1606 = vmatprep.subr.mxu0 0.0
    %1607 = vmatpush1.msra.mxu0 0.0
    %1608 = vmatprep.subr.mxu0 0.0
    %1609 = vmatpush1.msra.mxu0 0.0
    %1610 = vmatprep.subr.mxu0 0.0
    %1611 = vmatpush1.msra.mxu0 0.0
    %1612 = vmatprep.subr.mxu0 0.0
    %1613 = vmatpush1.msra.mxu0 0.0
    %1614 = vmatprep.subr.mxu0 0.0
    %1615 = vmatpush1.msra.mxu0 0.0
    %1616 = vmatprep.subr.mxu0 0.0
    %1617 = vmatpush1.msra.mxu0 0.0
    %1618 = vmatprep.subr.mxu0 0.0
    %1619 = vmatpush1.msra.mxu0 0.0
    %1620 = vmatprep.subr.mxu0 0.0
    %1621 = vmatpush1.msra.mxu0 0.0
    %1622 = vmatprep.mubr.f32.mxu0 0.0
    %1623 = vmatmul.mubr.f32.gmra.mrb[0].mxu0 %v69
    %v1624 = vpop.f32.mrb[0].mxu0
    %v1625 = vadd.f32 %v1556, %v1624
    %v1626 = vpop.f32.mrb[0].mxu0
    %1627 = vmatprep.mubr.f32.mxu0 0.0
    %1628 = vmatmul.mubr.f32.gmra.mrb[0].mxu0 %v72
    %v1629 = vpop.f32.mrb[0].mxu0
    %v1630 = vadd.f32 %v1556, %v1629
    %v1631 = vpop.f32.mrb[0].mxu0
    %1632 = vmatprep.mubr.f32.mxu0 0.0
    %1633 = vmatmul.mubr.f32.gmra.mrb[0].mxu0 %v75
    %v1634 = vpop.f32.mrb[0].mxu0
    %v1635 = vadd.f32 %v1556, %v1634
    %v1636 = vpop.f32.mrb[0].mxu0
    %1637 = vmatprep.mubr.f32.mxu0 0.0
    %1638 = vmatmul.mubr.f32.gmra.mrb[0].mxu0 %v78
    %v1639 = vpop.f32.mrb[0].mxu0
    %v1640 = vadd.f32 %v1556, %v1639
    %v1641 = vpop.f32.mrb[0].mxu0
    %1642 = vdwg.mxu0
    %v1644 = vsel %vm357, %v1429, 0
    %v1647 = vsel %vm357, %v1434, 0
    %v1650 = vsel %vm357, %v1439, 0
    %v1653 = vsel %vm357, %v1444, 0
    %v1656 = vsel %vm357, %v1527, 0
    %v1659 = vsel %vm357, %v1532, 0
    %v1662 = vsel %vm357, %v1537, 0
    %v1665 = vsel %vm357, %v1542, 0
    %1667 = vmatprep.subr.mxu0 0.0
    %1668 = vmatpush1.xpose.msra.mxu0 %v1656
    %1669 = vmatprep.subr.mxu0 0.0
    %1670 = vmatpush1.xpose.msra.mxu0 %v1659
    %1671 = vmatprep.subr.mxu0 0.0
    %1672 = vmatpush1.xpose.msra.mxu0 %v1662
    %1673 = vmatprep.subr.mxu0 0.0
    %1674 = vmatpush1.xpose.msra.mxu0 %v1665
    %1675 = vmatprep.subr.mxu0 0.0
    %1676 = vmatpush1.xpose.msra.mxu0 0.0
    %1677 = vmatprep.subr.mxu0 0.0
    %1678 = vmatpush1.xpose.msra.mxu0 0.0
    %1679 = vmatprep.subr.mxu0 0.0
    %1680 = vmatpush1.xpose.msra.mxu0 0.0
    %1681 = vmatprep.subr.mxu0 0.0
    %1682 = vmatpush1.xpose.msra.mxu0 0.0
    %1683 = vmatprep.subr.mxu0 0.0
    %1684 = vmatpush1.xpose.msra.mxu0 0.0
    %1685 = vmatprep.subr.mxu0 0.0
    %1686 = vmatpush1.xpose.msra.mxu0 0.0
    %1687 = vmatprep.subr.mxu0 0.0
    %1688 = vmatpush1.xpose.msra.mxu0 0.0
    %1689 = vmatprep.subr.mxu0 0.0
    %1690 = vmatpush1.xpose.msra.mxu0 0.0
    %1691 = vmatprep.subr.mxu0 0.0
    %1692 = vmatpush1.xpose.msra.mxu0 0.0
    %1693 = vmatprep.subr.mxu0 0.0
    %1694 = vmatpush1.xpose.msra.mxu0 0.0
    %1695 = vmatprep.subr.mxu0 0.0
    %1696 = vmatpush1.xpose.msra.mxu0 0.0
    %1697 = vmatprep.subr.mxu0 0.0
    %1698 = vmatpush1.xpose.msra.mxu0 0.0
    %1699 = vmatprep.subr.mxu0 0.0
    %1700 = vmatpush1.xpose.msra.mxu0 0.0
    %1701 = vmatprep.subr.mxu0 0.0
    %1702 = vmatpush1.xpose.msra.mxu0 0.0
    %1703 = vmatprep.subr.mxu0 0.0
    %1704 = vmatpush1.xpose.msra.mxu0 0.0
    %1705 = vmatprep.subr.mxu0 0.0
    %1706 = vmatpush1.xpose.msra.mxu0 0.0
    %1707 = vmatprep.subr.mxu0 0.0
    %1708 = vmatpush1.xpose.msra.mxu0 0.0
    %1709 = vmatprep.subr.mxu0 0.0
    %1710 = vmatpush1.xpose.msra.mxu0 0.0
    %1711 = vmatprep.subr.mxu0 0.0
    %1712 = vmatpush1.xpose.msra.mxu0 0.0
    %1713 = vmatprep.subr.mxu0 0.0
    %1714 = vmatpush1.xpose.msra.mxu0 0.0
    %1715 = vmatprep.subr.mxu0 0.0
    %1716 = vmatpush1.xpose.msra.mxu0 0.0
    %1717 = vmatprep.subr.mxu0 0.0
    %1718 = vmatpush1.xpose.msra.mxu0 0.0
    %1719 = vmatprep.subr.mxu0 0.0
    %1720 = vmatpush1.xpose.msra.mxu0 0.0
    %1721 = vmatprep.subr.mxu0 0.0
    %1722 = vmatpush1.xpose.msra.mxu0 0.0
    %1723 = vmatprep.subr.mxu0 0.0
    %1724 = vmatpush1.xpose.msra.mxu0 0.0
    %1725 = vmatprep.subr.mxu0 0.0
    %1726 = vmatpush1.xpose.msra.mxu0 0.0
    %1727 = vmatprep.subr.mxu0 0.0
    %1728 = vmatpush1.xpose.msra.mxu0 0.0
    %1729 = vmatprep.subr.mxu0 0.0
    %1730 = vmatpush1.xpose.msra.mxu0 0.0
    %1731 = vmatprep.mubr.f32.mxu0 0.0
    %1732 = vmatmul.mubr.f32.gmra.mrb[0].mxu0 %v1644
    %v1733 = vpop.f32.mrb[0].mxu0
    %v1734 = vadd.f32 %v52, %v1733
    %v1735 = vpop.f32.mrb[0].mxu0
    %1736 = vmatprep.mubr.f32.mxu0 0.0
    %1737 = vmatmul.mubr.f32.gmra.mrb[0].mxu0 %v1647
    %v1738 = vpop.f32.mrb[0].mxu0
    %v1739 = vadd.f32 %v53, %v1738
    %v1740 = vpop.f32.mrb[0].mxu0
    %1741 = vmatprep.mubr.f32.mxu0 0.0
    %1742 = vmatmul.mubr.f32.gmra.mrb[0].mxu0 %v1650
    %v1743 = vpop.f32.mrb[0].mxu0
    %v1744 = vadd.f32 %v54, %v1743
    %v1745 = vpop.f32.mrb[0].mxu0
    %1746 = vmatprep.mubr.f32.mxu0 0.0
    %1747 = vmatmul.mubr.f32.gmra.mrb[0].mxu0 %v1653
    %v1748 = vpop.f32.mrb[0].mxu0
    %v1749 = vadd.f32 %v55, %v1748
    %v1750 = vpop.f32.mrb[0].mxu0
    %1751 = vdwg.mxu0
    %v1752 = vsel %vm67, %v1734, -inf
    %1753 = vmax.xlane.f32.xlu0 %v1752
    %v1754 = vpop.xlane.xlu0 %1753
    %v1755 = vsel %vm67, %v1739, -inf
    %1756 = vmax.xlane.f32.xlu0 %v1755
    %v1757 = vpop.xlane.xlu0 %1756
    %v1758 = vsel %vm67, %v1744, -inf
    %1759 = vmax.xlane.f32.xlu0 %v1758
    %v1760 = vpop.xlane.xlu0 %1759
    %v1761 = vsel %vm67, %v1749, -inf
    %1762 = vmax.xlane.f32.xlu0 %v1761
    %v1763 = vpop.xlane.xlu0 %1762
    %v1764 = vsub.f32 %v1734, %v1754
    %v1765 = vsub.f32 %v1739, %v1757
    %v1766 = vsub.f32 %v1744, %v1760
    %v1767 = vsub.f32 %v1749, %v1763
    %v1768 = vmul.f32 %v1764, 1.442695
    %v1769 = vpow.pop %v1768
    %v1770 = vmul.f32 %v1765, 1.442695
    %v1771 = vpow.pop %v1770
    %v1772 = vmul.f32 %v1766, 1.442695
    %v1773 = vpow.pop %v1772
    %v1774 = vmul.f32 %v1767, 1.442695
    %v1775 = vpow.pop %v1774
    %v1776 = vsel %vm67, %v1769, 0.0
    %1777 = vadd.xlane.f32.xlu0 %v1776
    %v1778 = vpop.xlane.xlu0 %1777
    %v1779 = vsel %vm67, %v1771, 0.0
    %1780 = vadd.xlane.f32.xlu0 %v1779
    %v1781 = vpop.xlane.xlu0 %1780
    %v1782 = vsel %vm67, %v1773, 0.0
    %1783 = vadd.xlane.f32.xlu0 %v1782
    %v1784 = vpop.xlane.xlu0 %1783
    %v1785 = vsel %vm67, %v1775, 0.0
    %1786 = vadd.xlane.f32.xlu0 %v1785
    %v1787 = vpop.xlane.xlu0 %1786
    %v1788 = vrcp.pop %v1778
    %v1789 = vrcp.pop %v1781
    %v1790 = vrcp.pop %v1784
    %v1791 = vrcp.pop %v1787
    %v1792 = vmul.f32 %v1769, %v1788
    %v1793 = vmul.f32 %v1771, %v1789
    %v1794 = vmul.f32 %v1773, %v1790
    %v1795 = vmul.f32 %v1775, %v1791
    %v1797 = vsel %vm67, %v1792, 0
    %v1800 = vsel %vm67, %v1793, 0
    %v1803 = vsel %vm67, %v1794, 0
    %v1806 = vsel %vm67, %v1795, 0
    %1808 = vmatprep.subr.mxu0 0.0
    %1809 = vmatpush1.msra.mxu0 %v1625
    %1810 = vmatprep.subr.mxu0 0.0
    %1811 = vmatpush1.msra.mxu0 %v1630
    %1812 = vmatprep.subr.mxu0 0.0
    %1813 = vmatpush1.msra.mxu0 %v1635
    %1814 = vmatprep.subr.mxu0 0.0
    %1815 = vmatpush1.msra.mxu0 %v1640
    %1816 = vmatprep.subr.mxu0 0.0
    %1817 = vmatpush1.msra.mxu0 0.0
    %1818 = vmatprep.subr.mxu0 0.0
    %1819 = vmatpush1.msra.mxu0 0.0
    %1820 = vmatprep.subr.mxu0 0.0
    %1821 = vmatpush1.msra.mxu0 0.0
    %1822 = vmatprep.subr.mxu0 0.0
    %1823 = vmatpush1.msra.mxu0 0.0
    %1824 = vmatprep.subr.mxu0 0.0
    %1825 = vmatpush1.msra.mxu0 0.0
    %1826 = vmatprep.subr.mxu0 0.0
    %1827 = vmatpush1.msra.mxu0 0.0
    %1828 = vmatprep.subr.mxu0 0.0
    %1829 = vmatpush1.msra.mxu0 0.0
    %1830 = vmatprep.subr.mxu0 0.0
    %1831 = vmatpush1.msra.mxu0 0.0
    %1832 = vmatprep.subr.mxu0 0.0
    %1833 = vmatpush1.msra.mxu0 0.0
    %1834 = vmatprep.subr.mxu0 0.0
    %1835 = vmatpush1.msra.mxu0 0.0
    %1836 = vmatprep.subr.mxu0 0.0
    %1837 = vmatpush1.msra.mxu0 0.0
    %1838 = vmatprep.subr.mxu0 0.0
    %1839 = vmatpush1.msra.mxu0 0.0
    %1840 = vmatprep.subr.mxu0 0.0
    %1841 = vmatpush1.msra.mxu0 0.0
    %1842 = vmatprep.subr.mxu0 0.0
    %1843 = vmatpush1.msra.mxu0 0.0
    %1844 = vmatprep.subr.mxu0 0.0
    %1845 = vmatpush1.msra.mxu0 0.0
    %1846 = vmatprep.subr.mxu0 0.0
    %1847 = vmatpush1.msra.mxu0 0.0
    %1848 = vmatprep.subr.mxu0 0.0
    %1849 = vmatpush1.msra.mxu0 0.0
    %1850 = vmatprep.subr.mxu0 0.0
    %1851 = vmatpush1.msra.mxu0 0.0
    %1852 = vmatprep.subr.mxu0 0.0
    %1853 = vmatpush1.msra.mxu0 0.0
    %1854 = vmatprep.subr.mxu0 0.0
    %1855 = vmatpush1.msra.mxu0 0.0
    %1856 = vmatprep.subr.mxu0 0.0
    %1857 = vmatpush1.msra.mxu0 0.0
    %1858 = vmatprep.subr.mxu0 0.0
    %1859 = vmatpush1.msra.mxu0 0.0
    %1860 = vmatprep.subr.mxu0 0.0
    %1861 = vmatpush1.msra.mxu0 0.0
    %1862 = vmatprep.subr.mxu0 0.0
    %1863 = vmatpush1.msra.mxu0 0.0
    %1864 = vmatprep.subr.mxu0 0.0
    %1865 = vmatpush1.msra.mxu0 0.0
    %1866 = vmatprep.subr.mxu0 0.0
    %1867 = vmatpush1.msra.mxu0 0.0
    %1868 = vmatprep.subr.mxu0 0.0
    %1869 = vmatpush1.msra.mxu0 0.0
    %1870 = vmatprep.subr.mxu0 0.0
    %1871 = vmatpush1.msra.mxu0 0.0
    %1872 = vmatprep.mubr.f32.mxu0 0.0
    %1873 = vmatmul.mubr.f32.gmra.mrb[0].mxu0 %v1797
    %v1874 = vpop.f32.mrb[0].mxu0
    %v1875 = vadd.f32 0.0, %v1874
    %v1876 = vpop.f32.mrb[0].mxu0
    %1877 = vmatprep.mubr.f32.mxu0 0.0
    %1878 = vmatmul.mubr.f32.gmra.mrb[0].mxu0 %v1800
    %v1879 = vpop.f32.mrb[0].mxu0
    %v1880 = vadd.f32 0.0, %v1879
    %v1881 = vpop.f32.mrb[0].mxu0
    %1882 = vmatprep.mubr.f32.mxu0 0.0
    %1883 = vmatmul.mubr.f32.gmra.mrb[0].mxu0 %v1803
    %v1884 = vpop.f32.mrb[0].mxu0
    %v1885 = vadd.f32 0.0, %v1884
    %v1886 = vpop.f32.mrb[0].mxu0
    %1887 = vmatprep.mubr.f32.mxu0 0.0
    %1888 = vmatmul.mubr.f32.gmra.mrb[0].mxu0 %v1806
    %v1889 = vpop.f32.mrb[0].mxu0
    %v1890 = vadd.f32 0.0, %v1889
    %v1891 = vpop.f32.mrb[0].mxu0
    %1892 = vdwg.mxu0
    %s1893 = scalar_lea.vmem %s9, 16
    %v1894 = vld [vmem:[%s1893] sm:$0xff]
    %v1896 = vsel %vm357, %v1875, 0
    %v1899 = vsel %vm357, %v1880, 0
    %v1902 = vsel %vm357, %v1885, 0
    %v1905 = vsel %vm357, %v1890, 0
    %1907 = vmatprep.subr.mxu0 0.0
    %1908 = vmatpush1.msra.mxu0 %v1894
    %1909 = vmatprep.subr.mxu0 0.0
    %1910 = vmatpush1.msra.mxu0 0.0
    %1911 = vmatprep.subr.mxu0 0.0
    %1912 = vmatpush1.msra.mxu0 0.0
    %1913 = vmatprep.subr.mxu0 0.0
    %1914 = vmatpush1.msra.mxu0 0.0
    %1915 = vmatprep.subr.mxu0 0.0
    %1916 = vmatpush1.msra.mxu0 0.0
    %1917 = vmatprep.subr.mxu0 0.0
    %1918 = vmatpush1.msra.mxu0 0.0
    %1919 = vmatprep.subr.mxu0 0.0
    %1920 = vmatpush1.msra.mxu0 0.0
    %1921 = vmatprep.subr.mxu0 0.0
    %1922 = vmatpush1.msra.mxu0 0.0
    %1923 = vmatprep.subr.mxu0 0.0
    %1924 = vmatpush1.msra.mxu0 0.0
    %1925 = vmatprep.subr.mxu0 0.0
    %1926 = vmatpush1.msra.mxu0 0.0
    %1927 = vmatprep.subr.mxu0 0.0
    %1928 = vmatpush1.msra.mxu0 0.0
    %1929 = vmatprep.subr.mxu0 0.0
    %1930 = vmatpush1.msra.mxu0 0.0
    %1931 = vmatprep.subr.mxu0 0.0
    %1932 = vmatpush1.msra.mxu0 0.0
    %1933 = vmatprep.subr.mxu0 0.0
    %1934 = vmatpush1.msra.mxu0 0.0
    %1935 = vmatprep.subr.mxu0 0.0
    %1936 = vmatpush1.msra.mxu0 0.0
    %1937 = vmatprep.subr.mxu0 0.0
    %1938 = vmatpush1.msra.mxu0 0.0
    %1939 = vmatprep.subr.mxu0 0.0
    %1940 = vmatpush1.msra.mxu0 0.0
    %1941 = vmatprep.subr.mxu0 0.0
    %1942 = vmatpush1.msra.mxu0 0.0
    %1943 = vmatprep.subr.mxu0 0.0
    %1944 = vmatpush1.msra.mxu0 0.0
    %1945 = vmatprep.subr.mxu0 0.0
    %1946 = vmatpush1.msra.mxu0 0.0
    %1947 = vmatprep.subr.mxu0 0.0
    %1948 = vmatpush1.msra.mxu0 0.0
    %1949 = vmatprep.subr.mxu0 0.0
    %1950 = vmatpush1.msra.mxu0 0.0
    %1951 = vmatprep.subr.mxu0 0.0
    %1952 = vmatpush1.msra.mxu0 0.0
    %1953 = vmatprep.subr.mxu0 0.0
    %1954 = vmatpush1.msra.mxu0 0.0
    %1955 = vmatprep.subr.mxu0 0.0
    %1956 = vmatpush1.msra.mxu0 0.0
    %1957 = vmatprep.subr.mxu0 0.0
    %1958 = vmatpush1.msra.mxu0 0.0
    %1959 = vmatprep.subr.mxu0 0.0
    %1960 = vmatpush1.msra.mxu0 0.0
    %1961 = vmatprep.subr.mxu0 0.0
    %1962 = vmatpush1.msra.mxu0 0.0
    %1963 = vmatprep.subr.mxu0 0.0
    %1964 = vmatpush1.msra.mxu0 0.0
    %1965 = vmatprep.subr.mxu0 0.0
    %1966 = vmatpush1.msra.mxu0 0.0
    %1967 = vmatprep.subr.mxu0 0.0
    %1968 = vmatpush1.msra.mxu0 0.0
    %1969 = vmatprep.subr.mxu0 0.0
    %1970 = vmatpush1.msra.mxu0 0.0
    %1971 = vmatprep.mubr.f32.mxu0 0.0
    %1972 = vmatmul.mubr.f32.gmra.mrb[0].mxu0 %v1896
    %v1973 = vpop.f32.mrb[0].mxu0
    %v1974 = vadd.f32 0.0, %v1973
    %v1975 = vpop.f32.mrb[0].mxu0
    %1976 = vmatprep.mubr.f32.mxu0 0.0
    %1977 = vmatmul.mubr.f32.gmra.mrb[0].mxu0 %v1899
    %v1978 = vpop.f32.mrb[0].mxu0
    %v1979 = vadd.f32 0.0, %v1978
    %v1980 = vpop.f32.mrb[0].mxu0
    %1981 = vmatprep.mubr.f32.mxu0 0.0
    %1982 = vmatmul.mubr.f32.gmra.mrb[0].mxu0 %v1902
    %v1983 = vpop.f32.mrb[0].mxu0
    %v1984 = vadd.f32 0.0, %v1983
    %v1985 = vpop.f32.mrb[0].mxu0
    %1986 = vmatprep.mubr.f32.mxu0 0.0
    %1987 = vmatmul.mubr.f32.gmra.mrb[0].mxu0 %v1905
    %v1988 = vpop.f32.mrb[0].mxu0
    %v1989 = vadd.f32 0.0, %v1988
    %v1990 = vpop.f32.mrb[0].mxu0
    %1991 = vdwg.mxu0
    %v1992 = vadd.f32 %v1331, %v1974
    %v1993 = vadd.f32 %v1336, %v1979
    %v1994 = vadd.f32 %v1341, %v1984
    %v1995 = vadd.f32 %v1346, %v1989
    %s1996 = scalar_lea.vmem %s3, 96
    %v1997 = vld [vmem:[%s1996] sm:$0xff]
    %v1998 = vld [vmem:[%s1996 + $0x8] sm:$0xff]
    %v1999 = vld [vmem:[%s1996 + $0x10] sm:$0xff]
    %v2000 = vld [vmem:[%s1996 + $0x18] sm:$0xff]
    %s2001 = scalar_lea.vmem %s4, 3
    %v2002 = vld [vmem:[%s2001] sm:$0x1]
    %v2004 = vlaneseq
    %v2005 = vshrl.u32 %v2004, 7
    %v2006 = vsub.s32 0, %v2005
    %v2007 = vrot.slane %v2002, %v2006
    %2009 = vmatprep.subr.mxu0 0.0
    %2010 = vmatpush1.msra.mxu0 %v1997
    %2011 = vmatprep.subr.mxu0 0.0
    %2012 = vmatpush1.msra.mxu0 %v1998
    %2013 = vmatprep.subr.mxu0 0.0
    %2014 = vmatpush1.msra.mxu0 %v1999
    %2015 = vmatprep.subr.mxu0 0.0
    %2016 = vmatpush1.msra.mxu0 %v2000
    %2017 = vmatprep.subr.mxu0 0.0
    %2018 = vmatpush1.msra.mxu0 0.0
    %2019 = vmatprep.subr.mxu0 0.0
    %2020 = vmatpush1.msra.mxu0 0.0
    %2021 = vmatprep.subr.mxu0 0.0
    %2022 = vmatpush1.msra.mxu0 0.0
    %2023 = vmatprep.subr.mxu0 0.0
    %2024 = vmatpush1.msra.mxu0 0.0
    %2025 = vmatprep.subr.mxu0 0.0
    %2026 = vmatpush1.msra.mxu0 0.0
    %2027 = vmatprep.subr.mxu0 0.0
    %2028 = vmatpush1.msra.mxu0 0.0
    %2029 = vmatprep.subr.mxu0 0.0
    %2030 = vmatpush1.msra.mxu0 0.0
    %2031 = vmatprep.subr.mxu0 0.0
    %2032 = vmatpush1.msra.mxu0 0.0
    %2033 = vmatprep.subr.mxu0 0.0
    %2034 = vmatpush1.msra.mxu0 0.0
    %2035 = vmatprep.subr.mxu0 0.0
    %2036 = vmatpush1.msra.mxu0 0.0
    %2037 = vmatprep.subr.mxu0 0.0
    %2038 = vmatpush1.msra.mxu0 0.0
    %2039 = vmatprep.subr.mxu0 0.0
    %2040 = vmatpush1.msra.mxu0 0.0
    %2041 = vmatprep.subr.mxu0 0.0
    %2042 = vmatpush1.msra.mxu0 0.0
    %2043 = vmatprep.subr.mxu0 0.0
    %2044 = vmatpush1.msra.mxu0 0.0
    %2045 = vmatprep.subr.mxu0 0.0
    %2046 = vmatpush1.msra.mxu0 0.0
    %2047 = vmatprep.subr.mxu0 0.0
    %2048 = vmatpush1.msra.mxu0 0.0
    %2049 = vmatprep.subr.mxu0 0.0
    %2050 = vmatpush1.msra.mxu0 0.0
    %2051 = vmatprep.subr.mxu0 0.0
    %2052 = vmatpush1.msra.mxu0 0.0
    %2053 = vmatprep.subr.mxu0 0.0
    %2054 = vmatpush1.msra.mxu0 0.0
    %2055 = vmatprep.subr.mxu0 0.0
    %2056 = vmatpush1.msra.mxu0 0.0
    %2057 = vmatprep.subr.mxu0 0.0
    %2058 = vmatpush1.msra.mxu0 0.0
    %2059 = vmatprep.subr.mxu0 0.0
    %2060 = vmatpush1.msra.mxu0 0.0
    %2061 = vmatprep.subr.mxu0 0.0
    %2062 = vmatpush1.msra.mxu0 0.0
    %2063 = vmatprep.subr.mxu0 0.0
    %2064 = vmatpush1.msra.mxu0 0.0
    %2065 = vmatprep.subr.mxu0 0.0
    %2066 = vmatpush1.msra.mxu0 0.0
    %2067 = vmatprep.subr.mxu0 0.0
    %2068 = vmatpush1.msra.mxu0 0.0
    %2069 = vmatprep.subr.mxu0 0.0
    %2070 = vmatpush1.msra.mxu0 0.0
    %2071 = vmatprep.subr.mxu0 0.0
    %2072 = vmatpush1.msra.mxu0 0.0
    %2073 = vmatprep.mubr.f32.mxu0 0.0
    %2074 = vmatmul.mubr.f32.gmra.mrb[0].mxu0 %v69
    %v2075 = vpop.f32.mrb[0].mxu0
    %v2076 = vadd.f32 %v2007, %v2075
    %v2077 = vpop.f32.mrb[0].mxu0
    %2078 = vmatprep.mubr.f32.mxu0 0.0
    %2079 = vmatmul.mubr.f32.gmra.mrb[0].mxu0 %v72
    %v2080 = vpop.f32.mrb[0].mxu0
    %v2081 = vadd.f32 %v2007, %v2080
    %v2082 = vpop.f32.mrb[0].mxu0
    %2083 = vmatprep.mubr.f32.mxu0 0.0
    %2084 = vmatmul.mubr.f32.gmra.mrb[0].mxu0 %v75
    %v2085 = vpop.f32.mrb[0].mxu0
    %v2086 = vadd.f32 %v2007, %v2085
    %v2087 = vpop.f32.mrb[0].mxu0
    %2088 = vmatprep.mubr.f32.mxu0 0.0
    %2089 = vmatmul.mubr.f32.gmra.mrb[0].mxu0 %v78
    %v2090 = vpop.f32.mrb[0].mxu0
    %v2091 = vadd.f32 %v2007, %v2090
    %v2092 = vpop.f32.mrb[0].mxu0
    %2093 = vdwg.mxu0
    %s2094 = scalar_lea.vmem %s5, 96
    %v2095 = vld [vmem:[%s2094] sm:$0xff]
    %v2096 = vld [vmem:[%s2094 + $0x8] sm:$0xff]
    %v2097 = vld [vmem:[%s2094 + $0x10] sm:$0xff]
    %v2098 = vld [vmem:[%s2094 + $0x18] sm:$0xff]
    %s2099 = scalar_lea.vmem %s6, 3
    %v2100 = vld [vmem:[%s2099] sm:$0x1]
    %v2102 = vlaneseq
    %v2103 = vshrl.u32 %v2102, 7
    %v2104 = vsub.s32 0, %v2103
    %v2105 = vrot.slane %v2100, %v2104
    %2107 = vmatprep.subr.mxu0 0.0
    %2108 = vmatpush1.msra.mxu0 %v2095
    %2109 = vmatprep.subr.mxu0 0.0
    %2110 = vmatpush1.msra.mxu0 %v2096
    %2111 = vmatprep.subr.mxu0 0.0
    %2112 = vmatpush1.msra.mxu0 %v2097
    %2113 = vmatprep.subr.mxu0 0.0
    %2114 = vmatpush1.msra.mxu0 %v2098
    %2115 = vmatprep.subr.mxu0 0.0
    %2116 = vmatpush1.msra.mxu0 0.0
    %2117 = vmatprep.subr.mxu0 0.0
    %2118 = vmatpush1.msra.mxu0 0.0
    %2119 = vmatprep.subr.mxu0 0.0
    %2120 = vmatpush1.msra.mxu0 0.0
    %2121 = vmatprep.subr.mxu0 0.0
    %2122 = vmatpush1.msra.mxu0 0.0
    %2123 = vmatprep.subr.mxu0 0.0
    %2124 = vmatpush1.msra.mxu0 0.0
    %2125 = vmatprep.subr.mxu0 0.0
    %2126 = vmatpush1.msra.mxu0 0.0
    %2127 = vmatprep.subr.mxu0 0.0
    %2128 = vmatpush1.msra.mxu0 0.0
    %2129 = vmatprep.subr.mxu0 0.0
    %2130 = vmatpush1.msra.mxu0 0.0
    %2131 = vmatprep.subr.mxu0 0.0
    %2132 = vmatpush1.msra.mxu0 0.0
    %2133 = vmatprep.subr.mxu0 0.0
    %2134 = vmatpush1.msra.mxu0 0.0
    %2135 = vmatprep.subr.mxu0 0.0
    %2136 = vmatpush1.msra.mxu0 0.0
    %2137 = vmatprep.subr.mxu0 0.0
    %2138 = vmatpush1.msra.mxu0 0.0
    %2139 = vmatprep.subr.mxu0 0.0
    %2140 = vmatpush1.msra.mxu0 0.0
    %2141 = vmatprep.subr.mxu0 0.0
    %2142 = vmatpush1.msra.mxu0 0.0
    %2143 = vmatprep.subr.mxu0 0.0
    %2144 = vmatpush1.msra.mxu0 0.0
    %2145 = vmatprep.subr.mxu0 0.0
    %2146 = vmatpush1.msra.mxu0 0.0
    %2147 = vmatprep.subr.mxu0 0.0
    %2148 = vmatpush1.msra.mxu0 0.0
    %2149 = vmatprep.subr.mxu0 0.0
    %2150 = vmatpush1.msra.mxu0 0.0
    %2151 = vmatprep.subr.mxu0 0.0
    %2152 = vmatpush1.msra.mxu0 0.0
    %2153 = vmatprep.subr.mxu0 0.0
    %2154 = vmatpush1.msra.mxu0 0.0
    %2155 = vmatprep.subr.mxu0 0.0
    %2156 = vmatpush1.msra.mxu0 0.0
    %2157 = vmatprep.subr.mxu0 0.0
    %2158 = vmatpush1.msra.mxu0 0.0
    %2159 = vmatprep.subr.mxu0 0.0
    %2160 = vmatpush1.msra.mxu0 0.0
    %2161 = vmatprep.subr.mxu0 0.0
    %2162 = vmatpush1.msra.mxu0 0.0
    %2163 = vmatprep.subr.mxu0 0.0
    %2164 = vmatpush1.msra.mxu0 0.0
    %2165 = vmatprep.subr.mxu0 0.0
    %2166 = vmatpush1.msra.mxu0 0.0
    %2167 = vmatprep.subr.mxu0 0.0
    %2168 = vmatpush1.msra.mxu0 0.0
    %2169 = vmatprep.subr.mxu0 0.0
    %2170 = vmatpush1.msra.mxu0 0.0
    %2171 = vmatprep.mubr.f32.mxu0 0.0
    %2172 = vmatmul.mubr.f32.gmra.mrb[0].mxu0 %v69
    %v2173 = vpop.f32.mrb[0].mxu0
    %v2174 = vadd.f32 %v2105, %v2173
    %v2175 = vpop.f32.mrb[0].mxu0
    %2176 = vmatprep.mubr.f32.mxu0 0.0
    %2177 = vmatmul.mubr.f32.gmra.mrb[0].mxu0 %v72
    %v2178 = vpop.f32.mrb[0].mxu0
    %v2179 = vadd.f32 %v2105, %v2178
    %v2180 = vpop.f32.mrb[0].mxu0
    %2181 = vmatprep.mubr.f32.mxu0 0.0
    %2182 = vmatmul.mubr.f32.gmra.mrb[0].mxu0 %v75
    %v2183 = vpop.f32.mrb[0].mxu0
    %v2184 = vadd.f32 %v2105, %v2183
    %v2185 = vpop.f32.mrb[0].mxu0
    %2186 = vmatprep.mubr.f32.mxu0 0.0
    %2187 = vmatmul.mubr.f32.gmra.mrb[0].mxu0 %v78
    %v2188 = vpop.f32.mrb[0].mxu0
    %v2189 = vadd.f32 %v2105, %v2188
    %v2190 = vpop.f32.mrb[0].mxu0
    %2191 = vdwg.mxu0
    %s2192 = scalar_lea.vmem %s7, 96
    %v2193 = vld [vmem:[%s2192] sm:$0xff]
    %v2194 = vld [vmem:[%s2192 + $0x8] sm:$0xff]
    %v2195 = vld [vmem:[%s2192 + $0x10] sm:$0xff]
    %v2196 = vld [vmem:[%s2192 + $0x18] sm:$0xff]
    %s2197 = scalar_lea.vmem %s8, 3
    %v2198 = vld [vmem:[%s2197] sm:$0x1]
    %v2200 = vlaneseq
    %v2201 = vshrl.u32 %v2200, 7
    %v2202 = vsub.s32 0, %v2201
    %v2203 = vrot.slane %v2198, %v2202
    %2205 = vmatprep.subr.mxu0 0.0
    %2206 = vmatpush1.msra.mxu0 %v2193
    %2207 = vmatprep.subr.mxu0 0.0
    %2208 = vmatpush1.msra.mxu0 %v2194
    %2209 = vmatprep.subr.mxu0 0.0
    %2210 = vmatpush1.msra.mxu0 %v2195
    %2211 = vmatprep.subr.mxu0 0.0
    %2212 = vmatpush1.msra.mxu0 %v2196
    %2213 = vmatprep.subr.mxu0 0.0
    %2214 = vmatpush1.msra.mxu0 0.0
    %2215 = vmatprep.subr.mxu0 0.0
    %2216 = vmatpush1.msra.mxu0 0.0
    %2217 = vmatprep.subr.mxu0 0.0
    %2218 = vmatpush1.msra.mxu0 0.0
    %2219 = vmatprep.subr.mxu0 0.0
    %2220 = vmatpush1.msra.mxu0 0.0
    %2221 = vmatprep.subr.mxu0 0.0
    %2222 = vmatpush1.msra.mxu0 0.0
    %2223 = vmatprep.subr.mxu0 0.0
    %2224 = vmatpush1.msra.mxu0 0.0
    %2225 = vmatprep.subr.mxu0 0.0
    %2226 = vmatpush1.msra.mxu0 0.0
    %2227 = vmatprep.subr.mxu0 0.0
    %2228 = vmatpush1.msra.mxu0 0.0
    %2229 = vmatprep.subr.mxu0 0.0
    %2230 = vmatpush1.msra.mxu0 0.0
    %2231 = vmatprep.subr.mxu0 0.0
    %2232 = vmatpush1.msra.mxu0 0.0
    %2233 = vmatprep.subr.mxu0 0.0
    %2234 = vmatpush1.msra.mxu0 0.0
    %2235 = vmatprep.subr.mxu0 0.0
    %2236 = vmatpush1.msra.mxu0 0.0
    %2237 = vmatprep.subr.mxu0 0.0
    %2238 = vmatpush1.msra.mxu0 0.0
    %2239 = vmatprep.subr.mxu0 0.0
    %2240 = vmatpush1.msra.mxu0 0.0
    %2241 = vmatprep.subr.mxu0 0.0
    %2242 = vmatpush1.msra.mxu0 0.0
    %2243 = vmatprep.subr.mxu0 0.0
    %2244 = vmatpush1.msra.mxu0 0.0
    %2245 = vmatprep.subr.mxu0 0.0
    %2246 = vmatpush1.msra.mxu0 0.0
    %2247 = vmatprep.subr.mxu0 0.0
    %2248 = vmatpush1.msra.mxu0 0.0
    %2249 = vmatprep.subr.mxu0 0.0
    %2250 = vmatpush1.msra.mxu0 0.0
    %2251 = vmatprep.subr.mxu0 0.0
    %2252 = vmatpush1.msra.mxu0 0.0
    %2253 = vmatprep.subr.mxu0 0.0
    %2254 = vmatpush1.msra.mxu0 0.0
    %2255 = vmatprep.subr.mxu0 0.0
    %2256 = vmatpush1.msra.mxu0 0.0
    %2257 = vmatprep.subr.mxu0 0.0
    %2258 = vmatpush1.msra.mxu0 0.0
    %2259 = vmatprep.subr.mxu0 0.0
    %2260 = vmatpush1.msra.mxu0 0.0
    %2261 = vmatprep.subr.mxu0 0.0
    %2262 = vmatpush1.msra.mxu0 0.0
    %2263 = vmatprep.subr.mxu0 0.0
    %2264 = vmatpush1.msra.mxu0 0.0
    %2265 = vmatprep.subr.mxu0 0.0
    %2266 = vmatpush1.msra.mxu0 0.0
    %2267 = vmatprep.subr.mxu0 0.0
    %2268 = vmatpush1.msra.mxu0 0.0
    %2269 = vmatprep.mubr.f32.mxu0 0.0
    %2270 = vmatmul.mubr.f32.gmra.mrb[0].mxu0 %v69
    %v2271 = vpop.f32.mrb[0].mxu0
    %v2272 = vadd.f32 %v2203, %v2271
    %v2273 = vpop.f32.mrb[0].mxu0
    %2274 = vmatprep.mubr.f32.mxu0 0.0
    %2275 = vmatmul.mubr.f32.gmra.mrb[0].mxu0 %v72
    %v2276 = vpop.f32.mrb[0].mxu0
    %v2277 = vadd.f32 %v2203, %v2276
    %v2278 = vpop.f32.mrb[0].mxu0
    %2279 = vmatprep.mubr.f32.mxu0 0.0
    %2280 = vmatmul.mubr.f32.gmra.mrb[0].mxu0 %v75
    %v2281 = vpop.f32.mrb[0].mxu0
    %v2282 = vadd.f32 %v2203, %v2281
    %v2283 = vpop.f32.mrb[0].mxu0
    %2284 = vmatprep.mubr.f32.mxu0 0.0
    %2285 = vmatmul.mubr.f32.gmra.mrb[0].mxu0 %v78
    %v2286 = vpop.f32.mrb[0].mxu0
    %v2287 = vadd.f32 %v2203, %v2286
    %v2288 = vpop.f32.mrb[0].mxu0
    %2289 = vdwg.mxu0
    %v2291 = vsel %vm357, %v2076, 0
    %v2294 = vsel %vm357, %v2081, 0
    %v2297 = vsel %vm357, %v2086, 0
    %v2300 = vsel %vm357, %v2091, 0
    %v2303 = vsel %vm357, %v2174, 0
    %v2306 = vsel %vm357, %v2179, 0
    %v2309 = vsel %vm357, %v2184, 0
    %v2312 = vsel %vm357, %v2189, 0
    %2314 = vmatprep.subr.mxu0 0.0
    %2315 = vmatpush1.xpose.msra.mxu0 %v2303
    %2316 = vmatprep.subr.mxu0 0.0
    %2317 = vmatpush1.xpose.msra.mxu0 %v2306
    %2318 = vmatprep.subr.mxu0 0.0
    %2319 = vmatpush1.xpose.msra.mxu0 %v2309
    %2320 = vmatprep.subr.mxu0 0.0
    %2321 = vmatpush1.xpose.msra.mxu0 %v2312
    %2322 = vmatprep.subr.mxu0 0.0
    %2323 = vmatpush1.xpose.msra.mxu0 0.0
    %2324 = vmatprep.subr.mxu0 0.0
    %2325 = vmatpush1.xpose.msra.mxu0 0.0
    %2326 = vmatprep.subr.mxu0 0.0
    %2327 = vmatpush1.xpose.msra.mxu0 0.0
    %2328 = vmatprep.subr.mxu0 0.0
    %2329 = vmatpush1.xpose.msra.mxu0 0.0
    %2330 = vmatprep.subr.mxu0 0.0
    %2331 = vmatpush1.xpose.msra.mxu0 0.0
    %2332 = vmatprep.subr.mxu0 0.0
    %2333 = vmatpush1.xpose.msra.mxu0 0.0
    %2334 = vmatprep.subr.mxu0 0.0
    %2335 = vmatpush1.xpose.msra.mxu0 0.0
    %2336 = vmatprep.subr.mxu0 0.0
    %2337 = vmatpush1.xpose.msra.mxu0 0.0
    %2338 = vmatprep.subr.mxu0 0.0
    %2339 = vmatpush1.xpose.msra.mxu0 0.0
    %2340 = vmatprep.subr.mxu0 0.0
    %2341 = vmatpush1.xpose.msra.mxu0 0.0
    %2342 = vmatprep.subr.mxu0 0.0
    %2343 = vmatpush1.xpose.msra.mxu0 0.0
    %2344 = vmatprep.subr.mxu0 0.0
    %2345 = vmatpush1.xpose.msra.mxu0 0.0
    %2346 = vmatprep.subr.mxu0 0.0
    %2347 = vmatpush1.xpose.msra.mxu0 0.0
    %2348 = vmatprep.subr.mxu0 0.0
    %2349 = vmatpush1.xpose.msra.mxu0 0.0
    %2350 = vmatprep.subr.mxu0 0.0
    %2351 = vmatpush1.xpose.msra.mxu0 0.0
    %2352 = vmatprep.subr.mxu0 0.0
    %2353 = vmatpush1.xpose.msra.mxu0 0.0
    %2354 = vmatprep.subr.mxu0 0.0
    %2355 = vmatpush1.xpose.msra.mxu0 0.0
    %2356 = vmatprep.subr.mxu0 0.0
    %2357 = vmatpush1.xpose.msra.mxu0 0.0
    %2358 = vmatprep.subr.mxu0 0.0
    %2359 = vmatpush1.xpose.msra.mxu0 0.0
    %2360 = vmatprep.subr.mxu0 0.0
    %2361 = vmatpush1.xpose.msra.mxu0 0.0
    %2362 = vmatprep.subr.mxu0 0.0
    %2363 = vmatpush1.xpose.msra.mxu0 0.0
    %2364 = vmatprep.subr.mxu0 0.0
    %2365 = vmatpush1.xpose.msra.mxu0 0.0
    %2366 = vmatprep.subr.mxu0 0.0
    %2367 = vmatpush1.xpose.msra.mxu0 0.0
    %2368 = vmatprep.subr.mxu0 0.0
    %2369 = vmatpush1.xpose.msra.mxu0 0.0
    %2370 = vmatprep.subr.mxu0 0.0
    %2371 = vmatpush1.xpose.msra.mxu0 0.0
    %2372 = vmatprep.subr.mxu0 0.0
    %2373 = vmatpush1.xpose.msra.mxu0 0.0
    %2374 = vmatprep.subr.mxu0 0.0
    %2375 = vmatpush1.xpose.msra.mxu0 0.0
    %2376 = vmatprep.subr.mxu0 0.0
    %2377 = vmatpush1.xpose.msra.mxu0 0.0
    %2378 = vmatprep.mubr.f32.mxu0 0.0
    %2379 = vmatmul.mubr.f32.gmra.mrb[0].mxu0 %v2291
    %v2380 = vpop.f32.mrb[0].mxu0
    %v2381 = vadd.f32 %v52, %v2380
    %v2382 = vpop.f32.mrb[0].mxu0
    %2383 = vmatprep.mubr.f32.mxu0 0.0
    %2384 = vmatmul.mubr.f32.gmra.mrb[0].mxu0 %v2294
    %v2385 = vpop.f32.mrb[0].mxu0
    %v2386 = vadd.f32 %v53, %v2385
    %v2387 = vpop.f32.mrb[0].mxu0
    %2388 = vmatprep.mubr.f32.mxu0 0.0
    %2389 = vmatmul.mubr.f32.gmra.mrb[0].mxu0 %v2297
    %v2390 = vpop.f32.mrb[0].mxu0
    %v2391 = vadd.f32 %v54, %v2390
    %v2392 = vpop.f32.mrb[0].mxu0
    %2393 = vmatprep.mubr.f32.mxu0 0.0
    %2394 = vmatmul.mubr.f32.gmra.mrb[0].mxu0 %v2300
    %v2395 = vpop.f32.mrb[0].mxu0
    %v2396 = vadd.f32 %v55, %v2395
    %v2397 = vpop.f32.mrb[0].mxu0
    %2398 = vdwg.mxu0
    %v2399 = vsel %vm67, %v2381, -inf
    %2400 = vmax.xlane.f32.xlu0 %v2399
    %v2401 = vpop.xlane.xlu0 %2400
    %v2402 = vsel %vm67, %v2386, -inf
    %2403 = vmax.xlane.f32.xlu0 %v2402
    %v2404 = vpop.xlane.xlu0 %2403
    %v2405 = vsel %vm67, %v2391, -inf
    %2406 = vmax.xlane.f32.xlu0 %v2405
    %v2407 = vpop.xlane.xlu0 %2406
    %v2408 = vsel %vm67, %v2396, -inf
    %2409 = vmax.xlane.f32.xlu0 %v2408
    %v2410 = vpop.xlane.xlu0 %2409
    %v2411 = vsub.f32 %v2381, %v2401
    %v2412 = vsub.f32 %v2386, %v2404
    %v2413 = vsub.f32 %v2391, %v2407
    %v2414 = vsub.f32 %v2396, %v2410
    %v2415 = vmul.f32 %v2411, 1.442695
    %v2416 = vpow.pop %v2415
    %v2417 = vmul.f32 %v2412, 1.442695
    %v2418 = vpow.pop %v2417
    %v2419 = vmul.f32 %v2413, 1.442695
    %v2420 = vpow.pop %v2419
    %v2421 = vmul.f32 %v2414, 1.442695
    %v2422 = vpow.pop %v2421
    %v2423 = vsel %vm67, %v2416, 0.0
    %2424 = vadd.xlane.f32.xlu0 %v2423
    %v2425 = vpop.xlane.xlu0 %2424
    %v2426 = vsel %vm67, %v2418, 0.0
    %2427 = vadd.xlane.f32.xlu0 %v2426
    %v2428 = vpop.xlane.xlu0 %2427
    %v2429 = vsel %vm67, %v2420, 0.0
    %2430 = vadd.xlane.f32.xlu0 %v2429
    %v2431 = vpop.xlane.xlu0 %2430
    %v2432 = vsel %vm67, %v2422, 0.0
    %2433 = vadd.xlane.f32.xlu0 %v2432
    %v2434 = vpop.xlane.xlu0 %2433
    %v2435 = vrcp.pop %v2425
    %v2436 = vrcp.pop %v2428
    %v2437 = vrcp.pop %v2431
    %v2438 = vrcp.pop %v2434
    %v2439 = vmul.f32 %v2416, %v2435
    %v2440 = vmul.f32 %v2418, %v2436
    %v2441 = vmul.f32 %v2420, %v2437
    %v2442 = vmul.f32 %v2422, %v2438
    %v2444 = vsel %vm67, %v2439, 0
    %v2447 = vsel %vm67, %v2440, 0
    %v2450 = vsel %vm67, %v2441, 0
    %v2453 = vsel %vm67, %v2442, 0
    %2455 = vmatprep.subr.mxu0 0.0
    %2456 = vmatpush1.msra.mxu0 %v2272
    %2457 = vmatprep.subr.mxu0 0.0
    %2458 = vmatpush1.msra.mxu0 %v2277
    %2459 = vmatprep.subr.mxu0 0.0
    %2460 = vmatpush1.msra.mxu0 %v2282
    %2461 = vmatprep.subr.mxu0 0.0
    %2462 = vmatpush1.msra.mxu0 %v2287
    %2463 = vmatprep.subr.mxu0 0.0
    %2464 = vmatpush1.msra.mxu0 0.0
    %2465 = vmatprep.subr.mxu0 0.0
    %2466 = vmatpush1.msra.mxu0 0.0
    %2467 = vmatprep.subr.mxu0 0.0
    %2468 = vmatpush1.msra.mxu0 0.0
    %2469 = vmatprep.subr.mxu0 0.0
    %2470 = vmatpush1.msra.mxu0 0.0
    %2471 = vmatprep.subr.mxu0 0.0
    %2472 = vmatpush1.msra.mxu0 0.0
    %2473 = vmatprep.subr.mxu0 0.0
    %2474 = vmatpush1.msra.mxu0 0.0
    %2475 = vmatprep.subr.mxu0 0.0
    %2476 = vmatpush1.msra.mxu0 0.0
    %2477 = vmatprep.subr.mxu0 0.0
    %2478 = vmatpush1.msra.mxu0 0.0
    %2479 = vmatprep.subr.mxu0 0.0
    %2480 = vmatpush1.msra.mxu0 0.0
    %2481 = vmatprep.subr.mxu0 0.0
    %2482 = vmatpush1.msra.mxu0 0.0
    %2483 = vmatprep.subr.mxu0 0.0
    %2484 = vmatpush1.msra.mxu0 0.0
    %2485 = vmatprep.subr.mxu0 0.0
    %2486 = vmatpush1.msra.mxu0 0.0
    %2487 = vmatprep.subr.mxu0 0.0
    %2488 = vmatpush1.msra.mxu0 0.0
    %2489 = vmatprep.subr.mxu0 0.0
    %2490 = vmatpush1.msra.mxu0 0.0
    %2491 = vmatprep.subr.mxu0 0.0
    %2492 = vmatpush1.msra.mxu0 0.0
    %2493 = vmatprep.subr.mxu0 0.0
    %2494 = vmatpush1.msra.mxu0 0.0
    %2495 = vmatprep.subr.mxu0 0.0
    %2496 = vmatpush1.msra.mxu0 0.0
    %2497 = vmatprep.subr.mxu0 0.0
    %2498 = vmatpush1.msra.mxu0 0.0
    %2499 = vmatprep.subr.mxu0 0.0
    %2500 = vmatpush1.msra.mxu0 0.0
    %2501 = vmatprep.subr.mxu0 0.0
    %2502 = vmatpush1.msra.mxu0 0.0
    %2503 = vmatprep.subr.mxu0 0.0
    %2504 = vmatpush1.msra.mxu0 0.0
    %2505 = vmatprep.subr.mxu0 0.0
    %2506 = vmatpush1.msra.mxu0 0.0
    %2507 = vmatprep.subr.mxu0 0.0
    %2508 = vmatpush1.msra.mxu0 0.0
    %2509 = vmatprep.subr.mxu0 0.0
    %2510 = vmatpush1.msra.mxu0 0.0
    %2511 = vmatprep.subr.mxu0 0.0
    %2512 = vmatpush1.msra.mxu0 0.0
    %2513 = vmatprep.subr.mxu0 0.0
    %2514 = vmatpush1.msra.mxu0 0.0
    %2515 = vmatprep.subr.mxu0 0.0
    %2516 = vmatpush1.msra.mxu0 0.0
    %2517 = vmatprep.subr.mxu0 0.0
    %2518 = vmatpush1.msra.mxu0 0.0
    %2519 = vmatprep.mubr.f32.mxu0 0.0
    %2520 = vmatmul.mubr.f32.gmra.mrb[0].mxu0 %v2444
    %v2521 = vpop.f32.mrb[0].mxu0
    %v2522 = vadd.f32 0.0, %v2521
    %v2523 = vpop.f32.mrb[0].mxu0
    %2524 = vmatprep.mubr.f32.mxu0 0.0
    %2525 = vmatmul.mubr.f32.gmra.mrb[0].mxu0 %v2447
    %v2526 = vpop.f32.mrb[0].mxu0
    %v2527 = vadd.f32 0.0, %v2526
    %v2528 = vpop.f32.mrb[0].mxu0
    %2529 = vmatprep.mubr.f32.mxu0 0.0
    %2530 = vmatmul.mubr.f32.gmra.mrb[0].mxu0 %v2450
    %v2531 = vpop.f32.mrb[0].mxu0
    %v2532 = vadd.f32 0.0, %v2531
    %v2533 = vpop.f32.mrb[0].mxu0
    %2534 = vmatprep.mubr.f32.mxu0 0.0
    %2535 = vmatmul.mubr.f32.gmra.mrb[0].mxu0 %v2453
    %v2536 = vpop.f32.mrb[0].mxu0
    %v2537 = vadd.f32 0.0, %v2536
    %v2538 = vpop.f32.mrb[0].mxu0
    %2539 = vdwg.mxu0
    %s2540 = scalar_lea.vmem %s9, 24
    %v2541 = vld [vmem:[%s2540] sm:$0xff]
    %v2543 = vsel %vm357, %v2522, 0
    %v2546 = vsel %vm357, %v2527, 0
    %v2549 = vsel %vm357, %v2532, 0
    %v2552 = vsel %vm357, %v2537, 0
    %2554 = vmatprep.subr.mxu0 0.0
    %2555 = vmatpush1.msra.mxu0 %v2541
    %2556 = vmatprep.subr.mxu0 0.0
    %2557 = vmatpush1.msra.mxu0 0.0
    %2558 = vmatprep.subr.mxu0 0.0
    %2559 = vmatpush1.msra.mxu0 0.0
    %2560 = vmatprep.subr.mxu0 0.0
    %2561 = vmatpush1.msra.mxu0 0.0
    %2562 = vmatprep.subr.mxu0 0.0
    %2563 = vmatpush1.msra.mxu0 0.0
    %2564 = vmatprep.subr.mxu0 0.0
    %2565 = vmatpush1.msra.mxu0 0.0
    %2566 = vmatprep.subr.mxu0 0.0
    %2567 = vmatpush1.msra.mxu0 0.0
    %2568 = vmatprep.subr.mxu0 0.0
    %2569 = vmatpush1.msra.mxu0 0.0
    %2570 = vmatprep.subr.mxu0 0.0
    %2571 = vmatpush1.msra.mxu0 0.0
    %2572 = vmatprep.subr.mxu0 0.0
    %2573 = vmatpush1.msra.mxu0 0.0
    %2574 = vmatprep.subr.mxu0 0.0
    %2575 = vmatpush1.msra.mxu0 0.0
    %2576 = vmatprep.subr.mxu0 0.0
    %2577 = vmatpush1.msra.mxu0 0.0
    %2578 = vmatprep.subr.mxu0 0.0
    %2579 = vmatpush1.msra.mxu0 0.0
    %2580 = vmatprep.subr.mxu0 0.0
    %2581 = vmatpush1.msra.mxu0 0.0
    %2582 = vmatprep.subr.mxu0 0.0
    %2583 = vmatpush1.msra.mxu0 0.0
    %2584 = vmatprep.subr.mxu0 0.0
    %2585 = vmatpush1.msra.mxu0 0.0
    %2586 = vmatprep.subr.mxu0 0.0
    %2587 = vmatpush1.msra.mxu0 0.0
    %2588 = vmatprep.subr.mxu0 0.0
    %2589 = vmatpush1.msra.mxu0 0.0
    %2590 = vmatprep.subr.mxu0 0.0
    %2591 = vmatpush1.msra.mxu0 0.0
    %2592 = vmatprep.subr.mxu0 0.0
    %2593 = vmatpush1.msra.mxu0 0.0
    %2594 = vmatprep.subr.mxu0 0.0
    %2595 = vmatpush1.msra.mxu0 0.0
    %2596 = vmatprep.subr.mxu0 0.0
    %2597 = vmatpush1.msra.mxu0 0.0
    %2598 = vmatprep.subr.mxu0 0.0
    %2599 = vmatpush1.msra.mxu0 0.0
    %2600 = vmatprep.subr.mxu0 0.0
    %2601 = vmatpush1.msra.mxu0 0.0
    %2602 = vmatprep.subr.mxu0 0.0
    %2603 = vmatpush1.msra.mxu0 0.0
    %2604 = vmatprep.subr.mxu0 0.0
    %2605 = vmatpush1.msra.mxu0 0.0
    %2606 = vmatprep.subr.mxu0 0.0
    %2607 = vmatpush1.msra.mxu0 0.0
    %2608 = vmatprep.subr.mxu0 0.0
    %2609 = vmatpush1.msra.mxu0 0.0
    %2610 = vmatprep.subr.mxu0 0.0
    %2611 = vmatpush1.msra.mxu0 0.0
    %2612 = vmatprep.subr.mxu0 0.0
    %2613 = vmatpush1.msra.mxu0 0.0
    %2614 = vmatprep.subr.mxu0 0.0
    %2615 = vmatpush1.msra.mxu0 0.0
    %2616 = vmatprep.subr.mxu0 0.0
    %2617 = vmatpush1.msra.mxu0 0.0
    %2618 = vmatprep.mubr.f32.mxu0 0.0
    %2619 = vmatmul.mubr.f32.gmra.mrb[0].mxu0 %v2543
    %v2620 = vpop.f32.mrb[0].mxu0
    %v2621 = vadd.f32 0.0, %v2620
    %v2622 = vpop.f32.mrb[0].mxu0
    %2623 = vmatprep.mubr.f32.mxu0 0.0
    %2624 = vmatmul.mubr.f32.gmra.mrb[0].mxu0 %v2546
    %v2625 = vpop.f32.mrb[0].mxu0
    %v2626 = vadd.f32 0.0, %v2625
    %v2627 = vpop.f32.mrb[0].mxu0
    %2628 = vmatprep.mubr.f32.mxu0 0.0
    %2629 = vmatmul.mubr.f32.gmra.mrb[0].mxu0 %v2549
    %v2630 = vpop.f32.mrb[0].mxu0
    %v2631 = vadd.f32 0.0, %v2630
    %v2632 = vpop.f32.mrb[0].mxu0
    %2633 = vmatprep.mubr.f32.mxu0 0.0
    %2634 = vmatmul.mubr.f32.gmra.mrb[0].mxu0 %v2552
    %v2635 = vpop.f32.mrb[0].mxu0
    %v2636 = vadd.f32 0.0, %v2635
    %v2637 = vpop.f32.mrb[0].mxu0
    %2638 = vdwg.mxu0
    %v2639 = vadd.f32 %v1992, %v2621
    %v2640 = vadd.f32 %v1993, %v2626
    %v2641 = vadd.f32 %v1994, %v2631
    %v2642 = vadd.f32 %v1995, %v2636
    %v2643 = vld [vmem:[%s10] sm:$0x1]
    %v2645 = vlaneseq
    %v2646 = vshrl.u32 %v2645, 7
    %v2647 = vsub.s32 0, %v2646
    %v2648 = vrot.slane %v2643, %v2647
    %v2650 = vadd.f32 %v2639, %v2648
    %v2651 = vadd.f32 %v2640, %v2648
    %v2652 = vadd.f32 %v2641, %v2648
    %v2653 = vadd.f32 %v2642, %v2648
    %v2654 = vld [vmem:[%s11] sm:$0xff]
    %v2655 = vld [vmem:[%s11 + $0x8] sm:$0xff]
    %v2656 = vld [vmem:[%s11 + $0x10] sm:$0xff]
    %v2657 = vld [vmem:[%s11 + $0x18] sm:$0xff]
    %v2658 = vld [vmem:[%s12] sm:$0x1]
    %v2660 = vlaneseq
    %v2661 = vshrl.u32 %v2660, 7
    %v2662 = vsub.s32 0, %v2661
    %v2663 = vrot.slane %v2658, %v2662
    %v2666 = vsel %vm67, %v2650, 0
    %v2669 = vsel %vm67, %v2651, 0
    %v2672 = vsel %vm67, %v2652, 0
    %v2675 = vsel %vm67, %v2653, 0
    %2677 = vmatprep.subr.mxu0 0.0
    %2678 = vmatpush1.msra.mxu0 %v2654
    %2679 = vmatprep.subr.mxu0 0.0
    %2680 = vmatpush1.msra.mxu0 %v2655
    %2681 = vmatprep.subr.mxu0 0.0
    %2682 = vmatpush1.msra.mxu0 %v2656
    %2683 = vmatprep.subr.mxu0 0.0
    %2684 = vmatpush1.msra.mxu0 %v2657
    %2685 = vmatprep.subr.mxu0 0.0
    %2686 = vmatpush1.msra.mxu0 0.0
    %2687 = vmatprep.subr.mxu0 0.0
    %2688 = vmatpush1.msra.mxu0 0.0
    %2689 = vmatprep.subr.mxu0 0.0
    %2690 = vmatpush1.msra.mxu0 0.0
    %2691 = vmatprep.subr.mxu0 0.0
    %2692 = vmatpush1.msra.mxu0 0.0
    %2693 = vmatprep.subr.mxu0 0.0
    %2694 = vmatpush1.msra.mxu0 0.0
    %2695 = vmatprep.subr.mxu0 0.0
    %2696 = vmatpush1.msra.mxu0 0.0
    %2697 = vmatprep.subr.mxu0 0.0
    %2698 = vmatpush1.msra.mxu0 0.0
    %2699 = vmatprep.subr.mxu0 0.0
    %2700 = vmatpush1.msra.mxu0 0.0
    %2701 = vmatprep.subr.mxu0 0.0
    %2702 = vmatpush1.msra.mxu0 0.0
    %2703 = vmatprep.subr.mxu0 0.0
    %2704 = vmatpush1.msra.mxu0 0.0
    %2705 = vmatprep.subr.mxu0 0.0
    %2706 = vmatpush1.msra.mxu0 0.0
    %2707 = vmatprep.subr.mxu0 0.0
    %2708 = vmatpush1.msra.mxu0 0.0
    %2709 = vmatprep.subr.mxu0 0.0
    %2710 = vmatpush1.msra.mxu0 0.0
    %2711 = vmatprep.subr.mxu0 0.0
    %2712 = vmatpush1.msra.mxu0 0.0
    %2713 = vmatprep.subr.mxu0 0.0
    %2714 = vmatpush1.msra.mxu0 0.0
    %2715 = vmatprep.subr.mxu0 0.0
    %2716 = vmatpush1.msra.mxu0 0.0
    %2717 = vmatprep.subr.mxu0 0.0
    %2718 = vmatpush1.msra.mxu0 0.0
    %2719 = vmatprep.subr.mxu0 0.0
    %2720 = vmatpush1.msra.mxu0 0.0
    %2721 = vmatprep.subr.mxu0 0.0
    %2722 = vmatpush1.msra.mxu0 0.0
    %2723 = vmatprep.subr.mxu0 0.0
    %2724 = vmatpush1.msra.mxu0 0.0
    %2725 = vmatprep.subr.mxu0 0.0
    %2726 = vmatpush1.msra.mxu0 0.0
    %2727 = vmatprep.subr.mxu0 0.0
    %2728 = vmatpush1.msra.mxu0 0.0
    %2729 = vmatprep.subr.mxu0 0.0
    %2730 = vmatpush1.msra.mxu0 0.0
    %2731 = vmatprep.subr.mxu0 0.0
    %2732 = vmatpush1.msra.mxu0 0.0
    %2733 = vmatprep.subr.mxu0 0.0
    %2734 = vmatpush1.msra.mxu0 0.0
    %2735 = vmatprep.subr.mxu0 0.0
    %2736 = vmatpush1.msra.mxu0 0.0
    %2737 = vmatprep.subr.mxu0 0.0
    %2738 = vmatpush1.msra.mxu0 0.0
    %2739 = vmatprep.subr.mxu0 0.0
    %2740 = vmatpush1.msra.mxu0 0.0
    %2741 = vmatprep.mubr.f32.mxu0 0.0
    %2742 = vmatmul.mubr.f32.gmra.mrb[0].mxu0 %v2666
    %v2743 = vpop.f32.mrb[0].mxu0
    %v2744 = vadd.f32 %v2663, %v2743
    %v2745 = vpop.f32.mrb[0].mxu0
    %2746 = vmatprep.mubr.f32.mxu0 0.0
    %2747 = vmatmul.mubr.f32.gmra.mrb[0].mxu0 %v2669
    %v2748 = vpop.f32.mrb[0].mxu0
    %v2749 = vadd.f32 %v2663, %v2748
    %v2750 = vpop.f32.mrb[0].mxu0
    %2751 = vmatprep.mubr.f32.mxu0 0.0
    %2752 = vmatmul.mubr.f32.gmra.mrb[0].mxu0 %v2672
    %v2753 = vpop.f32.mrb[0].mxu0
    %v2754 = vadd.f32 %v2663, %v2753
    %v2755 = vpop.f32.mrb[0].mxu0
    %2756 = vmatprep.mubr.f32.mxu0 0.0
    %2757 = vmatmul.mubr.f32.gmra.mrb[0].mxu0 %v2675
    %v2758 = vpop.f32.mrb[0].mxu0
    %v2759 = vadd.f32 %v2663, %v2758
    %v2760 = vpop.f32.mrb[0].mxu0
    %2761 = vdwg.mxu0
    %v2762 = vtanh.pop %v2744
    %v2763 = vtanh.pop %v2749
    %v2764 = vtanh.pop %v2754
    %v2765 = vtanh.pop %v2759
    %v2766 = vld [vmem:[%s13] sm:$0x1]
    %vm2767 = vcmask 130048
    %v2769 = vsel %vm2767, %v2766, 0
    %v2772 = vsel %vm2767, %v2762, 0
    %v2775 = vsel %vm2767, %v2763, 0
    %v2778 = vsel %vm2767, %v2764, 0
    %v2781 = vsel %vm2767, %v2765, 0
    %2783 = vmatprep.subr.mxu0 0.0
    %2784 = vmatpush1.xpose.msra.mxu0 %v2772
    %2785 = vmatprep.subr.mxu0 0.0
    %2786 = vmatpush1.xpose.msra.mxu0 %v2775
    %2787 = vmatprep.subr.mxu0 0.0
    %2788 = vmatpush1.xpose.msra.mxu0 %v2778
    %2789 = vmatprep.subr.mxu0 0.0
    %2790 = vmatpush1.xpose.msra.mxu0 %v2781
    %2791 = vmatprep.subr.mxu0 0.0
    %2792 = vmatpush1.xpose.msra.mxu0 0.0
    %2793 = vmatprep.subr.mxu0 0.0
    %2794 = vmatpush1.xpose.msra.mxu0 0.0
    %2795 = vmatprep.subr.mxu0 0.0
    %2796 = vmatpush1.xpose.msra.mxu0 0.0
    %2797 = vmatprep.subr.mxu0 0.0
    %2798 = vmatpush1.xpose.msra.mxu0 0.0
    %2799 = vmatprep.subr.mxu0 0.0
    %2800 = vmatpush1.xpose.msra.mxu0 0.0
    %2801 = vmatprep.subr.mxu0 0.0
    %2802 = vmatpush1.xpose.msra.mxu0 0.0
    %2803 = vmatprep.subr.mxu0 0.0
    %2804 = vmatpush1.xpose.msra.mxu0 0.0
    %2805 = vmatprep.subr.mxu0 0.0
    %2806 = vmatpush1.xpose.msra.mxu0 0.0
    %2807 = vmatprep.subr.mxu0 0.0
    %2808 = vmatpush1.xpose.msra.mxu0 0.0
    %2809 = vmatprep.subr.mxu0 0.0
    %2810 = vmatpush1.xpose.msra.mxu0 0.0
    %2811 = vmatprep.subr.mxu0 0.0
    %2812 = vmatpush1.xpose.msra.mxu0 0.0
    %2813 = vmatprep.subr.mxu0 0.0
    %2814 = vmatpush1.xpose.msra.mxu0 0.0
    %2815 = vmatprep.subr.mxu0 0.0
    %2816 = vmatpush1.xpose.msra.mxu0 0.0
    %2817 = vmatprep.subr.mxu0 0.0
    %2818 = vmatpush1.xpose.msra.mxu0 0.0
    %2819 = vmatprep.subr.mxu0 0.0
    %2820 = vmatpush1.xpose.msra.mxu0 0.0
    %2821 = vmatprep.subr.mxu0 0.0
    %2822 = vmatpush1.xpose.msra.mxu0 0.0
    %2823 = vmatprep.subr.mxu0 0.0
    %2824 = vmatpush1.xpose.msra.mxu0 0.0
    %2825 = vmatprep.subr.mxu0 0.0
    %2826 = vmatpush1.xpose.msra.mxu0 0.0
    %2827 = vmatprep.subr.mxu0 0.0
    %2828 = vmatpush1.xpose.msra.mxu0 0.0
    %2829 = vmatprep.subr.mxu0 0.0
    %2830 = vmatpush1.xpose.msra.mxu0 0.0
    %2831 = vmatprep.subr.mxu0 0.0
    %2832 = vmatpush1.xpose.msra.mxu0 0.0
    %2833 = vmatprep.subr.mxu0 0.0
    %2834 = vmatpush1.xpose.msra.mxu0 0.0
    %2835 = vmatprep.subr.mxu0 0.0
    %2836 = vmatpush1.xpose.msra.mxu0 0.0
    %2837 = vmatprep.subr.mxu0 0.0
    %2838 = vmatpush1.xpose.msra.mxu0 0.0
    %2839 = vmatprep.subr.mxu0 0.0
    %2840 = vmatpush1.xpose.msra.mxu0 0.0
    %2841 = vmatprep.subr.mxu0 0.0
    %2842 = vmatpush1.xpose.msra.mxu0 0.0
    %2843 = vmatprep.subr.mxu0 0.0
    %2844 = vmatpush1.xpose.msra.mxu0 0.0
    %2845 = vmatprep.subr.mxu0 0.0
    %2846 = vmatpush1.xpose.msra.mxu0 0.0
    %2847 = vmatprep.mubr.f32.mxu0 0.0
    %2848 = vmatmul.mubr.f32.gmra.mrb[0].mxu0 %v2769
    %v2849 = vpop.f32.mrb[0].mxu0
    %v2850 = vadd.f32 0.0, %v2849
    %v2851 = vpop.f32.mrb[0].mxu0
    %2852 = vdwg.mxu0
    %vm2853 = vcmask 253952
    %v2854 = vsel %vm2853, %v2850, -inf
    %2855 = vmax.xlane.f32.xlu0 %v2854
    %v2856 = vpop.xlane.xlu0 %2855
    %v2857 = vsub.f32 %v2850, %v2856
    %v2858 = vmul.f32 %v2857, 1.442695
    %v2859 = vpow.pop %v2858
    %v2860 = vld [vmem:[%s2] sm:$0xff]
    %v2861 = vlaneseq
    %v2862 = vshrl.u32 %v2861, 7
    %v2863 = vsub.s32 0, %v2862
    %v2864 = vrot.slane %v2859, %v2863
    %v2865 = vmul.f32 %v2860, %v2864
    %v2867 = vsel %vm67, %v2865, 0
    %2869 = vmatprep.subr.mxu0 0.0
    %2870 = vmatpush1.msra.mxu0 %v2650
    %2871 = vmatprep.subr.mxu0 0.0
    %2872 = vmatpush1.msra.mxu0 %v2651
    %2873 = vmatprep.subr.mxu0 0.0
    %2874 = vmatpush1.msra.mxu0 %v2652
    %2875 = vmatprep.subr.mxu0 0.0
    %2876 = vmatpush1.msra.mxu0 %v2653
    %2877 = vmatprep.subr.mxu0 0.0
    %2878 = vmatpush1.msra.mxu0 0.0
    %2879 = vmatprep.subr.mxu0 0.0
    %2880 = vmatpush1.msra.mxu0 0.0
    %2881 = vmatprep.subr.mxu0 0.0
    %2882 = vmatpush1.msra.mxu0 0.0
    %2883 = vmatprep.subr.mxu0 0.0
    %2884 = vmatpush1.msra.mxu0 0.0
    %2885 = vmatprep.subr.mxu0 0.0
    %2886 = vmatpush1.msra.mxu0 0.0
    %2887 = vmatprep.subr.mxu0 0.0
    %2888 = vmatpush1.msra.mxu0 0.0
    %2889 = vmatprep.subr.mxu0 0.0
    %2890 = vmatpush1.msra.mxu0 0.0
    %2891 = vmatprep.subr.mxu0 0.0
    %2892 = vmatpush1.msra.mxu0 0.0
    %2893 = vmatprep.subr.mxu0 0.0
    %2894 = vmatpush1.msra.mxu0 0.0
    %2895 = vmatprep.subr.mxu0 0.0
    %2896 = vmatpush1.msra.mxu0 0.0
    %2897 = vmatprep.subr.mxu0 0.0
    %2898 = vmatpush1.msra.mxu0 0.0
    %2899 = vmatprep.subr.mxu0 0.0
    %2900 = vmatpush1.msra.mxu0 0.0
    %2901 = vmatprep.subr.mxu0 0.0
    %2902 = vmatpush1.msra.mxu0 0.0
    %2903 = vmatprep.subr.mxu0 0.0
    %2904 = vmatpush1.msra.mxu0 0.0
    %2905 = vmatprep.subr.mxu0 0.0
    %2906 = vmatpush1.msra.mxu0 0.0
    %2907 = vmatprep.subr.mxu0 0.0
    %2908 = vmatpush1.msra.mxu0 0.0
    %2909 = vmatprep.subr.mxu0 0.0
    %2910 = vmatpush1.msra.mxu0 0.0
    %2911 = vmatprep.subr.mxu0 0.0
    %2912 = vmatpush1.msra.mxu0 0.0
    %2913 = vmatprep.subr.mxu0 0.0
    %2914 = vmatpush1.msra.mxu0 0.0
    %2915 = vmatprep.subr.mxu0 0.0
    %2916 = vmatpush1.msra.mxu0 0.0
    %2917 = vmatprep.subr.mxu0 0.0
    %2918 = vmatpush1.msra.mxu0 0.0
    %2919 = vmatprep.subr.mxu0 0.0
    %2920 = vmatpush1.msra.mxu0 0.0
    %2921 = vmatprep.subr.mxu0 0.0
    %2922 = vmatpush1.msra.mxu0 0.0
    %2923 = vmatprep.subr.mxu0 0.0
    %2924 = vmatpush1.msra.mxu0 0.0
    %2925 = vmatprep.subr.mxu0 0.0
    %2926 = vmatpush1.msra.mxu0 0.0
    %2927 = vmatprep.subr.mxu0 0.0
    %2928 = vmatpush1.msra.mxu0 0.0
    %2929 = vmatprep.subr.mxu0 0.0
    %2930 = vmatpush1.msra.mxu0 0.0
    %2931 = vmatprep.subr.mxu0 0.0
    %2932 = vmatpush1.msra.mxu0 0.0
    %2933 = vmatprep.mubr.f32.mxu0 0.0
    %2934 = vmatmul.mubr.f32.gmra.mrb[0].mxu0 %v2867
    %v2935 = vpop.f32.mrb[0].mxu0
    %v2936 = vadd.f32 0.0, %v2935
    %v2937 = vpop.f32.mrb[0].mxu0
    %2938 = vdwg.mxu0
    %v2939 = vsel %vm67, %v2865, 0.0
    %2940 = vadd.xlane.f32.xlu0 %v2939
    %v2941 = vpop.xlane.xlu0 %2940
    %v2942 = vrcp.pop %v2941
    %v2943 = vmul.f32 %v2936, %v2942
    %2944 = vst.msk [vmem:[#allocation2] sm:$0xff] %vm67, %v2943
    // Predicated region
    $region58: #{user_encoder.1} parent=1 // pred_check
      _
    $region59: #{user_encoder.1} parent=1 // pred_check_branch
      %2946 = sbr.rel (0) target = $region61
    $region60: #{user_encoder.1} parent=1 // pred_region
      %s2948 = ssub.s32 128, 128
      %2949 = vsyncadd [#allocation3], %s2948
      %s2951 = sshll.u32 [#allocation2], 4
      %s2952 = int_to_ptr.vmem [resolvable:$true] %s2951
      %2954 = dma.vmem_to_hbm [thread:$0]  %s2952, 128, %s14, [#allocation3]
    $region61: #{user_encoder.1} parent=1 // pred_fallthru
      _
    // Predicated region
    $region62: #{user_encoder.1} parent=1 // pred_check
      _
    $region63: #{user_encoder.1} parent=1 // pred_check_branch
      %2956 = sbr.rel (0) target = $region65
    $region64: #{user_encoder.1} parent=1 // pred_region
      %2957 = dma.done [#allocation3], 128
    $region65: #{user_encoder.1} parent=1 // pred_fallthru
      _
    %2958 = vsyncpa [#allocation3], 1

</llo_original>
